<compile_context>
chip_gen: v6e
topology: v6e:2x2x1
jax: 0.10.0
libtpu: 0.0.40
codegen_flags: <defaults>
</compile_context>

<pallas_src>
import jax
import jax.numpy as jnp
from jax.experimental import pallas as pl
from jax.experimental.pallas import tpu as pltpu


def _make_rdb_g_kernel(Cin, Cout, H, W):
    KH = KW = 3

    def kernel(w_ref, b_ref, x_ref, o_ref, xpad_ref):
        # w_ref:    SMEM (Cout*Cin*9,) f32   conv weights, flattened OIHW
        # b_ref:    SMEM (Cout,)       f32   bias
        # x_ref:    VMEM (1, Cin, H, W)      one input image (NCHW)
        # o_ref:    VMEM (1, Cin+Cout, H, W) fused [x ; relu(conv(x))]
        # xpad_ref: VMEM scratch (Cin, H+2, W+2) zero-padded copy of x
        x = x_ref[0]                                       # (Cin, H, W)

        # --- fused channel concat: pass the input through untouched -------
        o_ref[0, :Cin] = x

        # --- build zero-padded input (padding=1) entirely in VMEM ---------
        xpad_ref[...] = jnp.zeros_like(xpad_ref)
        xpad_ref[:, 1:H + 1, 1:W + 1] = x
        xp = xpad_ref[...]                                 # (Cin, H+2, W+2)

        # --- 3x3 conv, stride 1: VPU broadcast-FMA over channels ----------
        # Shifted taps hoisted out of the Cout loop: each of the Cin*9
        # shifts is sliced exactly once.
        accs = [jnp.zeros((H, W), jnp.float32) for _ in range(Cout)]
        for ci in range(Cin):
            xc = xp[ci]                                    # (H+2, W+2)
            for kh in range(KH):
                rows = xc[kh:kh + H, :]                    # (H, W+2) sublane shift
                for kw in range(KW):
                    tap = rows[:, kw:kw + W]               # (H, W)   lane shift
                    base = (ci * KH + kh) * KW + kw
                    for co in range(Cout):
                        wv = w_ref[co * (Cin * KH * KW) + base]
                        accs[co] = accs[co] + wv * tap

        # --- bias + ReLU + store into the conv half of the output ---------
        for co in range(Cout):
            o_ref[0, Cin + co] = jnp.maximum(
                accs[co] + b_ref[co], 0.0).astype(o_ref.dtype)

    return kernel


@jax.jit
def rdb_g_forward(x_nchw, weight_oihw, bias):
    """Forward pass of Rdb_g.

    x_nchw:      (N, Cin, H, W)    float32
    weight_oihw: (Cout, Cin, 3, 3) float32 (PyTorch conv weight layout)
    bias:        (Cout,)           float32
    returns:     (N, Cin + Cout, H, W) float32  ==  cat([x, relu(conv(x))], 1)
    """
    N, Cin, H, W = x_nchw.shape
    Cout = weight_oihw.shape[0]

    w_flat = weight_oihw.reshape(-1).astype(jnp.float32)   # (Cout*Cin*9,)
    b = bias.astype(jnp.float32)                            # (Cout,)

    kernel = _make_rdb_g_kernel(Cin, Cout, H, W)

    out = pl.pallas_call(
        kernel,
        out_shape=jax.ShapeDtypeStruct((N, Cin + Cout, H, W), x_nchw.dtype),
        grid_spec=pltpu.PrefetchScalarGridSpec(
            num_scalar_prefetch=0,
            grid=(N,),
            in_specs=[
                # Small parameter arrays live in SMEM (scalar reads are cheap
                # and they never occupy lane-padded VMEM tiles).
                pl.BlockSpec(memory_space=pltpu.MemorySpace.SMEM),   # weights
                pl.BlockSpec(memory_space=pltpu.MemorySpace.SMEM),   # bias
                pl.BlockSpec((1, Cin, H, W), lambda n: (n, 0, 0, 0)),
            ],
            out_specs=pl.BlockSpec((1, Cin + Cout, H, W),
                                   lambda n: (n, 0, 0, 0)),
            scratch_shapes=[pltpu.VMEM((Cin, H + 2, W + 2), jnp.float32)],
        ),
        compiler_params=pltpu.CompilerParams(
            dimension_semantics=("parallel",)),
    )(w_flat, b, x_nchw)
    return out


def _reference_forward(x_nchw, weight_oihw, bias):
    """Pure-JAX reference (lax conv) for correctness check."""
    conv = jax.lax.conv_general_dilated(
        x_nchw, weight_oihw,
        window_strides=(1, 1), padding=((1, 1), (1, 1)),
        dimension_numbers=("NCHW", "OIHW", "NCHW"))
    conv = jax.nn.relu(conv + bias[None, :, None, None])
    return jnp.concatenate([x_nchw, conv], axis=1)


if __name__ == "__main__":
    key = jax.random.PRNGKey(0)
    k_x, k_w, k_b = jax.random.split(key, 3)

    N, Cin, H, W = 2, 4, 16, 16
    Cout = 8

    x = jax.random.normal(k_x, (N, Cin, H, W), dtype=jnp.float32)
    # Deterministic synthetic parameters (same shapes as nn.Conv2d(Cin, Cout, 3)).
    weight = jax.random.normal(k_w, (Cout, Cin, 3, 3), dtype=jnp.float32) * 0.1
    bias = jax.random.normal(k_b, (Cout,), dtype=jnp.float32) * 0.1

    out = rdb_g_forward(x, weight, bias)
    out = jax.block_until_ready(out)

    ref = _reference_forward(x, weight, bias)
    assert out.shape == (N, Cin + Cout, H, W), out.shape
    assert jnp.allclose(out, ref, atol=1e-5, rtol=1e-5), "mismatch vs reference"

    print("KERNEL_OK")
</pallas_src>

<mosaic_0001>
module attributes {stable_mosaic.version = 11 : i64} {
  func.func @kernel(%arg0: i32, %arg1: memref<288xf32, #tpu.memory_space<smem>>, %arg2: memref<8xf32, #tpu.memory_space<smem>>, %arg3: memref<1x4x16x16xf32, #tpu.memory_space<vmem>>, %arg4: memref<1x12x16x16xf32, #tpu.memory_space<vmem>>, %arg5: memref<4x18x18xf32, #tpu.memory_space<vmem>>) attributes {dimension_semantics = [#tpu.dimension_semantics<parallel>], iteration_bounds = array<i64: 2>, scalar_prefetch = 0 : i64, scratch_operands = 1 : i64, tpu.core_type = #tpu.core_type<tc>, window_params = [{transform_indices = @transform_0, window_bounds = array<i64: 288>}, {transform_indices = @transform_1, window_bounds = array<i64: 8>}, {transform_indices = @transform_2, window_bounds = array<i64: 1, 4, 16, 16>}, {transform_indices = @transform_3, window_bounds = array<i64: 1, 12, 16, 16>}]} {
    %c0 = arith.constant 0 : index
    %c0_0 = arith.constant 0 : index
    %c0_1 = arith.constant 0 : index
    %c0_2 = arith.constant 0 : index
    %0 = vector.load %arg3[%c0, %c0_0, %c0_1, %c0_2] : memref<1x4x16x16xf32, #tpu.memory_space<vmem>>, vector<1x4x16x16xf32>
    %1 = vector.shape_cast %0 : vector<1x4x16x16xf32> to vector<4x16x16xf32>
    %c0_3 = arith.constant 0 : index
    %c0_4 = arith.constant 0 : index
    %c0_5 = arith.constant 0 : index
    %c0_6 = arith.constant 0 : index
    %2 = vector.load %arg4[%c0_3, %c0_4, %c0_5, %c0_6] : memref<1x12x16x16xf32, #tpu.memory_space<vmem>>, vector<1x4x16x16xf32>
    %3 = vector.shape_cast %2 : vector<1x4x16x16xf32> to vector<4x16x16xf32>
    %4 = vector.shape_cast %1 : vector<4x16x16xf32> to vector<1x4x16x16xf32>
    tpu.vector_store %arg4[%c0_3, %c0_4, %c0_5, %c0_6], %4 {strides = array<i32>} : memref<1x12x16x16xf32, #tpu.memory_space<vmem>>, vector<1x4x16x16xf32>,
    %cst = arith.constant 0.000000e+00 : f32
    %5 = vector.broadcast %cst : f32 to vector<4x18x18xf32>
    %c0_7 = arith.constant 0 : index
    %c0_8 = arith.constant 0 : index
    %c0_9 = arith.constant 0 : index
    %6 = vector.load %arg5[%c0_7, %c0_8, %c0_9] : memref<4x18x18xf32, #tpu.memory_space<vmem>>, vector<4x18x18xf32>
    tpu.vector_store %arg5[%c0_7, %c0_8, %c0_9], %5 {strides = array<i32>} : memref<4x18x18xf32, #tpu.memory_space<vmem>>, vector<4x18x18xf32>,
    %c0_10 = arith.constant 0 : index
    %c1 = arith.constant 1 : index
    %c1_11 = arith.constant 1 : index
    %7 = vector.load %arg5[%c0_10, %c1, %c1_11] : memref<4x18x18xf32, #tpu.memory_space<vmem>>, vector<4x16x16xf32>
    tpu.vector_store %arg5[%c0_10, %c1, %c1_11], %1 {strides = array<i32>} : memref<4x18x18xf32, #tpu.memory_space<vmem>>, vector<4x16x16xf32>,
    %c0_12 = arith.constant 0 : index
    %c0_13 = arith.constant 0 : index
    %c0_14 = arith.constant 0 : index
    %8 = vector.load %arg5[%c0_12, %c0_13, %c0_14] : memref<4x18x18xf32, #tpu.memory_space<vmem>>, vector<4x18x18xf32>
    %cst_15 = arith.constant 0.000000e+00 : f32
    %9 = vector.broadcast %cst_15 : f32 to vector<16x16xf32>
    %cst_16 = arith.constant 0.000000e+00 : f32
    %10 = vector.broadcast %cst_16 : f32 to vector<16x16xf32>
    %cst_17 = arith.constant 0.000000e+00 : f32
    %11 = vector.broadcast %cst_17 : f32 to vector<16x16xf32>
    %cst_18 = arith.constant 0.000000e+00 : f32
    %12 = vector.broadcast %cst_18 : f32 to vector<16x16xf32>
    %cst_19 = arith.constant 0.000000e+00 : f32
    %13 = vector.broadcast %cst_19 : f32 to vector<16x16xf32>
    %cst_20 = arith.constant 0.000000e+00 : f32
    %14 = vector.broadcast %cst_20 : f32 to vector<16x16xf32>
    %cst_21 = arith.constant 0.000000e+00 : f32
    %15 = vector.broadcast %cst_21 : f32 to vector<16x16xf32>
    %cst_22 = arith.constant 0.000000e+00 : f32
    %16 = vector.broadcast %cst_22 : f32 to vector<16x16xf32>
    %17 = vector.extract_strided_slice %8 {offsets = [0, 0, 0], sizes = [1, 18, 18], strides = [1, 1, 1]} : vector<4x18x18xf32> to vector<1x18x18xf32>
    %18 = vector.shape_cast %17 : vector<1x18x18xf32> to vector<18x18xf32>
    %19 = vector.extract_strided_slice %18 {offsets = [0, 0], sizes = [16, 18], strides = [1, 1]} : vector<18x18xf32> to vector<16x18xf32>
    %20 = vector.extract_strided_slice %19 {offsets = [0, 0], sizes = [16, 16], strides = [1, 1]} : vector<16x18xf32> to vector<16x16xf32>
    %c0_23 = arith.constant 0 : index
    %21 = memref.load %arg1[%c0_23] : memref<288xf32, #tpu.memory_space<smem>>
    %22 = vector.broadcast %21 : f32 to vector<16x16xf32>
    %23 = arith.mulf %22, %20 : vector<16x16xf32>
    %24 = arith.addf %9, %23 : vector<16x16xf32>
    %c36 = arith.constant 36 : index
    %25 = memref.load %arg1[%c36] : memref<288xf32, #tpu.memory_space<smem>>
    %26 = vector.broadcast %25 : f32 to vector<16x16xf32>
    %27 = arith.mulf %26, %20 : vector<16x16xf32>
    %28 = arith.addf %10, %27 : vector<16x16xf32>
    %c72 = arith.constant 72 : index
    %29 = memref.load %arg1[%c72] : memref<288xf32, #tpu.memory_space<smem>>
    %30 = vector.broadcast %29 : f32 to vector<16x16xf32>
    %31 = arith.mulf %30, %20 : vector<16x16xf32>
    %32 = arith.addf %11, %31 : vector<16x16xf32>
    %c108 = arith.constant 108 : index
    %33 = memref.load %arg1[%c108] : memref<288xf32, #tpu.memory_space<smem>>
    %34 = vector.broadcast %33 : f32 to vector<16x16xf32>
    %35 = arith.mulf %34, %20 : vector<16x16xf32>
    %36 = arith.addf %12, %35 : vector<16x16xf32>
    %c144 = arith.constant 144 : index
    %37 = memref.load %arg1[%c144] : memref<288xf32, #tpu.memory_space<smem>>
    %38 = vector.broadcast %37 : f32 to vector<16x16xf32>
    %39 = arith.mulf %38, %20 : vector<16x16xf32>
    %40 = arith.addf %13, %39 : vector<16x16xf32>
    %c180 = arith.constant 180 : index
    %41 = memref.load %arg1[%c180] : memref<288xf32, #tpu.memory_space<smem>>
    %42 = vector.broadcast %41 : f32 to vector<16x16xf32>
    %43 = arith.mulf %42, %20 : vector<16x16xf32>
    %44 = arith.addf %14, %43 : vector<16x16xf32>
    %c216 = arith.constant 216 : index
    %45 = memref.load %arg1[%c216] : memref<288xf32, #tpu.memory_space<smem>>
    %46 = vector.broadcast %45 : f32 to vector<16x16xf32>
    %47 = arith.mulf %46, %20 : vector<16x16xf32>
    %48 = arith.addf %15, %47 : vector<16x16xf32>
    %c252 = arith.constant 252 : index
    %49 = memref.load %arg1[%c252] : memref<288xf32, #tpu.memory_space<smem>>
    %50 = vector.broadcast %49 : f32 to vector<16x16xf32>
    %51 = arith.mulf %50, %20 : vector<16x16xf32>
    %52 = arith.addf %16, %51 : vector<16x16xf32>
    %53 = vector.extract_strided_slice %19 {offsets = [0, 1], sizes = [16, 16], strides = [1, 1]} : vector<16x18xf32> to vector<16x16xf32>
    %c1_24 = arith.constant 1 : index
    %54 = memref.load %arg1[%c1_24] : memref<288xf32, #tpu.memory_space<smem>>
    %55 = vector.broadcast %54 : f32 to vector<16x16xf32>
    %56 = arith.mulf %55, %53 : vector<16x16xf32>
    %57 = arith.addf %24, %56 : vector<16x16xf32>
    %c37 = arith.constant 37 : index
    %58 = memref.load %arg1[%c37] : memref<288xf32, #tpu.memory_space<smem>>
    %59 = vector.broadcast %58 : f32 to vector<16x16xf32>
    %60 = arith.mulf %59, %53 : vector<16x16xf32>
    %61 = arith.addf %28, %60 : vector<16x16xf32>
    %c73 = arith.constant 73 : index
    %62 = memref.load %arg1[%c73] : memref<288xf32, #tpu.memory_space<smem>>
    %63 = vector.broadcast %62 : f32 to vector<16x16xf32>
    %64 = arith.mulf %63, %53 : vector<16x16xf32>
    %65 = arith.addf %32, %64 : vector<16x16xf32>
    %c109 = arith.constant 109 : index
    %66 = memref.load %arg1[%c109] : memref<288xf32, #tpu.memory_space<smem>>
    %67 = vector.broadcast %66 : f32 to vector<16x16xf32>
    %68 = arith.mulf %67, %53 : vector<16x16xf32>
    %69 = arith.addf %36, %68 : vector<16x16xf32>
    %c145 = arith.constant 145 : index
    %70 = memref.load %arg1[%c145] : memref<288xf32, #tpu.memory_space<smem>>
    %71 = vector.broadcast %70 : f32 to vector<16x16xf32>
    %72 = arith.mulf %71, %53 : vector<16x16xf32>
    %73 = arith.addf %40, %72 : vector<16x16xf32>
    %c181 = arith.constant 181 : index
    %74 = memref.load %arg1[%c181] : memref<288xf32, #tpu.memory_space<smem>>
    %75 = vector.broadcast %74 : f32 to vector<16x16xf32>
    %76 = arith.mulf %75, %53 : vector<16x16xf32>
    %77 = arith.addf %44, %76 : vector<16x16xf32>
    %c217 = arith.constant 217 : index
    %78 = memref.load %arg1[%c217] : memref<288xf32, #tpu.memory_space<smem>>
    %79 = vector.broadcast %78 : f32 to vector<16x16xf32>
    %80 = arith.mulf %79, %53 : vector<16x16xf32>
    %81 = arith.addf %48, %80 : vector<16x16xf32>
    %c253 = arith.constant 253 : index
    %82 = memref.load %arg1[%c253] : memref<288xf32, #tpu.memory_space<smem>>
    %83 = vector.broadcast %82 : f32 to vector<16x16xf32>
    %84 = arith.mulf %83, %53 : vector<16x16xf32>
    %85 = arith.addf %52, %84 : vector<16x16xf32>
    %86 = vector.extract_strided_slice %19 {offsets = [0, 2], sizes = [16, 16], strides = [1, 1]} : vector<16x18xf32> to vector<16x16xf32>
    %c2 = arith.constant 2 : index
    %87 = memref.load %arg1[%c2] : memref<288xf32, #tpu.memory_space<smem>>
    %88 = vector.broadcast %87 : f32 to vector<16x16xf32>
    %89 = arith.mulf %88, %86 : vector<16x16xf32>
    %90 = arith.addf %57, %89 : vector<16x16xf32>
    %c38 = arith.constant 38 : index
    %91 = memref.load %arg1[%c38] : memref<288xf32, #tpu.memory_space<smem>>
    %92 = vector.broadcast %91 : f32 to vector<16x16xf32>
    %93 = arith.mulf %92, %86 : vector<16x16xf32>
    %94 = arith.addf %61, %93 : vector<16x16xf32>
    %c74 = arith.constant 74 : index
    %95 = memref.load %arg1[%c74] : memref<288xf32, #tpu.memory_space<smem>>
    %96 = vector.broadcast %95 : f32 to vector<16x16xf32>
    %97 = arith.mulf %96, %86 : vector<16x16xf32>
    %98 = arith.addf %65, %97 : vector<16x16xf32>
    %c110 = arith.constant 110 : index
    %99 = memref.load %arg1[%c110] : memref<288xf32, #tpu.memory_space<smem>>
    %100 = vector.broadcast %99 : f32 to vector<16x16xf32>
    %101 = arith.mulf %100, %86 : vector<16x16xf32>
    %102 = arith.addf %69, %101 : vector<16x16xf32>
    %c146 = arith.constant 146 : index
    %103 = memref.load %arg1[%c146] : memref<288xf32, #tpu.memory_space<smem>>
    %104 = vector.broadcast %103 : f32 to vector<16x16xf32>
    %105 = arith.mulf %104, %86 : vector<16x16xf32>
    %106 = arith.addf %73, %105 : vector<16x16xf32>
    %c182 = arith.constant 182 : index
    %107 = memref.load %arg1[%c182] : memref<288xf32, #tpu.memory_space<smem>>
    %108 = vector.broadcast %107 : f32 to vector<16x16xf32>
    %109 = arith.mulf %108, %86 : vector<16x16xf32>
    %110 = arith.addf %77, %109 : vector<16x16xf32>
    %c218 = arith.constant 218 : index
    %111 = memref.load %arg1[%c218] : memref<288xf32, #tpu.memory_space<smem>>
    %112 = vector.broadcast %111 : f32 to vector<16x16xf32>
    %113 = arith.mulf %112, %86 : vector<16x16xf32>
    %114 = arith.addf %81, %113 : vector<16x16xf32>
    %c254 = arith.constant 254 : index
    %115 = memref.load %arg1[%c254] : memref<288xf32, #tpu.memory_space<smem>>
    %116 = vector.broadcast %115 : f32 to vector<16x16xf32>
    %117 = arith.mulf %116, %86 : vector<16x16xf32>
    %118 = arith.addf %85, %117 : vector<16x16xf32>
    %119 = vector.extract_strided_slice %18 {offsets = [1, 0], sizes = [16, 18], strides = [1, 1]} : vector<18x18xf32> to vector<16x18xf32>
    %120 = vector.extract_strided_slice %119 {offsets = [0, 0], sizes = [16, 16], strides = [1, 1]} : vector<16x18xf32> to vector<16x16xf32>
    %c3 = arith.constant 3 : index
    %121 = memref.load %arg1[%c3] : memref<288xf32, #tpu.memory_space<smem>>
    %122 = vector.broadcast %121 : f32 to vector<16x16xf32>
    %123 = arith.mulf %122, %120 : vector<16x16xf32>
    %124 = arith.addf %90, %123 : vector<16x16xf32>
    %c39 = arith.constant 39 : index
    %125 = memref.load %arg1[%c39] : memref<288xf32, #tpu.memory_space<smem>>
    %126 = vector.broadcast %125 : f32 to vector<16x16xf32>
    %127 = arith.mulf %126, %120 : vector<16x16xf32>
    %128 = arith.addf %94, %127 : vector<16x16xf32>
    %c75 = arith.constant 75 : index
    %129 = memref.load %arg1[%c75] : memref<288xf32, #tpu.memory_space<smem>>
    %130 = vector.broadcast %129 : f32 to vector<16x16xf32>
    %131 = arith.mulf %130, %120 : vector<16x16xf32>
    %132 = arith.addf %98, %131 : vector<16x16xf32>
    %c111 = arith.constant 111 : index
    %133 = memref.load %arg1[%c111] : memref<288xf32, #tpu.memory_space<smem>>
    %134 = vector.broadcast %133 : f32 to vector<16x16xf32>
    %135 = arith.mulf %134, %120 : vector<16x16xf32>
    %136 = arith.addf %102, %135 : vector<16x16xf32>
    %c147 = arith.constant 147 : index
    %137 = memref.load %arg1[%c147] : memref<288xf32, #tpu.memory_space<smem>>
    %138 = vector.broadcast %137 : f32 to vector<16x16xf32>
    %139 = arith.mulf %138, %120 : vector<16x16xf32>
    %140 = arith.addf %106, %139 : vector<16x16xf32>
    %c183 = arith.constant 183 : index
    %141 = memref.load %arg1[%c183] : memref<288xf32, #tpu.memory_space<smem>>
    %142 = vector.broadcast %141 : f32 to vector<16x16xf32>
    %143 = arith.mulf %142, %120 : vector<16x16xf32>
    %144 = arith.addf %110, %143 : vector<16x16xf32>
    %c219 = arith.constant 219 : index
    %145 = memref.load %arg1[%c219] : memref<288xf32, #tpu.memory_space<smem>>
    %146 = vector.broadcast %145 : f32 to vector<16x16xf32>
    %147 = arith.mulf %146, %120 : vector<16x16xf32>
    %148 = arith.addf %114, %147 : vector<16x16xf32>
    %c255 = arith.constant 255 : index
    %149 = memref.load %arg1[%c255] : memref<288xf32, #tpu.memory_space<smem>>
    %150 = vector.broadcast %149 : f32 to vector<16x16xf32>
    %151 = arith.mulf %150, %120 : vector<16x16xf32>
    %152 = arith.addf %118, %151 : vector<16x16xf32>
    %153 = vector.extract_strided_slice %119 {offsets = [0, 1], sizes = [16, 16], strides = [1, 1]} : vector<16x18xf32> to vector<16x16xf32>
    %c4 = arith.constant 4 : index
    %154 = memref.load %arg1[%c4] : memref<288xf32, #tpu.memory_space<smem>>
    %155 = vector.broadcast %154 : f32 to vector<16x16xf32>
    %156 = arith.mulf %155, %153 : vector<16x16xf32>
    %157 = arith.addf %124, %156 : vector<16x16xf32>
    %c40 = arith.constant 40 : index
    %158 = memref.load %arg1[%c40] : memref<288xf32, #tpu.memory_space<smem>>
    %159 = vector.broadcast %158 : f32 to vector<16x16xf32>
    %160 = arith.mulf %159, %153 : vector<16x16xf32>
    %161 = arith.addf %128, %160 : vector<16x16xf32>
    %c76 = arith.constant 76 : index
    %162 = memref.load %arg1[%c76] : memref<288xf32, #tpu.memory_space<smem>>
    %163 = vector.broadcast %162 : f32 to vector<16x16xf32>
    %164 = arith.mulf %163, %153 : vector<16x16xf32>
    %165 = arith.addf %132, %164 : vector<16x16xf32>
    %c112 = arith.constant 112 : index
    %166 = memref.load %arg1[%c112] : memref<288xf32, #tpu.memory_space<smem>>
    %167 = vector.broadcast %166 : f32 to vector<16x16xf32>
    %168 = arith.mulf %167, %153 : vector<16x16xf32>
    %169 = arith.addf %136, %168 : vector<16x16xf32>
    %c148 = arith.constant 148 : index
    %170 = memref.load %arg1[%c148] : memref<288xf32, #tpu.memory_space<smem>>
    %171 = vector.broadcast %170 : f32 to vector<16x16xf32>
    %172 = arith.mulf %171, %153 : vector<16x16xf32>
    %173 = arith.addf %140, %172 : vector<16x16xf32>
    %c184 = arith.constant 184 : index
    %174 = memref.load %arg1[%c184] : memref<288xf32, #tpu.memory_space<smem>>
    %175 = vector.broadcast %174 : f32 to vector<16x16xf32>
    %176 = arith.mulf %175, %153 : vector<16x16xf32>
    %177 = arith.addf %144, %176 : vector<16x16xf32>
    %c220 = arith.constant 220 : index
    %178 = memref.load %arg1[%c220] : memref<288xf32, #tpu.memory_space<smem>>
    %179 = vector.broadcast %178 : f32 to vector<16x16xf32>
    %180 = arith.mulf %179, %153 : vector<16x16xf32>
    %181 = arith.addf %148, %180 : vector<16x16xf32>
    %c256 = arith.constant 256 : index
    %182 = memref.load %arg1[%c256] : memref<288xf32, #tpu.memory_space<smem>>
    %183 = vector.broadcast %182 : f32 to vector<16x16xf32>
    %184 = arith.mulf %183, %153 : vector<16x16xf32>
    %185 = arith.addf %152, %184 : vector<16x16xf32>
    %186 = vector.extract_strided_slice %119 {offsets = [0, 2], sizes = [16, 16], strides = [1, 1]} : vector<16x18xf32> to vector<16x16xf32>
    %c5 = arith.constant 5 : index
    %187 = memref.load %arg1[%c5] : memref<288xf32, #tpu.memory_space<smem>>
    %188 = vector.broadcast %187 : f32 to vector<16x16xf32>
    %189 = arith.mulf %188, %186 : vector<16x16xf32>
    %190 = arith.addf %157, %189 : vector<16x16xf32>
    %c41 = arith.constant 41 : index
    %191 = memref.load %arg1[%c41] : memref<288xf32, #tpu.memory_space<smem>>
    %192 = vector.broadcast %191 : f32 to vector<16x16xf32>
    %193 = arith.mulf %192, %186 : vector<16x16xf32>
    %194 = arith.addf %161, %193 : vector<16x16xf32>
    %c77 = arith.constant 77 : index
    %195 = memref.load %arg1[%c77] : memref<288xf32, #tpu.memory_space<smem>>
    %196 = vector.broadcast %195 : f32 to vector<16x16xf32>
    %197 = arith.mulf %196, %186 : vector<16x16xf32>
    %198 = arith.addf %165, %197 : vector<16x16xf32>
    %c113 = arith.constant 113 : index
    %199 = memref.load %arg1[%c113] : memref<288xf32, #tpu.memory_space<smem>>
    %200 = vector.broadcast %199 : f32 to vector<16x16xf32>
    %201 = arith.mulf %200, %186 : vector<16x16xf32>
    %202 = arith.addf %169, %201 : vector<16x16xf32>
    %c149 = arith.constant 149 : index
    %203 = memref.load %arg1[%c149] : memref<288xf32, #tpu.memory_space<smem>>
    %204 = vector.broadcast %203 : f32 to vector<16x16xf32>
    %205 = arith.mulf %204, %186 : vector<16x16xf32>
    %206 = arith.addf %173, %205 : vector<16x16xf32>
    %c185 = arith.constant 185 : index
    %207 = memref.load %arg1[%c185] : memref<288xf32, #tpu.memory_space<smem>>
    %208 = vector.broadcast %207 : f32 to vector<16x16xf32>
    %209 = arith.mulf %208, %186 : vector<16x16xf32>
    %210 = arith.addf %177, %209 : vector<16x16xf32>
    %c221 = arith.constant 221 : index
    %211 = memref.load %arg1[%c221] : memref<288xf32, #tpu.memory_space<smem>>
    %212 = vector.broadcast %211 : f32 to vector<16x16xf32>
    %213 = arith.mulf %212, %186 : vector<16x16xf32>
    %214 = arith.addf %181, %213 : vector<16x16xf32>
    %c257 = arith.constant 257 : index
    %215 = memref.load %arg1[%c257] : memref<288xf32, #tpu.memory_space<smem>>
    %216 = vector.broadcast %215 : f32 to vector<16x16xf32>
    %217 = arith.mulf %216, %186 : vector<16x16xf32>
    %218 = arith.addf %185, %217 : vector<16x16xf32>
    %219 = vector.extract_strided_slice %18 {offsets = [2, 0], sizes = [16, 18], strides = [1, 1]} : vector<18x18xf32> to vector<16x18xf32>
    %220 = vector.extract_strided_slice %219 {offsets = [0, 0], sizes = [16, 16], strides = [1, 1]} : vector<16x18xf32> to vector<16x16xf32>
    %c6 = arith.constant 6 : index
    %221 = memref.load %arg1[%c6] : memref<288xf32, #tpu.memory_space<smem>>
    %222 = vector.broadcast %221 : f32 to vector<16x16xf32>
    %223 = arith.mulf %222, %220 : vector<16x16xf32>
    %224 = arith.addf %190, %223 : vector<16x16xf32>
    %c42 = arith.constant 42 : index
    %225 = memref.load %arg1[%c42] : memref<288xf32, #tpu.memory_space<smem>>
    %226 = vector.broadcast %225 : f32 to vector<16x16xf32>
    %227 = arith.mulf %226, %220 : vector<16x16xf32>
    %228 = arith.addf %194, %227 : vector<16x16xf32>
    %c78 = arith.constant 78 : index
    %229 = memref.load %arg1[%c78] : memref<288xf32, #tpu.memory_space<smem>>
    %230 = vector.broadcast %229 : f32 to vector<16x16xf32>
    %231 = arith.mulf %230, %220 : vector<16x16xf32>
    %232 = arith.addf %198, %231 : vector<16x16xf32>
    %c114 = arith.constant 114 : index
    %233 = memref.load %arg1[%c114] : memref<288xf32, #tpu.memory_space<smem>>
    %234 = vector.broadcast %233 : f32 to vector<16x16xf32>
    %235 = arith.mulf %234, %220 : vector<16x16xf32>
    %236 = arith.addf %202, %235 : vector<16x16xf32>
    %c150 = arith.constant 150 : index
    %237 = memref.load %arg1[%c150] : memref<288xf32, #tpu.memory_space<smem>>
    %238 = vector.broadcast %237 : f32 to vector<16x16xf32>
    %239 = arith.mulf %238, %220 : vector<16x16xf32>
    %240 = arith.addf %206, %239 : vector<16x16xf32>
    %c186 = arith.constant 186 : index
    %241 = memref.load %arg1[%c186] : memref<288xf32, #tpu.memory_space<smem>>
    %242 = vector.broadcast %241 : f32 to vector<16x16xf32>
    %243 = arith.mulf %242, %220 : vector<16x16xf32>
    %244 = arith.addf %210, %243 : vector<16x16xf32>
    %c222 = arith.constant 222 : index
    %245 = memref.load %arg1[%c222] : memref<288xf32, #tpu.memory_space<smem>>
    %246 = vector.broadcast %245 : f32 to vector<16x16xf32>
    %247 = arith.mulf %246, %220 : vector<16x16xf32>
    %248 = arith.addf %214, %247 : vector<16x16xf32>
    %c258 = arith.constant 258 : index
    %249 = memref.load %arg1[%c258] : memref<288xf32, #tpu.memory_space<smem>>
    %250 = vector.broadcast %249 : f32 to vector<16x16xf32>
    %251 = arith.mulf %250, %220 : vector<16x16xf32>
    %252 = arith.addf %218, %251 : vector<16x16xf32>
    %253 = vector.extract_strided_slice %219 {offsets = [0, 1], sizes = [16, 16], strides = [1, 1]} : vector<16x18xf32> to vector<16x16xf32>
    %c7 = arith.constant 7 : index
    %254 = memref.load %arg1[%c7] : memref<288xf32, #tpu.memory_space<smem>>
    %255 = vector.broadcast %254 : f32 to vector<16x16xf32>
    %256 = arith.mulf %255, %253 : vector<16x16xf32>
    %257 = arith.addf %224, %256 : vector<16x16xf32>
    %c43 = arith.constant 43 : index
    %258 = memref.load %arg1[%c43] : memref<288xf32, #tpu.memory_space<smem>>
    %259 = vector.broadcast %258 : f32 to vector<16x16xf32>
    %260 = arith.mulf %259, %253 : vector<16x16xf32>
    %261 = arith.addf %228, %260 : vector<16x16xf32>
    %c79 = arith.constant 79 : index
    %262 = memref.load %arg1[%c79] : memref<288xf32, #tpu.memory_space<smem>>
    %263 = vector.broadcast %262 : f32 to vector<16x16xf32>
    %264 = arith.mulf %263, %253 : vector<16x16xf32>
    %265 = arith.addf %232, %264 : vector<16x16xf32>
    %c115 = arith.constant 115 : index
    %266 = memref.load %arg1[%c115] : memref<288xf32, #tpu.memory_space<smem>>
    %267 = vector.broadcast %266 : f32 to vector<16x16xf32>
    %268 = arith.mulf %267, %253 : vector<16x16xf32>
    %269 = arith.addf %236, %268 : vector<16x16xf32>
    %c151 = arith.constant 151 : index
    %270 = memref.load %arg1[%c151] : memref<288xf32, #tpu.memory_space<smem>>
    %271 = vector.broadcast %270 : f32 to vector<16x16xf32>
    %272 = arith.mulf %271, %253 : vector<16x16xf32>
    %273 = arith.addf %240, %272 : vector<16x16xf32>
    %c187 = arith.constant 187 : index
    %274 = memref.load %arg1[%c187] : memref<288xf32, #tpu.memory_space<smem>>
    %275 = vector.broadcast %274 : f32 to vector<16x16xf32>
    %276 = arith.mulf %275, %253 : vector<16x16xf32>
    %277 = arith.addf %244, %276 : vector<16x16xf32>
    %c223 = arith.constant 223 : index
    %278 = memref.load %arg1[%c223] : memref<288xf32, #tpu.memory_space<smem>>
    %279 = vector.broadcast %278 : f32 to vector<16x16xf32>
    %280 = arith.mulf %279, %253 : vector<16x16xf32>
    %281 = arith.addf %248, %280 : vector<16x16xf32>
    %c259 = arith.constant 259 : index
    %282 = memref.load %arg1[%c259] : memref<288xf32, #tpu.memory_space<smem>>
    %283 = vector.broadcast %282 : f32 to vector<16x16xf32>
    %284 = arith.mulf %283, %253 : vector<16x16xf32>
    %285 = arith.addf %252, %284 : vector<16x16xf32>
    %286 = vector.extract_strided_slice %219 {offsets = [0, 2], sizes = [16, 16], strides = [1, 1]} : vector<16x18xf32> to vector<16x16xf32>
    %c8 = arith.constant 8 : index
    %287 = memref.load %arg1[%c8] : memref<288xf32, #tpu.memory_space<smem>>
    %288 = vector.broadcast %287 : f32 to vector<16x16xf32>
    %289 = arith.mulf %288, %286 : vector<16x16xf32>
    %290 = arith.addf %257, %289 : vector<16x16xf32>
    %c44 = arith.constant 44 : index
    %291 = memref.load %arg1[%c44] : memref<288xf32, #tpu.memory_space<smem>>
    %292 = vector.broadcast %291 : f32 to vector<16x16xf32>
    %293 = arith.mulf %292, %286 : vector<16x16xf32>
    %294 = arith.addf %261, %293 : vector<16x16xf32>
    %c80 = arith.constant 80 : index
    %295 = memref.load %arg1[%c80] : memref<288xf32, #tpu.memory_space<smem>>
    %296 = vector.broadcast %295 : f32 to vector<16x16xf32>
    %297 = arith.mulf %296, %286 : vector<16x16xf32>
    %298 = arith.addf %265, %297 : vector<16x16xf32>
    %c116 = arith.constant 116 : index
    %299 = memref.load %arg1[%c116] : memref<288xf32, #tpu.memory_space<smem>>
    %300 = vector.broadcast %299 : f32 to vector<16x16xf32>
    %301 = arith.mulf %300, %286 : vector<16x16xf32>
    %302 = arith.addf %269, %301 : vector<16x16xf32>
    %c152 = arith.constant 152 : index
    %303 = memref.load %arg1[%c152] : memref<288xf32, #tpu.memory_space<smem>>
    %304 = vector.broadcast %303 : f32 to vector<16x16xf32>
    %305 = arith.mulf %304, %286 : vector<16x16xf32>
    %306 = arith.addf %273, %305 : vector<16x16xf32>
    %c188 = arith.constant 188 : index
    %307 = memref.load %arg1[%c188] : memref<288xf32, #tpu.memory_space<smem>>
    %308 = vector.broadcast %307 : f32 to vector<16x16xf32>
    %309 = arith.mulf %308, %286 : vector<16x16xf32>
    %310 = arith.addf %277, %309 : vector<16x16xf32>
    %c224 = arith.constant 224 : index
    %311 = memref.load %arg1[%c224] : memref<288xf32, #tpu.memory_space<smem>>
    %312 = vector.broadcast %311 : f32 to vector<16x16xf32>
    %313 = arith.mulf %312, %286 : vector<16x16xf32>
    %314 = arith.addf %281, %313 : vector<16x16xf32>
    %c260 = arith.constant 260 : index
    %315 = memref.load %arg1[%c260] : memref<288xf32, #tpu.memory_space<smem>>
    %316 = vector.broadcast %315 : f32 to vector<16x16xf32>
    %317 = arith.mulf %316, %286 : vector<16x16xf32>
    %318 = arith.addf %285, %317 : vector<16x16xf32>
    %319 = vector.extract_strided_slice %8 {offsets = [1, 0, 0], sizes = [1, 18, 18], strides = [1, 1, 1]} : vector<4x18x18xf32> to vector<1x18x18xf32>
    %320 = vector.shape_cast %319 : vector<1x18x18xf32> to vector<18x18xf32>
    %321 = vector.extract_strided_slice %320 {offsets = [0, 0], sizes = [16, 18], strides = [1, 1]} : vector<18x18xf32> to vector<16x18xf32>
    %322 = vector.extract_strided_slice %321 {offsets = [0, 0], sizes = [16, 16], strides = [1, 1]} : vector<16x18xf32> to vector<16x16xf32>
    %c9 = arith.constant 9 : index
    %323 = memref.load %arg1[%c9] : memref<288xf32, #tpu.memory_space<smem>>
    %324 = vector.broadcast %323 : f32 to vector<16x16xf32>
    %325 = arith.mulf %324, %322 : vector<16x16xf32>
    %326 = arith.addf %290, %325 : vector<16x16xf32>
    %c45 = arith.constant 45 : index
    %327 = memref.load %arg1[%c45] : memref<288xf32, #tpu.memory_space<smem>>
    %328 = vector.broadcast %327 : f32 to vector<16x16xf32>
    %329 = arith.mulf %328, %322 : vector<16x16xf32>
    %330 = arith.addf %294, %329 : vector<16x16xf32>
    %c81 = arith.constant 81 : index
    %331 = memref.load %arg1[%c81] : memref<288xf32, #tpu.memory_space<smem>>
    %332 = vector.broadcast %331 : f32 to vector<16x16xf32>
    %333 = arith.mulf %332, %322 : vector<16x16xf32>
    %334 = arith.addf %298, %333 : vector<16x16xf32>
    %c117 = arith.constant 117 : index
    %335 = memref.load %arg1[%c117] : memref<288xf32, #tpu.memory_space<smem>>
    %336 = vector.broadcast %335 : f32 to vector<16x16xf32>
    %337 = arith.mulf %336, %322 : vector<16x16xf32>
    %338 = arith.addf %302, %337 : vector<16x16xf32>
    %c153 = arith.constant 153 : index
    %339 = memref.load %arg1[%c153] : memref<288xf32, #tpu.memory_space<smem>>
    %340 = vector.broadcast %339 : f32 to vector<16x16xf32>
    %341 = arith.mulf %340, %322 : vector<16x16xf32>
    %342 = arith.addf %306, %341 : vector<16x16xf32>
    %c189 = arith.constant 189 : index
    %343 = memref.load %arg1[%c189] : memref<288xf32, #tpu.memory_space<smem>>
    %344 = vector.broadcast %343 : f32 to vector<16x16xf32>
    %345 = arith.mulf %344, %322 : vector<16x16xf32>
    %346 = arith.addf %310, %345 : vector<16x16xf32>
    %c225 = arith.constant 225 : index
    %347 = memref.load %arg1[%c225] : memref<288xf32, #tpu.memory_space<smem>>
    %348 = vector.broadcast %347 : f32 to vector<16x16xf32>
    %349 = arith.mulf %348, %322 : vector<16x16xf32>
    %350 = arith.addf %314, %349 : vector<16x16xf32>
    %c261 = arith.constant 261 : index
    %351 = memref.load %arg1[%c261] : memref<288xf32, #tpu.memory_space<smem>>
    %352 = vector.broadcast %351 : f32 to vector<16x16xf32>
    %353 = arith.mulf %352, %322 : vector<16x16xf32>
    %354 = arith.addf %318, %353 : vector<16x16xf32>
    %355 = vector.extract_strided_slice %321 {offsets = [0, 1], sizes = [16, 16], strides = [1, 1]} : vector<16x18xf32> to vector<16x16xf32>
    %c10 = arith.constant 10 : index
    %356 = memref.load %arg1[%c10] : memref<288xf32, #tpu.memory_space<smem>>
    %357 = vector.broadcast %356 : f32 to vector<16x16xf32>
    %358 = arith.mulf %357, %355 : vector<16x16xf32>
    %359 = arith.addf %326, %358 : vector<16x16xf32>
    %c46 = arith.constant 46 : index
    %360 = memref.load %arg1[%c46] : memref<288xf32, #tpu.memory_space<smem>>
    %361 = vector.broadcast %360 : f32 to vector<16x16xf32>
    %362 = arith.mulf %361, %355 : vector<16x16xf32>
    %363 = arith.addf %330, %362 : vector<16x16xf32>
    %c82 = arith.constant 82 : index
    %364 = memref.load %arg1[%c82] : memref<288xf32, #tpu.memory_space<smem>>
    %365 = vector.broadcast %364 : f32 to vector<16x16xf32>
    %366 = arith.mulf %365, %355 : vector<16x16xf32>
    %367 = arith.addf %334, %366 : vector<16x16xf32>
    %c118 = arith.constant 118 : index
    %368 = memref.load %arg1[%c118] : memref<288xf32, #tpu.memory_space<smem>>
    %369 = vector.broadcast %368 : f32 to vector<16x16xf32>
    %370 = arith.mulf %369, %355 : vector<16x16xf32>
    %371 = arith.addf %338, %370 : vector<16x16xf32>
    %c154 = arith.constant 154 : index
    %372 = memref.load %arg1[%c154] : memref<288xf32, #tpu.memory_space<smem>>
    %373 = vector.broadcast %372 : f32 to vector<16x16xf32>
    %374 = arith.mulf %373, %355 : vector<16x16xf32>
    %375 = arith.addf %342, %374 : vector<16x16xf32>
    %c190 = arith.constant 190 : index
    %376 = memref.load %arg1[%c190] : memref<288xf32, #tpu.memory_space<smem>>
    %377 = vector.broadcast %376 : f32 to vector<16x16xf32>
    %378 = arith.mulf %377, %355 : vector<16x16xf32>
    %379 = arith.addf %346, %378 : vector<16x16xf32>
    %c226 = arith.constant 226 : index
    %380 = memref.load %arg1[%c226] : memref<288xf32, #tpu.memory_space<smem>>
    %381 = vector.broadcast %380 : f32 to vector<16x16xf32>
    %382 = arith.mulf %381, %355 : vector<16x16xf32>
    %383 = arith.addf %350, %382 : vector<16x16xf32>
    %c262 = arith.constant 262 : index
    %384 = memref.load %arg1[%c262] : memref<288xf32, #tpu.memory_space<smem>>
    %385 = vector.broadcast %384 : f32 to vector<16x16xf32>
    %386 = arith.mulf %385, %355 : vector<16x16xf32>
    %387 = arith.addf %354, %386 : vector<16x16xf32>
    %388 = vector.extract_strided_slice %321 {offsets = [0, 2], sizes = [16, 16], strides = [1, 1]} : vector<16x18xf32> to vector<16x16xf32>
    %c11 = arith.constant 11 : index
    %389 = memref.load %arg1[%c11] : memref<288xf32, #tpu.memory_space<smem>>
    %390 = vector.broadcast %389 : f32 to vector<16x16xf32>
    %391 = arith.mulf %390, %388 : vector<16x16xf32>
    %392 = arith.addf %359, %391 : vector<16x16xf32>
    %c47 = arith.constant 47 : index
    %393 = memref.load %arg1[%c47] : memref<288xf32, #tpu.memory_space<smem>>
    %394 = vector.broadcast %393 : f32 to vector<16x16xf32>
    %395 = arith.mulf %394, %388 : vector<16x16xf32>
    %396 = arith.addf %363, %395 : vector<16x16xf32>
    %c83 = arith.constant 83 : index
    %397 = memref.load %arg1[%c83] : memref<288xf32, #tpu.memory_space<smem>>
    %398 = vector.broadcast %397 : f32 to vector<16x16xf32>
    %399 = arith.mulf %398, %388 : vector<16x16xf32>
    %400 = arith.addf %367, %399 : vector<16x16xf32>
    %c119 = arith.constant 119 : index
    %401 = memref.load %arg1[%c119] : memref<288xf32, #tpu.memory_space<smem>>
    %402 = vector.broadcast %401 : f32 to vector<16x16xf32>
    %403 = arith.mulf %402, %388 : vector<16x16xf32>
    %404 = arith.addf %371, %403 : vector<16x16xf32>
    %c155 = arith.constant 155 : index
    %405 = memref.load %arg1[%c155] : memref<288xf32, #tpu.memory_space<smem>>
    %406 = vector.broadcast %405 : f32 to vector<16x16xf32>
    %407 = arith.mulf %406, %388 : vector<16x16xf32>
    %408 = arith.addf %375, %407 : vector<16x16xf32>
    %c191 = arith.constant 191 : index
    %409 = memref.load %arg1[%c191] : memref<288xf32, #tpu.memory_space<smem>>
    %410 = vector.broadcast %409 : f32 to vector<16x16xf32>
    %411 = arith.mulf %410, %388 : vector<16x16xf32>
    %412 = arith.addf %379, %411 : vector<16x16xf32>
    %c227 = arith.constant 227 : index
    %413 = memref.load %arg1[%c227] : memref<288xf32, #tpu.memory_space<smem>>
    %414 = vector.broadcast %413 : f32 to vector<16x16xf32>
    %415 = arith.mulf %414, %388 : vector<16x16xf32>
    %416 = arith.addf %383, %415 : vector<16x16xf32>
    %c263 = arith.constant 263 : index
    %417 = memref.load %arg1[%c263] : memref<288xf32, #tpu.memory_space<smem>>
    %418 = vector.broadcast %417 : f32 to vector<16x16xf32>
    %419 = arith.mulf %418, %388 : vector<16x16xf32>
    %420 = arith.addf %387, %419 : vector<16x16xf32>
    %421 = vector.extract_strided_slice %320 {offsets = [1, 0], sizes = [16, 18], strides = [1, 1]} : vector<18x18xf32> to vector<16x18xf32>
    %422 = vector.extract_strided_slice %421 {offsets = [0, 0], sizes = [16, 16], strides = [1, 1]} : vector<16x18xf32> to vector<16x16xf32>
    %c12 = arith.constant 12 : index
    %423 = memref.load %arg1[%c12] : memref<288xf32, #tpu.memory_space<smem>>
    %424 = vector.broadcast %423 : f32 to vector<16x16xf32>
    %425 = arith.mulf %424, %422 : vector<16x16xf32>
    %426 = arith.addf %392, %425 : vector<16x16xf32>
    %c48 = arith.constant 48 : index
    %427 = memref.load %arg1[%c48] : memref<288xf32, #tpu.memory_space<smem>>
    %428 = vector.broadcast %427 : f32 to vector<16x16xf32>
    %429 = arith.mulf %428, %422 : vector<16x16xf32>
    %430 = arith.addf %396, %429 : vector<16x16xf32>
    %c84 = arith.constant 84 : index
    %431 = memref.load %arg1[%c84] : memref<288xf32, #tpu.memory_space<smem>>
    %432 = vector.broadcast %431 : f32 to vector<16x16xf32>
    %433 = arith.mulf %432, %422 : vector<16x16xf32>
    %434 = arith.addf %400, %433 : vector<16x16xf32>
    %c120 = arith.constant 120 : index
    %435 = memref.load %arg1[%c120] : memref<288xf32, #tpu.memory_space<smem>>
    %436 = vector.broadcast %435 : f32 to vector<16x16xf32>
    %437 = arith.mulf %436, %422 : vector<16x16xf32>
    %438 = arith.addf %404, %437 : vector<16x16xf32>
    %c156 = arith.constant 156 : index
    %439 = memref.load %arg1[%c156] : memref<288xf32, #tpu.memory_space<smem>>
    %440 = vector.broadcast %439 : f32 to vector<16x16xf32>
    %441 = arith.mulf %440, %422 : vector<16x16xf32>
    %442 = arith.addf %408, %441 : vector<16x16xf32>
    %c192 = arith.constant 192 : index
    %443 = memref.load %arg1[%c192] : memref<288xf32, #tpu.memory_space<smem>>
    %444 = vector.broadcast %443 : f32 to vector<16x16xf32>
    %445 = arith.mulf %444, %422 : vector<16x16xf32>
    %446 = arith.addf %412, %445 : vector<16x16xf32>
    %c228 = arith.constant 228 : index
    %447 = memref.load %arg1[%c228] : memref<288xf32, #tpu.memory_space<smem>>
    %448 = vector.broadcast %447 : f32 to vector<16x16xf32>
    %449 = arith.mulf %448, %422 : vector<16x16xf32>
    %450 = arith.addf %416, %449 : vector<16x16xf32>
    %c264 = arith.constant 264 : index
    %451 = memref.load %arg1[%c264] : memref<288xf32, #tpu.memory_space<smem>>
    %452 = vector.broadcast %451 : f32 to vector<16x16xf32>
    %453 = arith.mulf %452, %422 : vector<16x16xf32>
    %454 = arith.addf %420, %453 : vector<16x16xf32>
    %455 = vector.extract_strided_slice %421 {offsets = [0, 1], sizes = [16, 16], strides = [1, 1]} : vector<16x18xf32> to vector<16x16xf32>
    %c13 = arith.constant 13 : index
    %456 = memref.load %arg1[%c13] : memref<288xf32, #tpu.memory_space<smem>>
    %457 = vector.broadcast %456 : f32 to vector<16x16xf32>
    %458 = arith.mulf %457, %455 : vector<16x16xf32>
    %459 = arith.addf %426, %458 : vector<16x16xf32>
    %c49 = arith.constant 49 : index
    %460 = memref.load %arg1[%c49] : memref<288xf32, #tpu.memory_space<smem>>
    %461 = vector.broadcast %460 : f32 to vector<16x16xf32>
    %462 = arith.mulf %461, %455 : vector<16x16xf32>
    %463 = arith.addf %430, %462 : vector<16x16xf32>
    %c85 = arith.constant 85 : index
    %464 = memref.load %arg1[%c85] : memref<288xf32, #tpu.memory_space<smem>>
    %465 = vector.broadcast %464 : f32 to vector<16x16xf32>
    %466 = arith.mulf %465, %455 : vector<16x16xf32>
    %467 = arith.addf %434, %466 : vector<16x16xf32>
    %c121 = arith.constant 121 : index
    %468 = memref.load %arg1[%c121] : memref<288xf32, #tpu.memory_space<smem>>
    %469 = vector.broadcast %468 : f32 to vector<16x16xf32>
    %470 = arith.mulf %469, %455 : vector<16x16xf32>
    %471 = arith.addf %438, %470 : vector<16x16xf32>
    %c157 = arith.constant 157 : index
    %472 = memref.load %arg1[%c157] : memref<288xf32, #tpu.memory_space<smem>>
    %473 = vector.broadcast %472 : f32 to vector<16x16xf32>
    %474 = arith.mulf %473, %455 : vector<16x16xf32>
    %475 = arith.addf %442, %474 : vector<16x16xf32>
    %c193 = arith.constant 193 : index
    %476 = memref.load %arg1[%c193] : memref<288xf32, #tpu.memory_space<smem>>
    %477 = vector.broadcast %476 : f32 to vector<16x16xf32>
    %478 = arith.mulf %477, %455 : vector<16x16xf32>
    %479 = arith.addf %446, %478 : vector<16x16xf32>
    %c229 = arith.constant 229 : index
    %480 = memref.load %arg1[%c229] : memref<288xf32, #tpu.memory_space<smem>>
    %481 = vector.broadcast %480 : f32 to vector<16x16xf32>
    %482 = arith.mulf %481, %455 : vector<16x16xf32>
    %483 = arith.addf %450, %482 : vector<16x16xf32>
    %c265 = arith.constant 265 : index
    %484 = memref.load %arg1[%c265] : memref<288xf32, #tpu.memory_space<smem>>
    %485 = vector.broadcast %484 : f32 to vector<16x16xf32>
    %486 = arith.mulf %485, %455 : vector<16x16xf32>
    %487 = arith.addf %454, %486 : vector<16x16xf32>
    %488 = vector.extract_strided_slice %421 {offsets = [0, 2], sizes = [16, 16], strides = [1, 1]} : vector<16x18xf32> to vector<16x16xf32>
    %c14 = arith.constant 14 : index
    %489 = memref.load %arg1[%c14] : memref<288xf32, #tpu.memory_space<smem>>
    %490 = vector.broadcast %489 : f32 to vector<16x16xf32>
    %491 = arith.mulf %490, %488 : vector<16x16xf32>
    %492 = arith.addf %459, %491 : vector<16x16xf32>
    %c50 = arith.constant 50 : index
    %493 = memref.load %arg1[%c50] : memref<288xf32, #tpu.memory_space<smem>>
    %494 = vector.broadcast %493 : f32 to vector<16x16xf32>
    %495 = arith.mulf %494, %488 : vector<16x16xf32>
    %496 = arith.addf %463, %495 : vector<16x16xf32>
    %c86 = arith.constant 86 : index
    %497 = memref.load %arg1[%c86] : memref<288xf32, #tpu.memory_space<smem>>
    %498 = vector.broadcast %497 : f32 to vector<16x16xf32>
    %499 = arith.mulf %498, %488 : vector<16x16xf32>
    %500 = arith.addf %467, %499 : vector<16x16xf32>
    %c122 = arith.constant 122 : index
    %501 = memref.load %arg1[%c122] : memref<288xf32, #tpu.memory_space<smem>>
    %502 = vector.broadcast %501 : f32 to vector<16x16xf32>
    %503 = arith.mulf %502, %488 : vector<16x16xf32>
    %504 = arith.addf %471, %503 : vector<16x16xf32>
    %c158 = arith.constant 158 : index
    %505 = memref.load %arg1[%c158] : memref<288xf32, #tpu.memory_space<smem>>
    %506 = vector.broadcast %505 : f32 to vector<16x16xf32>
    %507 = arith.mulf %506, %488 : vector<16x16xf32>
    %508 = arith.addf %475, %507 : vector<16x16xf32>
    %c194 = arith.constant 194 : index
    %509 = memref.load %arg1[%c194] : memref<288xf32, #tpu.memory_space<smem>>
    %510 = vector.broadcast %509 : f32 to vector<16x16xf32>
    %511 = arith.mulf %510, %488 : vector<16x16xf32>
    %512 = arith.addf %479, %511 : vector<16x16xf32>
    %c230 = arith.constant 230 : index
    %513 = memref.load %arg1[%c230] : memref<288xf32, #tpu.memory_space<smem>>
    %514 = vector.broadcast %513 : f32 to vector<16x16xf32>
    %515 = arith.mulf %514, %488 : vector<16x16xf32>
    %516 = arith.addf %483, %515 : vector<16x16xf32>
    %c266 = arith.constant 266 : index
    %517 = memref.load %arg1[%c266] : memref<288xf32, #tpu.memory_space<smem>>
    %518 = vector.broadcast %517 : f32 to vector<16x16xf32>
    %519 = arith.mulf %518, %488 : vector<16x16xf32>
    %520 = arith.addf %487, %519 : vector<16x16xf32>
    %521 = vector.extract_strided_slice %320 {offsets = [2, 0], sizes = [16, 18], strides = [1, 1]} : vector<18x18xf32> to vector<16x18xf32>
    %522 = vector.extract_strided_slice %521 {offsets = [0, 0], sizes = [16, 16], strides = [1, 1]} : vector<16x18xf32> to vector<16x16xf32>
    %c15 = arith.constant 15 : index
    %523 = memref.load %arg1[%c15] : memref<288xf32, #tpu.memory_space<smem>>
    %524 = vector.broadcast %523 : f32 to vector<16x16xf32>
    %525 = arith.mulf %524, %522 : vector<16x16xf32>
    %526 = arith.addf %492, %525 : vector<16x16xf32>
    %c51 = arith.constant 51 : index
    %527 = memref.load %arg1[%c51] : memref<288xf32, #tpu.memory_space<smem>>
    %528 = vector.broadcast %527 : f32 to vector<16x16xf32>
    %529 = arith.mulf %528, %522 : vector<16x16xf32>
    %530 = arith.addf %496, %529 : vector<16x16xf32>
    %c87 = arith.constant 87 : index
    %531 = memref.load %arg1[%c87] : memref<288xf32, #tpu.memory_space<smem>>
    %532 = vector.broadcast %531 : f32 to vector<16x16xf32>
    %533 = arith.mulf %532, %522 : vector<16x16xf32>
    %534 = arith.addf %500, %533 : vector<16x16xf32>
    %c123 = arith.constant 123 : index
    %535 = memref.load %arg1[%c123] : memref<288xf32, #tpu.memory_space<smem>>
    %536 = vector.broadcast %535 : f32 to vector<16x16xf32>
    %537 = arith.mulf %536, %522 : vector<16x16xf32>
    %538 = arith.addf %504, %537 : vector<16x16xf32>
    %c159 = arith.constant 159 : index
    %539 = memref.load %arg1[%c159] : memref<288xf32, #tpu.memory_space<smem>>
    %540 = vector.broadcast %539 : f32 to vector<16x16xf32>
    %541 = arith.mulf %540, %522 : vector<16x16xf32>
    %542 = arith.addf %508, %541 : vector<16x16xf32>
    %c195 = arith.constant 195 : index
    %543 = memref.load %arg1[%c195] : memref<288xf32, #tpu.memory_space<smem>>
    %544 = vector.broadcast %543 : f32 to vector<16x16xf32>
    %545 = arith.mulf %544, %522 : vector<16x16xf32>
    %546 = arith.addf %512, %545 : vector<16x16xf32>
    %c231 = arith.constant 231 : index
    %547 = memref.load %arg1[%c231] : memref<288xf32, #tpu.memory_space<smem>>
    %548 = vector.broadcast %547 : f32 to vector<16x16xf32>
    %549 = arith.mulf %548, %522 : vector<16x16xf32>
    %550 = arith.addf %516, %549 : vector<16x16xf32>
    %c267 = arith.constant 267 : index
    %551 = memref.load %arg1[%c267] : memref<288xf32, #tpu.memory_space<smem>>
    %552 = vector.broadcast %551 : f32 to vector<16x16xf32>
    %553 = arith.mulf %552, %522 : vector<16x16xf32>
    %554 = arith.addf %520, %553 : vector<16x16xf32>
    %555 = vector.extract_strided_slice %521 {offsets = [0, 1], sizes = [16, 16], strides = [1, 1]} : vector<16x18xf32> to vector<16x16xf32>
    %c16 = arith.constant 16 : index
    %556 = memref.load %arg1[%c16] : memref<288xf32, #tpu.memory_space<smem>>
    %557 = vector.broadcast %556 : f32 to vector<16x16xf32>
    %558 = arith.mulf %557, %555 : vector<16x16xf32>
    %559 = arith.addf %526, %558 : vector<16x16xf32>
    %c52 = arith.constant 52 : index
    %560 = memref.load %arg1[%c52] : memref<288xf32, #tpu.memory_space<smem>>
    %561 = vector.broadcast %560 : f32 to vector<16x16xf32>
    %562 = arith.mulf %561, %555 : vector<16x16xf32>
    %563 = arith.addf %530, %562 : vector<16x16xf32>
    %c88 = arith.constant 88 : index
    %564 = memref.load %arg1[%c88] : memref<288xf32, #tpu.memory_space<smem>>
    %565 = vector.broadcast %564 : f32 to vector<16x16xf32>
    %566 = arith.mulf %565, %555 : vector<16x16xf32>
    %567 = arith.addf %534, %566 : vector<16x16xf32>
    %c124 = arith.constant 124 : index
    %568 = memref.load %arg1[%c124] : memref<288xf32, #tpu.memory_space<smem>>
    %569 = vector.broadcast %568 : f32 to vector<16x16xf32>
    %570 = arith.mulf %569, %555 : vector<16x16xf32>
    %571 = arith.addf %538, %570 : vector<16x16xf32>
    %c160 = arith.constant 160 : index
    %572 = memref.load %arg1[%c160] : memref<288xf32, #tpu.memory_space<smem>>
    %573 = vector.broadcast %572 : f32 to vector<16x16xf32>
    %574 = arith.mulf %573, %555 : vector<16x16xf32>
    %575 = arith.addf %542, %574 : vector<16x16xf32>
    %c196 = arith.constant 196 : index
    %576 = memref.load %arg1[%c196] : memref<288xf32, #tpu.memory_space<smem>>
    %577 = vector.broadcast %576 : f32 to vector<16x16xf32>
    %578 = arith.mulf %577, %555 : vector<16x16xf32>
    %579 = arith.addf %546, %578 : vector<16x16xf32>
    %c232 = arith.constant 232 : index
    %580 = memref.load %arg1[%c232] : memref<288xf32, #tpu.memory_space<smem>>
    %581 = vector.broadcast %580 : f32 to vector<16x16xf32>
    %582 = arith.mulf %581, %555 : vector<16x16xf32>
    %583 = arith.addf %550, %582 : vector<16x16xf32>
    %c268 = arith.constant 268 : index
    %584 = memref.load %arg1[%c268] : memref<288xf32, #tpu.memory_space<smem>>
    %585 = vector.broadcast %584 : f32 to vector<16x16xf32>
    %586 = arith.mulf %585, %555 : vector<16x16xf32>
    %587 = arith.addf %554, %586 : vector<16x16xf32>
    %588 = vector.extract_strided_slice %521 {offsets = [0, 2], sizes = [16, 16], strides = [1, 1]} : vector<16x18xf32> to vector<16x16xf32>
    %c17 = arith.constant 17 : index
    %589 = memref.load %arg1[%c17] : memref<288xf32, #tpu.memory_space<smem>>
    %590 = vector.broadcast %589 : f32 to vector<16x16xf32>
    %591 = arith.mulf %590, %588 : vector<16x16xf32>
    %592 = arith.addf %559, %591 : vector<16x16xf32>
    %c53 = arith.constant 53 : index
    %593 = memref.load %arg1[%c53] : memref<288xf32, #tpu.memory_space<smem>>
    %594 = vector.broadcast %593 : f32 to vector<16x16xf32>
    %595 = arith.mulf %594, %588 : vector<16x16xf32>
    %596 = arith.addf %563, %595 : vector<16x16xf32>
    %c89 = arith.constant 89 : index
    %597 = memref.load %arg1[%c89] : memref<288xf32, #tpu.memory_space<smem>>
    %598 = vector.broadcast %597 : f32 to vector<16x16xf32>
    %599 = arith.mulf %598, %588 : vector<16x16xf32>
    %600 = arith.addf %567, %599 : vector<16x16xf32>
    %c125 = arith.constant 125 : index
    %601 = memref.load %arg1[%c125] : memref<288xf32, #tpu.memory_space<smem>>
    %602 = vector.broadcast %601 : f32 to vector<16x16xf32>
    %603 = arith.mulf %602, %588 : vector<16x16xf32>
    %604 = arith.addf %571, %603 : vector<16x16xf32>
    %c161 = arith.constant 161 : index
    %605 = memref.load %arg1[%c161] : memref<288xf32, #tpu.memory_space<smem>>
    %606 = vector.broadcast %605 : f32 to vector<16x16xf32>
    %607 = arith.mulf %606, %588 : vector<16x16xf32>
    %608 = arith.addf %575, %607 : vector<16x16xf32>
    %c197 = arith.constant 197 : index
    %609 = memref.load %arg1[%c197] : memref<288xf32, #tpu.memory_space<smem>>
    %610 = vector.broadcast %609 : f32 to vector<16x16xf32>
    %611 = arith.mulf %610, %588 : vector<16x16xf32>
    %612 = arith.addf %579, %611 : vector<16x16xf32>
    %c233 = arith.constant 233 : index
    %613 = memref.load %arg1[%c233] : memref<288xf32, #tpu.memory_space<smem>>
    %614 = vector.broadcast %613 : f32 to vector<16x16xf32>
    %615 = arith.mulf %614, %588 : vector<16x16xf32>
    %616 = arith.addf %583, %615 : vector<16x16xf32>
    %c269 = arith.constant 269 : index
    %617 = memref.load %arg1[%c269] : memref<288xf32, #tpu.memory_space<smem>>
    %618 = vector.broadcast %617 : f32 to vector<16x16xf32>
    %619 = arith.mulf %618, %588 : vector<16x16xf32>
    %620 = arith.addf %587, %619 : vector<16x16xf32>
    %621 = vector.extract_strided_slice %8 {offsets = [2, 0, 0], sizes = [1, 18, 18], strides = [1, 1, 1]} : vector<4x18x18xf32> to vector<1x18x18xf32>
    %622 = vector.shape_cast %621 : vector<1x18x18xf32> to vector<18x18xf32>
    %623 = vector.extract_strided_slice %622 {offsets = [0, 0], sizes = [16, 18], strides = [1, 1]} : vector<18x18xf32> to vector<16x18xf32>
    %624 = vector.extract_strided_slice %623 {offsets = [0, 0], sizes = [16, 16], strides = [1, 1]} : vector<16x18xf32> to vector<16x16xf32>
    %c18 = arith.constant 18 : index
    %625 = memref.load %arg1[%c18] : memref<288xf32, #tpu.memory_space<smem>>
    %626 = vector.broadcast %625 : f32 to vector<16x16xf32>
    %627 = arith.mulf %626, %624 : vector<16x16xf32>
    %628 = arith.addf %592, %627 : vector<16x16xf32>
    %c54 = arith.constant 54 : index
    %629 = memref.load %arg1[%c54] : memref<288xf32, #tpu.memory_space<smem>>
    %630 = vector.broadcast %629 : f32 to vector<16x16xf32>
    %631 = arith.mulf %630, %624 : vector<16x16xf32>
    %632 = arith.addf %596, %631 : vector<16x16xf32>
    %c90 = arith.constant 90 : index
    %633 = memref.load %arg1[%c90] : memref<288xf32, #tpu.memory_space<smem>>
    %634 = vector.broadcast %633 : f32 to vector<16x16xf32>
    %635 = arith.mulf %634, %624 : vector<16x16xf32>
    %636 = arith.addf %600, %635 : vector<16x16xf32>
    %c126 = arith.constant 126 : index
    %637 = memref.load %arg1[%c126] : memref<288xf32, #tpu.memory_space<smem>>
    %638 = vector.broadcast %637 : f32 to vector<16x16xf32>
    %639 = arith.mulf %638, %624 : vector<16x16xf32>
    %640 = arith.addf %604, %639 : vector<16x16xf32>
    %c162 = arith.constant 162 : index
    %641 = memref.load %arg1[%c162] : memref<288xf32, #tpu.memory_space<smem>>
    %642 = vector.broadcast %641 : f32 to vector<16x16xf32>
    %643 = arith.mulf %642, %624 : vector<16x16xf32>
    %644 = arith.addf %608, %643 : vector<16x16xf32>
    %c198 = arith.constant 198 : index
    %645 = memref.load %arg1[%c198] : memref<288xf32, #tpu.memory_space<smem>>
    %646 = vector.broadcast %645 : f32 to vector<16x16xf32>
    %647 = arith.mulf %646, %624 : vector<16x16xf32>
    %648 = arith.addf %612, %647 : vector<16x16xf32>
    %c234 = arith.constant 234 : index
    %649 = memref.load %arg1[%c234] : memref<288xf32, #tpu.memory_space<smem>>
    %650 = vector.broadcast %649 : f32 to vector<16x16xf32>
    %651 = arith.mulf %650, %624 : vector<16x16xf32>
    %652 = arith.addf %616, %651 : vector<16x16xf32>
    %c270 = arith.constant 270 : index
    %653 = memref.load %arg1[%c270] : memref<288xf32, #tpu.memory_space<smem>>
    %654 = vector.broadcast %653 : f32 to vector<16x16xf32>
    %655 = arith.mulf %654, %624 : vector<16x16xf32>
    %656 = arith.addf %620, %655 : vector<16x16xf32>
    %657 = vector.extract_strided_slice %623 {offsets = [0, 1], sizes = [16, 16], strides = [1, 1]} : vector<16x18xf32> to vector<16x16xf32>
    %c19 = arith.constant 19 : index
    %658 = memref.load %arg1[%c19] : memref<288xf32, #tpu.memory_space<smem>>
    %659 = vector.broadcast %658 : f32 to vector<16x16xf32>
    %660 = arith.mulf %659, %657 : vector<16x16xf32>
    %661 = arith.addf %628, %660 : vector<16x16xf32>
    %c55 = arith.constant 55 : index
    %662 = memref.load %arg1[%c55] : memref<288xf32, #tpu.memory_space<smem>>
    %663 = vector.broadcast %662 : f32 to vector<16x16xf32>
    %664 = arith.mulf %663, %657 : vector<16x16xf32>
    %665 = arith.addf %632, %664 : vector<16x16xf32>
    %c91 = arith.constant 91 : index
    %666 = memref.load %arg1[%c91] : memref<288xf32, #tpu.memory_space<smem>>
    %667 = vector.broadcast %666 : f32 to vector<16x16xf32>
    %668 = arith.mulf %667, %657 : vector<16x16xf32>
    %669 = arith.addf %636, %668 : vector<16x16xf32>
    %c127 = arith.constant 127 : index
    %670 = memref.load %arg1[%c127] : memref<288xf32, #tpu.memory_space<smem>>
    %671 = vector.broadcast %670 : f32 to vector<16x16xf32>
    %672 = arith.mulf %671, %657 : vector<16x16xf32>
    %673 = arith.addf %640, %672 : vector<16x16xf32>
    %c163 = arith.constant 163 : index
    %674 = memref.load %arg1[%c163] : memref<288xf32, #tpu.memory_space<smem>>
    %675 = vector.broadcast %674 : f32 to vector<16x16xf32>
    %676 = arith.mulf %675, %657 : vector<16x16xf32>
    %677 = arith.addf %644, %676 : vector<16x16xf32>
    %c199 = arith.constant 199 : index
    %678 = memref.load %arg1[%c199] : memref<288xf32, #tpu.memory_space<smem>>
    %679 = vector.broadcast %678 : f32 to vector<16x16xf32>
    %680 = arith.mulf %679, %657 : vector<16x16xf32>
    %681 = arith.addf %648, %680 : vector<16x16xf32>
    %c235 = arith.constant 235 : index
    %682 = memref.load %arg1[%c235] : memref<288xf32, #tpu.memory_space<smem>>
    %683 = vector.broadcast %682 : f32 to vector<16x16xf32>
    %684 = arith.mulf %683, %657 : vector<16x16xf32>
    %685 = arith.addf %652, %684 : vector<16x16xf32>
    %c271 = arith.constant 271 : index
    %686 = memref.load %arg1[%c271] : memref<288xf32, #tpu.memory_space<smem>>
    %687 = vector.broadcast %686 : f32 to vector<16x16xf32>
    %688 = arith.mulf %687, %657 : vector<16x16xf32>
    %689 = arith.addf %656, %688 : vector<16x16xf32>
    %690 = vector.extract_strided_slice %623 {offsets = [0, 2], sizes = [16, 16], strides = [1, 1]} : vector<16x18xf32> to vector<16x16xf32>
    %c20 = arith.constant 20 : index
    %691 = memref.load %arg1[%c20] : memref<288xf32, #tpu.memory_space<smem>>
    %692 = vector.broadcast %691 : f32 to vector<16x16xf32>
    %693 = arith.mulf %692, %690 : vector<16x16xf32>
    %694 = arith.addf %661, %693 : vector<16x16xf32>
    %c56 = arith.constant 56 : index
    %695 = memref.load %arg1[%c56] : memref<288xf32, #tpu.memory_space<smem>>
    %696 = vector.broadcast %695 : f32 to vector<16x16xf32>
    %697 = arith.mulf %696, %690 : vector<16x16xf32>
    %698 = arith.addf %665, %697 : vector<16x16xf32>
    %c92 = arith.constant 92 : index
    %699 = memref.load %arg1[%c92] : memref<288xf32, #tpu.memory_space<smem>>
    %700 = vector.broadcast %699 : f32 to vector<16x16xf32>
    %701 = arith.mulf %700, %690 : vector<16x16xf32>
    %702 = arith.addf %669, %701 : vector<16x16xf32>
    %c128 = arith.constant 128 : index
    %703 = memref.load %arg1[%c128] : memref<288xf32, #tpu.memory_space<smem>>
    %704 = vector.broadcast %703 : f32 to vector<16x16xf32>
    %705 = arith.mulf %704, %690 : vector<16x16xf32>
    %706 = arith.addf %673, %705 : vector<16x16xf32>
    %c164 = arith.constant 164 : index
    %707 = memref.load %arg1[%c164] : memref<288xf32, #tpu.memory_space<smem>>
    %708 = vector.broadcast %707 : f32 to vector<16x16xf32>
    %709 = arith.mulf %708, %690 : vector<16x16xf32>
    %710 = arith.addf %677, %709 : vector<16x16xf32>
    %c200 = arith.constant 200 : index
    %711 = memref.load %arg1[%c200] : memref<288xf32, #tpu.memory_space<smem>>
    %712 = vector.broadcast %711 : f32 to vector<16x16xf32>
    %713 = arith.mulf %712, %690 : vector<16x16xf32>
    %714 = arith.addf %681, %713 : vector<16x16xf32>
    %c236 = arith.constant 236 : index
    %715 = memref.load %arg1[%c236] : memref<288xf32, #tpu.memory_space<smem>>
    %716 = vector.broadcast %715 : f32 to vector<16x16xf32>
    %717 = arith.mulf %716, %690 : vector<16x16xf32>
    %718 = arith.addf %685, %717 : vector<16x16xf32>
    %c272 = arith.constant 272 : index
    %719 = memref.load %arg1[%c272] : memref<288xf32, #tpu.memory_space<smem>>
    %720 = vector.broadcast %719 : f32 to vector<16x16xf32>
    %721 = arith.mulf %720, %690 : vector<16x16xf32>
    %722 = arith.addf %689, %721 : vector<16x16xf32>
    %723 = vector.extract_strided_slice %622 {offsets = [1, 0], sizes = [16, 18], strides = [1, 1]} : vector<18x18xf32> to vector<16x18xf32>
    %724 = vector.extract_strided_slice %723 {offsets = [0, 0], sizes = [16, 16], strides = [1, 1]} : vector<16x18xf32> to vector<16x16xf32>
    %c21 = arith.constant 21 : index
    %725 = memref.load %arg1[%c21] : memref<288xf32, #tpu.memory_space<smem>>
    %726 = vector.broadcast %725 : f32 to vector<16x16xf32>
    %727 = arith.mulf %726, %724 : vector<16x16xf32>
    %728 = arith.addf %694, %727 : vector<16x16xf32>
    %c57 = arith.constant 57 : index
    %729 = memref.load %arg1[%c57] : memref<288xf32, #tpu.memory_space<smem>>
    %730 = vector.broadcast %729 : f32 to vector<16x16xf32>
    %731 = arith.mulf %730, %724 : vector<16x16xf32>
    %732 = arith.addf %698, %731 : vector<16x16xf32>
    %c93 = arith.constant 93 : index
    %733 = memref.load %arg1[%c93] : memref<288xf32, #tpu.memory_space<smem>>
    %734 = vector.broadcast %733 : f32 to vector<16x16xf32>
    %735 = arith.mulf %734, %724 : vector<16x16xf32>
    %736 = arith.addf %702, %735 : vector<16x16xf32>
    %c129 = arith.constant 129 : index
    %737 = memref.load %arg1[%c129] : memref<288xf32, #tpu.memory_space<smem>>
    %738 = vector.broadcast %737 : f32 to vector<16x16xf32>
    %739 = arith.mulf %738, %724 : vector<16x16xf32>
    %740 = arith.addf %706, %739 : vector<16x16xf32>
    %c165 = arith.constant 165 : index
    %741 = memref.load %arg1[%c165] : memref<288xf32, #tpu.memory_space<smem>>
    %742 = vector.broadcast %741 : f32 to vector<16x16xf32>
    %743 = arith.mulf %742, %724 : vector<16x16xf32>
    %744 = arith.addf %710, %743 : vector<16x16xf32>
    %c201 = arith.constant 201 : index
    %745 = memref.load %arg1[%c201] : memref<288xf32, #tpu.memory_space<smem>>
    %746 = vector.broadcast %745 : f32 to vector<16x16xf32>
    %747 = arith.mulf %746, %724 : vector<16x16xf32>
    %748 = arith.addf %714, %747 : vector<16x16xf32>
    %c237 = arith.constant 237 : index
    %749 = memref.load %arg1[%c237] : memref<288xf32, #tpu.memory_space<smem>>
    %750 = vector.broadcast %749 : f32 to vector<16x16xf32>
    %751 = arith.mulf %750, %724 : vector<16x16xf32>
    %752 = arith.addf %718, %751 : vector<16x16xf32>
    %c273 = arith.constant 273 : index
    %753 = memref.load %arg1[%c273] : memref<288xf32, #tpu.memory_space<smem>>
    %754 = vector.broadcast %753 : f32 to vector<16x16xf32>
    %755 = arith.mulf %754, %724 : vector<16x16xf32>
    %756 = arith.addf %722, %755 : vector<16x16xf32>
    %757 = vector.extract_strided_slice %723 {offsets = [0, 1], sizes = [16, 16], strides = [1, 1]} : vector<16x18xf32> to vector<16x16xf32>
    %c22 = arith.constant 22 : index
    %758 = memref.load %arg1[%c22] : memref<288xf32, #tpu.memory_space<smem>>
    %759 = vector.broadcast %758 : f32 to vector<16x16xf32>
    %760 = arith.mulf %759, %757 : vector<16x16xf32>
    %761 = arith.addf %728, %760 : vector<16x16xf32>
    %c58 = arith.constant 58 : index
    %762 = memref.load %arg1[%c58] : memref<288xf32, #tpu.memory_space<smem>>
    %763 = vector.broadcast %762 : f32 to vector<16x16xf32>
    %764 = arith.mulf %763, %757 : vector<16x16xf32>
    %765 = arith.addf %732, %764 : vector<16x16xf32>
    %c94 = arith.constant 94 : index
    %766 = memref.load %arg1[%c94] : memref<288xf32, #tpu.memory_space<smem>>
    %767 = vector.broadcast %766 : f32 to vector<16x16xf32>
    %768 = arith.mulf %767, %757 : vector<16x16xf32>
    %769 = arith.addf %736, %768 : vector<16x16xf32>
    %c130 = arith.constant 130 : index
    %770 = memref.load %arg1[%c130] : memref<288xf32, #tpu.memory_space<smem>>
    %771 = vector.broadcast %770 : f32 to vector<16x16xf32>
    %772 = arith.mulf %771, %757 : vector<16x16xf32>
    %773 = arith.addf %740, %772 : vector<16x16xf32>
    %c166 = arith.constant 166 : index
    %774 = memref.load %arg1[%c166] : memref<288xf32, #tpu.memory_space<smem>>
    %775 = vector.broadcast %774 : f32 to vector<16x16xf32>
    %776 = arith.mulf %775, %757 : vector<16x16xf32>
    %777 = arith.addf %744, %776 : vector<16x16xf32>
    %c202 = arith.constant 202 : index
    %778 = memref.load %arg1[%c202] : memref<288xf32, #tpu.memory_space<smem>>
    %779 = vector.broadcast %778 : f32 to vector<16x16xf32>
    %780 = arith.mulf %779, %757 : vector<16x16xf32>
    %781 = arith.addf %748, %780 : vector<16x16xf32>
    %c238 = arith.constant 238 : index
    %782 = memref.load %arg1[%c238] : memref<288xf32, #tpu.memory_space<smem>>
    %783 = vector.broadcast %782 : f32 to vector<16x16xf32>
    %784 = arith.mulf %783, %757 : vector<16x16xf32>
    %785 = arith.addf %752, %784 : vector<16x16xf32>
    %c274 = arith.constant 274 : index
    %786 = memref.load %arg1[%c274] : memref<288xf32, #tpu.memory_space<smem>>
    %787 = vector.broadcast %786 : f32 to vector<16x16xf32>
    %788 = arith.mulf %787, %757 : vector<16x16xf32>
    %789 = arith.addf %756, %788 : vector<16x16xf32>
    %790 = vector.extract_strided_slice %723 {offsets = [0, 2], sizes = [16, 16], strides = [1, 1]} : vector<16x18xf32> to vector<16x16xf32>
    %c23 = arith.constant 23 : index
    %791 = memref.load %arg1[%c23] : memref<288xf32, #tpu.memory_space<smem>>
    %792 = vector.broadcast %791 : f32 to vector<16x16xf32>
    %793 = arith.mulf %792, %790 : vector<16x16xf32>
    %794 = arith.addf %761, %793 : vector<16x16xf32>
    %c59 = arith.constant 59 : index
    %795 = memref.load %arg1[%c59] : memref<288xf32, #tpu.memory_space<smem>>
    %796 = vector.broadcast %795 : f32 to vector<16x16xf32>
    %797 = arith.mulf %796, %790 : vector<16x16xf32>
    %798 = arith.addf %765, %797 : vector<16x16xf32>
    %c95 = arith.constant 95 : index
    %799 = memref.load %arg1[%c95] : memref<288xf32, #tpu.memory_space<smem>>
    %800 = vector.broadcast %799 : f32 to vector<16x16xf32>
    %801 = arith.mulf %800, %790 : vector<16x16xf32>
    %802 = arith.addf %769, %801 : vector<16x16xf32>
    %c131 = arith.constant 131 : index
    %803 = memref.load %arg1[%c131] : memref<288xf32, #tpu.memory_space<smem>>
    %804 = vector.broadcast %803 : f32 to vector<16x16xf32>
    %805 = arith.mulf %804, %790 : vector<16x16xf32>
    %806 = arith.addf %773, %805 : vector<16x16xf32>
    %c167 = arith.constant 167 : index
    %807 = memref.load %arg1[%c167] : memref<288xf32, #tpu.memory_space<smem>>
    %808 = vector.broadcast %807 : f32 to vector<16x16xf32>
    %809 = arith.mulf %808, %790 : vector<16x16xf32>
    %810 = arith.addf %777, %809 : vector<16x16xf32>
    %c203 = arith.constant 203 : index
    %811 = memref.load %arg1[%c203] : memref<288xf32, #tpu.memory_space<smem>>
    %812 = vector.broadcast %811 : f32 to vector<16x16xf32>
    %813 = arith.mulf %812, %790 : vector<16x16xf32>
    %814 = arith.addf %781, %813 : vector<16x16xf32>
    %c239 = arith.constant 239 : index
    %815 = memref.load %arg1[%c239] : memref<288xf32, #tpu.memory_space<smem>>
    %816 = vector.broadcast %815 : f32 to vector<16x16xf32>
    %817 = arith.mulf %816, %790 : vector<16x16xf32>
    %818 = arith.addf %785, %817 : vector<16x16xf32>
    %c275 = arith.constant 275 : index
    %819 = memref.load %arg1[%c275] : memref<288xf32, #tpu.memory_space<smem>>
    %820 = vector.broadcast %819 : f32 to vector<16x16xf32>
    %821 = arith.mulf %820, %790 : vector<16x16xf32>
    %822 = arith.addf %789, %821 : vector<16x16xf32>
    %823 = vector.extract_strided_slice %622 {offsets = [2, 0], sizes = [16, 18], strides = [1, 1]} : vector<18x18xf32> to vector<16x18xf32>
    %824 = vector.extract_strided_slice %823 {offsets = [0, 0], sizes = [16, 16], strides = [1, 1]} : vector<16x18xf32> to vector<16x16xf32>
    %c24 = arith.constant 24 : index
    %825 = memref.load %arg1[%c24] : memref<288xf32, #tpu.memory_space<smem>>
    %826 = vector.broadcast %825 : f32 to vector<16x16xf32>
    %827 = arith.mulf %826, %824 : vector<16x16xf32>
    %828 = arith.addf %794, %827 : vector<16x16xf32>
    %c60 = arith.constant 60 : index
    %829 = memref.load %arg1[%c60] : memref<288xf32, #tpu.memory_space<smem>>
    %830 = vector.broadcast %829 : f32 to vector<16x16xf32>
    %831 = arith.mulf %830, %824 : vector<16x16xf32>
    %832 = arith.addf %798, %831 : vector<16x16xf32>
    %c96 = arith.constant 96 : index
    %833 = memref.load %arg1[%c96] : memref<288xf32, #tpu.memory_space<smem>>
    %834 = vector.broadcast %833 : f32 to vector<16x16xf32>
    %835 = arith.mulf %834, %824 : vector<16x16xf32>
    %836 = arith.addf %802, %835 : vector<16x16xf32>
    %c132 = arith.constant 132 : index
    %837 = memref.load %arg1[%c132] : memref<288xf32, #tpu.memory_space<smem>>
    %838 = vector.broadcast %837 : f32 to vector<16x16xf32>
    %839 = arith.mulf %838, %824 : vector<16x16xf32>
    %840 = arith.addf %806, %839 : vector<16x16xf32>
    %c168 = arith.constant 168 : index
    %841 = memref.load %arg1[%c168] : memref<288xf32, #tpu.memory_space<smem>>
    %842 = vector.broadcast %841 : f32 to vector<16x16xf32>
    %843 = arith.mulf %842, %824 : vector<16x16xf32>
    %844 = arith.addf %810, %843 : vector<16x16xf32>
    %c204 = arith.constant 204 : index
    %845 = memref.load %arg1[%c204] : memref<288xf32, #tpu.memory_space<smem>>
    %846 = vector.broadcast %845 : f32 to vector<16x16xf32>
    %847 = arith.mulf %846, %824 : vector<16x16xf32>
    %848 = arith.addf %814, %847 : vector<16x16xf32>
    %c240 = arith.constant 240 : index
    %849 = memref.load %arg1[%c240] : memref<288xf32, #tpu.memory_space<smem>>
    %850 = vector.broadcast %849 : f32 to vector<16x16xf32>
    %851 = arith.mulf %850, %824 : vector<16x16xf32>
    %852 = arith.addf %818, %851 : vector<16x16xf32>
    %c276 = arith.constant 276 : index
    %853 = memref.load %arg1[%c276] : memref<288xf32, #tpu.memory_space<smem>>
    %854 = vector.broadcast %853 : f32 to vector<16x16xf32>
    %855 = arith.mulf %854, %824 : vector<16x16xf32>
    %856 = arith.addf %822, %855 : vector<16x16xf32>
    %857 = vector.extract_strided_slice %823 {offsets = [0, 1], sizes = [16, 16], strides = [1, 1]} : vector<16x18xf32> to vector<16x16xf32>
    %c25 = arith.constant 25 : index
    %858 = memref.load %arg1[%c25] : memref<288xf32, #tpu.memory_space<smem>>
    %859 = vector.broadcast %858 : f32 to vector<16x16xf32>
    %860 = arith.mulf %859, %857 : vector<16x16xf32>
    %861 = arith.addf %828, %860 : vector<16x16xf32>
    %c61 = arith.constant 61 : index
    %862 = memref.load %arg1[%c61] : memref<288xf32, #tpu.memory_space<smem>>
    %863 = vector.broadcast %862 : f32 to vector<16x16xf32>
    %864 = arith.mulf %863, %857 : vector<16x16xf32>
    %865 = arith.addf %832, %864 : vector<16x16xf32>
    %c97 = arith.constant 97 : index
    %866 = memref.load %arg1[%c97] : memref<288xf32, #tpu.memory_space<smem>>
    %867 = vector.broadcast %866 : f32 to vector<16x16xf32>
    %868 = arith.mulf %867, %857 : vector<16x16xf32>
    %869 = arith.addf %836, %868 : vector<16x16xf32>
    %c133 = arith.constant 133 : index
    %870 = memref.load %arg1[%c133] : memref<288xf32, #tpu.memory_space<smem>>
    %871 = vector.broadcast %870 : f32 to vector<16x16xf32>
    %872 = arith.mulf %871, %857 : vector<16x16xf32>
    %873 = arith.addf %840, %872 : vector<16x16xf32>
    %c169 = arith.constant 169 : index
    %874 = memref.load %arg1[%c169] : memref<288xf32, #tpu.memory_space<smem>>
    %875 = vector.broadcast %874 : f32 to vector<16x16xf32>
    %876 = arith.mulf %875, %857 : vector<16x16xf32>
    %877 = arith.addf %844, %876 : vector<16x16xf32>
    %c205 = arith.constant 205 : index
    %878 = memref.load %arg1[%c205] : memref<288xf32, #tpu.memory_space<smem>>
    %879 = vector.broadcast %878 : f32 to vector<16x16xf32>
    %880 = arith.mulf %879, %857 : vector<16x16xf32>
    %881 = arith.addf %848, %880 : vector<16x16xf32>
    %c241 = arith.constant 241 : index
    %882 = memref.load %arg1[%c241] : memref<288xf32, #tpu.memory_space<smem>>
    %883 = vector.broadcast %882 : f32 to vector<16x16xf32>
    %884 = arith.mulf %883, %857 : vector<16x16xf32>
    %885 = arith.addf %852, %884 : vector<16x16xf32>
    %c277 = arith.constant 277 : index
    %886 = memref.load %arg1[%c277] : memref<288xf32, #tpu.memory_space<smem>>
    %887 = vector.broadcast %886 : f32 to vector<16x16xf32>
    %888 = arith.mulf %887, %857 : vector<16x16xf32>
    %889 = arith.addf %856, %888 : vector<16x16xf32>
    %890 = vector.extract_strided_slice %823 {offsets = [0, 2], sizes = [16, 16], strides = [1, 1]} : vector<16x18xf32> to vector<16x16xf32>
    %c26 = arith.constant 26 : index
    %891 = memref.load %arg1[%c26] : memref<288xf32, #tpu.memory_space<smem>>
    %892 = vector.broadcast %891 : f32 to vector<16x16xf32>
    %893 = arith.mulf %892, %890 : vector<16x16xf32>
    %894 = arith.addf %861, %893 : vector<16x16xf32>
    %c62 = arith.constant 62 : index
    %895 = memref.load %arg1[%c62] : memref<288xf32, #tpu.memory_space<smem>>
    %896 = vector.broadcast %895 : f32 to vector<16x16xf32>
    %897 = arith.mulf %896, %890 : vector<16x16xf32>
    %898 = arith.addf %865, %897 : vector<16x16xf32>
    %c98 = arith.constant 98 : index
    %899 = memref.load %arg1[%c98] : memref<288xf32, #tpu.memory_space<smem>>
    %900 = vector.broadcast %899 : f32 to vector<16x16xf32>
    %901 = arith.mulf %900, %890 : vector<16x16xf32>
    %902 = arith.addf %869, %901 : vector<16x16xf32>
    %c134 = arith.constant 134 : index
    %903 = memref.load %arg1[%c134] : memref<288xf32, #tpu.memory_space<smem>>
    %904 = vector.broadcast %903 : f32 to vector<16x16xf32>
    %905 = arith.mulf %904, %890 : vector<16x16xf32>
    %906 = arith.addf %873, %905 : vector<16x16xf32>
    %c170 = arith.constant 170 : index
    %907 = memref.load %arg1[%c170] : memref<288xf32, #tpu.memory_space<smem>>
    %908 = vector.broadcast %907 : f32 to vector<16x16xf32>
    %909 = arith.mulf %908, %890 : vector<16x16xf32>
    %910 = arith.addf %877, %909 : vector<16x16xf32>
    %c206 = arith.constant 206 : index
    %911 = memref.load %arg1[%c206] : memref<288xf32, #tpu.memory_space<smem>>
    %912 = vector.broadcast %911 : f32 to vector<16x16xf32>
    %913 = arith.mulf %912, %890 : vector<16x16xf32>
    %914 = arith.addf %881, %913 : vector<16x16xf32>
    %c242 = arith.constant 242 : index
    %915 = memref.load %arg1[%c242] : memref<288xf32, #tpu.memory_space<smem>>
    %916 = vector.broadcast %915 : f32 to vector<16x16xf32>
    %917 = arith.mulf %916, %890 : vector<16x16xf32>
    %918 = arith.addf %885, %917 : vector<16x16xf32>
    %c278 = arith.constant 278 : index
    %919 = memref.load %arg1[%c278] : memref<288xf32, #tpu.memory_space<smem>>
    %920 = vector.broadcast %919 : f32 to vector<16x16xf32>
    %921 = arith.mulf %920, %890 : vector<16x16xf32>
    %922 = arith.addf %889, %921 : vector<16x16xf32>
    %923 = vector.extract_strided_slice %8 {offsets = [3, 0, 0], sizes = [1, 18, 18], strides = [1, 1, 1]} : vector<4x18x18xf32> to vector<1x18x18xf32>
    %924 = vector.shape_cast %923 : vector<1x18x18xf32> to vector<18x18xf32>
    %925 = vector.extract_strided_slice %924 {offsets = [0, 0], sizes = [16, 18], strides = [1, 1]} : vector<18x18xf32> to vector<16x18xf32>
    %926 = vector.extract_strided_slice %925 {offsets = [0, 0], sizes = [16, 16], strides = [1, 1]} : vector<16x18xf32> to vector<16x16xf32>
    %c27 = arith.constant 27 : index
    %927 = memref.load %arg1[%c27] : memref<288xf32, #tpu.memory_space<smem>>
    %928 = vector.broadcast %927 : f32 to vector<16x16xf32>
    %929 = arith.mulf %928, %926 : vector<16x16xf32>
    %930 = arith.addf %894, %929 : vector<16x16xf32>
    %c63 = arith.constant 63 : index
    %931 = memref.load %arg1[%c63] : memref<288xf32, #tpu.memory_space<smem>>
    %932 = vector.broadcast %931 : f32 to vector<16x16xf32>
    %933 = arith.mulf %932, %926 : vector<16x16xf32>
    %934 = arith.addf %898, %933 : vector<16x16xf32>
    %c99 = arith.constant 99 : index
    %935 = memref.load %arg1[%c99] : memref<288xf32, #tpu.memory_space<smem>>
    %936 = vector.broadcast %935 : f32 to vector<16x16xf32>
    %937 = arith.mulf %936, %926 : vector<16x16xf32>
    %938 = arith.addf %902, %937 : vector<16x16xf32>
    %c135 = arith.constant 135 : index
    %939 = memref.load %arg1[%c135] : memref<288xf32, #tpu.memory_space<smem>>
    %940 = vector.broadcast %939 : f32 to vector<16x16xf32>
    %941 = arith.mulf %940, %926 : vector<16x16xf32>
    %942 = arith.addf %906, %941 : vector<16x16xf32>
    %c171 = arith.constant 171 : index
    %943 = memref.load %arg1[%c171] : memref<288xf32, #tpu.memory_space<smem>>
    %944 = vector.broadcast %943 : f32 to vector<16x16xf32>
    %945 = arith.mulf %944, %926 : vector<16x16xf32>
    %946 = arith.addf %910, %945 : vector<16x16xf32>
    %c207 = arith.constant 207 : index
    %947 = memref.load %arg1[%c207] : memref<288xf32, #tpu.memory_space<smem>>
    %948 = vector.broadcast %947 : f32 to vector<16x16xf32>
    %949 = arith.mulf %948, %926 : vector<16x16xf32>
    %950 = arith.addf %914, %949 : vector<16x16xf32>
    %c243 = arith.constant 243 : index
    %951 = memref.load %arg1[%c243] : memref<288xf32, #tpu.memory_space<smem>>
    %952 = vector.broadcast %951 : f32 to vector<16x16xf32>
    %953 = arith.mulf %952, %926 : vector<16x16xf32>
    %954 = arith.addf %918, %953 : vector<16x16xf32>
    %c279 = arith.constant 279 : index
    %955 = memref.load %arg1[%c279] : memref<288xf32, #tpu.memory_space<smem>>
    %956 = vector.broadcast %955 : f32 to vector<16x16xf32>
    %957 = arith.mulf %956, %926 : vector<16x16xf32>
    %958 = arith.addf %922, %957 : vector<16x16xf32>
    %959 = vector.extract_strided_slice %925 {offsets = [0, 1], sizes = [16, 16], strides = [1, 1]} : vector<16x18xf32> to vector<16x16xf32>
    %c28 = arith.constant 28 : index
    %960 = memref.load %arg1[%c28] : memref<288xf32, #tpu.memory_space<smem>>
    %961 = vector.broadcast %960 : f32 to vector<16x16xf32>
    %962 = arith.mulf %961, %959 : vector<16x16xf32>
    %963 = arith.addf %930, %962 : vector<16x16xf32>
    %c64 = arith.constant 64 : index
    %964 = memref.load %arg1[%c64] : memref<288xf32, #tpu.memory_space<smem>>
    %965 = vector.broadcast %964 : f32 to vector<16x16xf32>
    %966 = arith.mulf %965, %959 : vector<16x16xf32>
    %967 = arith.addf %934, %966 : vector<16x16xf32>
    %c100 = arith.constant 100 : index
    %968 = memref.load %arg1[%c100] : memref<288xf32, #tpu.memory_space<smem>>
    %969 = vector.broadcast %968 : f32 to vector<16x16xf32>
    %970 = arith.mulf %969, %959 : vector<16x16xf32>
    %971 = arith.addf %938, %970 : vector<16x16xf32>
    %c136 = arith.constant 136 : index
    %972 = memref.load %arg1[%c136] : memref<288xf32, #tpu.memory_space<smem>>
    %973 = vector.broadcast %972 : f32 to vector<16x16xf32>
    %974 = arith.mulf %973, %959 : vector<16x16xf32>
    %975 = arith.addf %942, %974 : vector<16x16xf32>
    %c172 = arith.constant 172 : index
    %976 = memref.load %arg1[%c172] : memref<288xf32, #tpu.memory_space<smem>>
    %977 = vector.broadcast %976 : f32 to vector<16x16xf32>
    %978 = arith.mulf %977, %959 : vector<16x16xf32>
    %979 = arith.addf %946, %978 : vector<16x16xf32>
    %c208 = arith.constant 208 : index
    %980 = memref.load %arg1[%c208] : memref<288xf32, #tpu.memory_space<smem>>
    %981 = vector.broadcast %980 : f32 to vector<16x16xf32>
    %982 = arith.mulf %981, %959 : vector<16x16xf32>
    %983 = arith.addf %950, %982 : vector<16x16xf32>
    %c244 = arith.constant 244 : index
    %984 = memref.load %arg1[%c244] : memref<288xf32, #tpu.memory_space<smem>>
    %985 = vector.broadcast %984 : f32 to vector<16x16xf32>
    %986 = arith.mulf %985, %959 : vector<16x16xf32>
    %987 = arith.addf %954, %986 : vector<16x16xf32>
    %c280 = arith.constant 280 : index
    %988 = memref.load %arg1[%c280] : memref<288xf32, #tpu.memory_space<smem>>
    %989 = vector.broadcast %988 : f32 to vector<16x16xf32>
    %990 = arith.mulf %989, %959 : vector<16x16xf32>
    %991 = arith.addf %958, %990 : vector<16x16xf32>
    %992 = vector.extract_strided_slice %925 {offsets = [0, 2], sizes = [16, 16], strides = [1, 1]} : vector<16x18xf32> to vector<16x16xf32>
    %c29 = arith.constant 29 : index
    %993 = memref.load %arg1[%c29] : memref<288xf32, #tpu.memory_space<smem>>
    %994 = vector.broadcast %993 : f32 to vector<16x16xf32>
    %995 = arith.mulf %994, %992 : vector<16x16xf32>
    %996 = arith.addf %963, %995 : vector<16x16xf32>
    %c65 = arith.constant 65 : index
    %997 = memref.load %arg1[%c65] : memref<288xf32, #tpu.memory_space<smem>>
    %998 = vector.broadcast %997 : f32 to vector<16x16xf32>
    %999 = arith.mulf %998, %992 : vector<16x16xf32>
    %1000 = arith.addf %967, %999 : vector<16x16xf32>
    %c101 = arith.constant 101 : index
    %1001 = memref.load %arg1[%c101] : memref<288xf32, #tpu.memory_space<smem>>
    %1002 = vector.broadcast %1001 : f32 to vector<16x16xf32>
    %1003 = arith.mulf %1002, %992 : vector<16x16xf32>
    %1004 = arith.addf %971, %1003 : vector<16x16xf32>
    %c137 = arith.constant 137 : index
    %1005 = memref.load %arg1[%c137] : memref<288xf32, #tpu.memory_space<smem>>
    %1006 = vector.broadcast %1005 : f32 to vector<16x16xf32>
    %1007 = arith.mulf %1006, %992 : vector<16x16xf32>
    %1008 = arith.addf %975, %1007 : vector<16x16xf32>
    %c173 = arith.constant 173 : index
    %1009 = memref.load %arg1[%c173] : memref<288xf32, #tpu.memory_space<smem>>
    %1010 = vector.broadcast %1009 : f32 to vector<16x16xf32>
    %1011 = arith.mulf %1010, %992 : vector<16x16xf32>
    %1012 = arith.addf %979, %1011 : vector<16x16xf32>
    %c209 = arith.constant 209 : index
    %1013 = memref.load %arg1[%c209] : memref<288xf32, #tpu.memory_space<smem>>
    %1014 = vector.broadcast %1013 : f32 to vector<16x16xf32>
    %1015 = arith.mulf %1014, %992 : vector<16x16xf32>
    %1016 = arith.addf %983, %1015 : vector<16x16xf32>
    %c245 = arith.constant 245 : index
    %1017 = memref.load %arg1[%c245] : memref<288xf32, #tpu.memory_space<smem>>
    %1018 = vector.broadcast %1017 : f32 to vector<16x16xf32>
    %1019 = arith.mulf %1018, %992 : vector<16x16xf32>
    %1020 = arith.addf %987, %1019 : vector<16x16xf32>
    %c281 = arith.constant 281 : index
    %1021 = memref.load %arg1[%c281] : memref<288xf32, #tpu.memory_space<smem>>
    %1022 = vector.broadcast %1021 : f32 to vector<16x16xf32>
    %1023 = arith.mulf %1022, %992 : vector<16x16xf32>
    %1024 = arith.addf %991, %1023 : vector<16x16xf32>
    %1025 = vector.extract_strided_slice %924 {offsets = [1, 0], sizes = [16, 18], strides = [1, 1]} : vector<18x18xf32> to vector<16x18xf32>
    %1026 = vector.extract_strided_slice %1025 {offsets = [0, 0], sizes = [16, 16], strides = [1, 1]} : vector<16x18xf32> to vector<16x16xf32>
    %c30 = arith.constant 30 : index
    %1027 = memref.load %arg1[%c30] : memref<288xf32, #tpu.memory_space<smem>>
    %1028 = vector.broadcast %1027 : f32 to vector<16x16xf32>
    %1029 = arith.mulf %1028, %1026 : vector<16x16xf32>
    %1030 = arith.addf %996, %1029 : vector<16x16xf32>
    %c66 = arith.constant 66 : index
    %1031 = memref.load %arg1[%c66] : memref<288xf32, #tpu.memory_space<smem>>
    %1032 = vector.broadcast %1031 : f32 to vector<16x16xf32>
    %1033 = arith.mulf %1032, %1026 : vector<16x16xf32>
    %1034 = arith.addf %1000, %1033 : vector<16x16xf32>
    %c102 = arith.constant 102 : index
    %1035 = memref.load %arg1[%c102] : memref<288xf32, #tpu.memory_space<smem>>
    %1036 = vector.broadcast %1035 : f32 to vector<16x16xf32>
    %1037 = arith.mulf %1036, %1026 : vector<16x16xf32>
    %1038 = arith.addf %1004, %1037 : vector<16x16xf32>
    %c138 = arith.constant 138 : index
    %1039 = memref.load %arg1[%c138] : memref<288xf32, #tpu.memory_space<smem>>
    %1040 = vector.broadcast %1039 : f32 to vector<16x16xf32>
    %1041 = arith.mulf %1040, %1026 : vector<16x16xf32>
    %1042 = arith.addf %1008, %1041 : vector<16x16xf32>
    %c174 = arith.constant 174 : index
    %1043 = memref.load %arg1[%c174] : memref<288xf32, #tpu.memory_space<smem>>
    %1044 = vector.broadcast %1043 : f32 to vector<16x16xf32>
    %1045 = arith.mulf %1044, %1026 : vector<16x16xf32>
    %1046 = arith.addf %1012, %1045 : vector<16x16xf32>
    %c210 = arith.constant 210 : index
    %1047 = memref.load %arg1[%c210] : memref<288xf32, #tpu.memory_space<smem>>
    %1048 = vector.broadcast %1047 : f32 to vector<16x16xf32>
    %1049 = arith.mulf %1048, %1026 : vector<16x16xf32>
    %1050 = arith.addf %1016, %1049 : vector<16x16xf32>
    %c246 = arith.constant 246 : index
    %1051 = memref.load %arg1[%c246] : memref<288xf32, #tpu.memory_space<smem>>
    %1052 = vector.broadcast %1051 : f32 to vector<16x16xf32>
    %1053 = arith.mulf %1052, %1026 : vector<16x16xf32>
    %1054 = arith.addf %1020, %1053 : vector<16x16xf32>
    %c282 = arith.constant 282 : index
    %1055 = memref.load %arg1[%c282] : memref<288xf32, #tpu.memory_space<smem>>
    %1056 = vector.broadcast %1055 : f32 to vector<16x16xf32>
    %1057 = arith.mulf %1056, %1026 : vector<16x16xf32>
    %1058 = arith.addf %1024, %1057 : vector<16x16xf32>
    %1059 = vector.extract_strided_slice %1025 {offsets = [0, 1], sizes = [16, 16], strides = [1, 1]} : vector<16x18xf32> to vector<16x16xf32>
    %c31 = arith.constant 31 : index
    %1060 = memref.load %arg1[%c31] : memref<288xf32, #tpu.memory_space<smem>>
    %1061 = vector.broadcast %1060 : f32 to vector<16x16xf32>
    %1062 = arith.mulf %1061, %1059 : vector<16x16xf32>
    %1063 = arith.addf %1030, %1062 : vector<16x16xf32>
    %c67 = arith.constant 67 : index
    %1064 = memref.load %arg1[%c67] : memref<288xf32, #tpu.memory_space<smem>>
    %1065 = vector.broadcast %1064 : f32 to vector<16x16xf32>
    %1066 = arith.mulf %1065, %1059 : vector<16x16xf32>
    %1067 = arith.addf %1034, %1066 : vector<16x16xf32>
    %c103 = arith.constant 103 : index
    %1068 = memref.load %arg1[%c103] : memref<288xf32, #tpu.memory_space<smem>>
    %1069 = vector.broadcast %1068 : f32 to vector<16x16xf32>
    %1070 = arith.mulf %1069, %1059 : vector<16x16xf32>
    %1071 = arith.addf %1038, %1070 : vector<16x16xf32>
    %c139 = arith.constant 139 : index
    %1072 = memref.load %arg1[%c139] : memref<288xf32, #tpu.memory_space<smem>>
    %1073 = vector.broadcast %1072 : f32 to vector<16x16xf32>
    %1074 = arith.mulf %1073, %1059 : vector<16x16xf32>
    %1075 = arith.addf %1042, %1074 : vector<16x16xf32>
    %c175 = arith.constant 175 : index
    %1076 = memref.load %arg1[%c175] : memref<288xf32, #tpu.memory_space<smem>>
    %1077 = vector.broadcast %1076 : f32 to vector<16x16xf32>
    %1078 = arith.mulf %1077, %1059 : vector<16x16xf32>
    %1079 = arith.addf %1046, %1078 : vector<16x16xf32>
    %c211 = arith.constant 211 : index
    %1080 = memref.load %arg1[%c211] : memref<288xf32, #tpu.memory_space<smem>>
    %1081 = vector.broadcast %1080 : f32 to vector<16x16xf32>
    %1082 = arith.mulf %1081, %1059 : vector<16x16xf32>
    %1083 = arith.addf %1050, %1082 : vector<16x16xf32>
    %c247 = arith.constant 247 : index
    %1084 = memref.load %arg1[%c247] : memref<288xf32, #tpu.memory_space<smem>>
    %1085 = vector.broadcast %1084 : f32 to vector<16x16xf32>
    %1086 = arith.mulf %1085, %1059 : vector<16x16xf32>
    %1087 = arith.addf %1054, %1086 : vector<16x16xf32>
    %c283 = arith.constant 283 : index
    %1088 = memref.load %arg1[%c283] : memref<288xf32, #tpu.memory_space<smem>>
    %1089 = vector.broadcast %1088 : f32 to vector<16x16xf32>
    %1090 = arith.mulf %1089, %1059 : vector<16x16xf32>
    %1091 = arith.addf %1058, %1090 : vector<16x16xf32>
    %1092 = vector.extract_strided_slice %1025 {offsets = [0, 2], sizes = [16, 16], strides = [1, 1]} : vector<16x18xf32> to vector<16x16xf32>
    %c32 = arith.constant 32 : index
    %1093 = memref.load %arg1[%c32] : memref<288xf32, #tpu.memory_space<smem>>
    %1094 = vector.broadcast %1093 : f32 to vector<16x16xf32>
    %1095 = arith.mulf %1094, %1092 : vector<16x16xf32>
    %1096 = arith.addf %1063, %1095 : vector<16x16xf32>
    %c68 = arith.constant 68 : index
    %1097 = memref.load %arg1[%c68] : memref<288xf32, #tpu.memory_space<smem>>
    %1098 = vector.broadcast %1097 : f32 to vector<16x16xf32>
    %1099 = arith.mulf %1098, %1092 : vector<16x16xf32>
    %1100 = arith.addf %1067, %1099 : vector<16x16xf32>
    %c104 = arith.constant 104 : index
    %1101 = memref.load %arg1[%c104] : memref<288xf32, #tpu.memory_space<smem>>
    %1102 = vector.broadcast %1101 : f32 to vector<16x16xf32>
    %1103 = arith.mulf %1102, %1092 : vector<16x16xf32>
    %1104 = arith.addf %1071, %1103 : vector<16x16xf32>
    %c140 = arith.constant 140 : index
    %1105 = memref.load %arg1[%c140] : memref<288xf32, #tpu.memory_space<smem>>
    %1106 = vector.broadcast %1105 : f32 to vector<16x16xf32>
    %1107 = arith.mulf %1106, %1092 : vector<16x16xf32>
    %1108 = arith.addf %1075, %1107 : vector<16x16xf32>
    %c176 = arith.constant 176 : index
    %1109 = memref.load %arg1[%c176] : memref<288xf32, #tpu.memory_space<smem>>
    %1110 = vector.broadcast %1109 : f32 to vector<16x16xf32>
    %1111 = arith.mulf %1110, %1092 : vector<16x16xf32>
    %1112 = arith.addf %1079, %1111 : vector<16x16xf32>
    %c212 = arith.constant 212 : index
    %1113 = memref.load %arg1[%c212] : memref<288xf32, #tpu.memory_space<smem>>
    %1114 = vector.broadcast %1113 : f32 to vector<16x16xf32>
    %1115 = arith.mulf %1114, %1092 : vector<16x16xf32>
    %1116 = arith.addf %1083, %1115 : vector<16x16xf32>
    %c248 = arith.constant 248 : index
    %1117 = memref.load %arg1[%c248] : memref<288xf32, #tpu.memory_space<smem>>
    %1118 = vector.broadcast %1117 : f32 to vector<16x16xf32>
    %1119 = arith.mulf %1118, %1092 : vector<16x16xf32>
    %1120 = arith.addf %1087, %1119 : vector<16x16xf32>
    %c284 = arith.constant 284 : index
    %1121 = memref.load %arg1[%c284] : memref<288xf32, #tpu.memory_space<smem>>
    %1122 = vector.broadcast %1121 : f32 to vector<16x16xf32>
    %1123 = arith.mulf %1122, %1092 : vector<16x16xf32>
    %1124 = arith.addf %1091, %1123 : vector<16x16xf32>
    %1125 = vector.extract_strided_slice %924 {offsets = [2, 0], sizes = [16, 18], strides = [1, 1]} : vector<18x18xf32> to vector<16x18xf32>
    %1126 = vector.extract_strided_slice %1125 {offsets = [0, 0], sizes = [16, 16], strides = [1, 1]} : vector<16x18xf32> to vector<16x16xf32>
    %c33 = arith.constant 33 : index
    %1127 = memref.load %arg1[%c33] : memref<288xf32, #tpu.memory_space<smem>>
    %1128 = vector.broadcast %1127 : f32 to vector<16x16xf32>
    %1129 = arith.mulf %1128, %1126 : vector<16x16xf32>
    %1130 = arith.addf %1096, %1129 : vector<16x16xf32>
    %c69 = arith.constant 69 : index
    %1131 = memref.load %arg1[%c69] : memref<288xf32, #tpu.memory_space<smem>>
    %1132 = vector.broadcast %1131 : f32 to vector<16x16xf32>
    %1133 = arith.mulf %1132, %1126 : vector<16x16xf32>
    %1134 = arith.addf %1100, %1133 : vector<16x16xf32>
    %c105 = arith.constant 105 : index
    %1135 = memref.load %arg1[%c105] : memref<288xf32, #tpu.memory_space<smem>>
    %1136 = vector.broadcast %1135 : f32 to vector<16x16xf32>
    %1137 = arith.mulf %1136, %1126 : vector<16x16xf32>
    %1138 = arith.addf %1104, %1137 : vector<16x16xf32>
    %c141 = arith.constant 141 : index
    %1139 = memref.load %arg1[%c141] : memref<288xf32, #tpu.memory_space<smem>>
    %1140 = vector.broadcast %1139 : f32 to vector<16x16xf32>
    %1141 = arith.mulf %1140, %1126 : vector<16x16xf32>
    %1142 = arith.addf %1108, %1141 : vector<16x16xf32>
    %c177 = arith.constant 177 : index
    %1143 = memref.load %arg1[%c177] : memref<288xf32, #tpu.memory_space<smem>>
    %1144 = vector.broadcast %1143 : f32 to vector<16x16xf32>
    %1145 = arith.mulf %1144, %1126 : vector<16x16xf32>
    %1146 = arith.addf %1112, %1145 : vector<16x16xf32>
    %c213 = arith.constant 213 : index
    %1147 = memref.load %arg1[%c213] : memref<288xf32, #tpu.memory_space<smem>>
    %1148 = vector.broadcast %1147 : f32 to vector<16x16xf32>
    %1149 = arith.mulf %1148, %1126 : vector<16x16xf32>
    %1150 = arith.addf %1116, %1149 : vector<16x16xf32>
    %c249 = arith.constant 249 : index
    %1151 = memref.load %arg1[%c249] : memref<288xf32, #tpu.memory_space<smem>>
    %1152 = vector.broadcast %1151 : f32 to vector<16x16xf32>
    %1153 = arith.mulf %1152, %1126 : vector<16x16xf32>
    %1154 = arith.addf %1120, %1153 : vector<16x16xf32>
    %c285 = arith.constant 285 : index
    %1155 = memref.load %arg1[%c285] : memref<288xf32, #tpu.memory_space<smem>>
    %1156 = vector.broadcast %1155 : f32 to vector<16x16xf32>
    %1157 = arith.mulf %1156, %1126 : vector<16x16xf32>
    %1158 = arith.addf %1124, %1157 : vector<16x16xf32>
    %1159 = vector.extract_strided_slice %1125 {offsets = [0, 1], sizes = [16, 16], strides = [1, 1]} : vector<16x18xf32> to vector<16x16xf32>
    %c34 = arith.constant 34 : index
    %1160 = memref.load %arg1[%c34] : memref<288xf32, #tpu.memory_space<smem>>
    %1161 = vector.broadcast %1160 : f32 to vector<16x16xf32>
    %1162 = arith.mulf %1161, %1159 : vector<16x16xf32>
    %1163 = arith.addf %1130, %1162 : vector<16x16xf32>
    %c70 = arith.constant 70 : index
    %1164 = memref.load %arg1[%c70] : memref<288xf32, #tpu.memory_space<smem>>
    %1165 = vector.broadcast %1164 : f32 to vector<16x16xf32>
    %1166 = arith.mulf %1165, %1159 : vector<16x16xf32>
    %1167 = arith.addf %1134, %1166 : vector<16x16xf32>
    %c106 = arith.constant 106 : index
    %1168 = memref.load %arg1[%c106] : memref<288xf32, #tpu.memory_space<smem>>
    %1169 = vector.broadcast %1168 : f32 to vector<16x16xf32>
    %1170 = arith.mulf %1169, %1159 : vector<16x16xf32>
    %1171 = arith.addf %1138, %1170 : vector<16x16xf32>
    %c142 = arith.constant 142 : index
    %1172 = memref.load %arg1[%c142] : memref<288xf32, #tpu.memory_space<smem>>
    %1173 = vector.broadcast %1172 : f32 to vector<16x16xf32>
    %1174 = arith.mulf %1173, %1159 : vector<16x16xf32>
    %1175 = arith.addf %1142, %1174 : vector<16x16xf32>
    %c178 = arith.constant 178 : index
    %1176 = memref.load %arg1[%c178] : memref<288xf32, #tpu.memory_space<smem>>
    %1177 = vector.broadcast %1176 : f32 to vector<16x16xf32>
    %1178 = arith.mulf %1177, %1159 : vector<16x16xf32>
    %1179 = arith.addf %1146, %1178 : vector<16x16xf32>
    %c214 = arith.constant 214 : index
    %1180 = memref.load %arg1[%c214] : memref<288xf32, #tpu.memory_space<smem>>
    %1181 = vector.broadcast %1180 : f32 to vector<16x16xf32>
    %1182 = arith.mulf %1181, %1159 : vector<16x16xf32>
    %1183 = arith.addf %1150, %1182 : vector<16x16xf32>
    %c250 = arith.constant 250 : index
    %1184 = memref.load %arg1[%c250] : memref<288xf32, #tpu.memory_space<smem>>
    %1185 = vector.broadcast %1184 : f32 to vector<16x16xf32>
    %1186 = arith.mulf %1185, %1159 : vector<16x16xf32>
    %1187 = arith.addf %1154, %1186 : vector<16x16xf32>
    %c286 = arith.constant 286 : index
    %1188 = memref.load %arg1[%c286] : memref<288xf32, #tpu.memory_space<smem>>
    %1189 = vector.broadcast %1188 : f32 to vector<16x16xf32>
    %1190 = arith.mulf %1189, %1159 : vector<16x16xf32>
    %1191 = arith.addf %1158, %1190 : vector<16x16xf32>
    %1192 = vector.extract_strided_slice %1125 {offsets = [0, 2], sizes = [16, 16], strides = [1, 1]} : vector<16x18xf32> to vector<16x16xf32>
    %c35 = arith.constant 35 : index
    %1193 = memref.load %arg1[%c35] : memref<288xf32, #tpu.memory_space<smem>>
    %1194 = vector.broadcast %1193 : f32 to vector<16x16xf32>
    %1195 = arith.mulf %1194, %1192 : vector<16x16xf32>
    %1196 = arith.addf %1163, %1195 : vector<16x16xf32>
    %c71 = arith.constant 71 : index
    %1197 = memref.load %arg1[%c71] : memref<288xf32, #tpu.memory_space<smem>>
    %1198 = vector.broadcast %1197 : f32 to vector<16x16xf32>
    %1199 = arith.mulf %1198, %1192 : vector<16x16xf32>
    %1200 = arith.addf %1167, %1199 : vector<16x16xf32>
    %c107 = arith.constant 107 : index
    %1201 = memref.load %arg1[%c107] : memref<288xf32, #tpu.memory_space<smem>>
    %1202 = vector.broadcast %1201 : f32 to vector<16x16xf32>
    %1203 = arith.mulf %1202, %1192 : vector<16x16xf32>
    %1204 = arith.addf %1171, %1203 : vector<16x16xf32>
    %c143 = arith.constant 143 : index
    %1205 = memref.load %arg1[%c143] : memref<288xf32, #tpu.memory_space<smem>>
    %1206 = vector.broadcast %1205 : f32 to vector<16x16xf32>
    %1207 = arith.mulf %1206, %1192 : vector<16x16xf32>
    %1208 = arith.addf %1175, %1207 : vector<16x16xf32>
    %c179 = arith.constant 179 : index
    %1209 = memref.load %arg1[%c179] : memref<288xf32, #tpu.memory_space<smem>>
    %1210 = vector.broadcast %1209 : f32 to vector<16x16xf32>
    %1211 = arith.mulf %1210, %1192 : vector<16x16xf32>
    %1212 = arith.addf %1179, %1211 : vector<16x16xf32>
    %c215 = arith.constant 215 : index
    %1213 = memref.load %arg1[%c215] : memref<288xf32, #tpu.memory_space<smem>>
    %1214 = vector.broadcast %1213 : f32 to vector<16x16xf32>
    %1215 = arith.mulf %1214, %1192 : vector<16x16xf32>
    %1216 = arith.addf %1183, %1215 : vector<16x16xf32>
    %c251 = arith.constant 251 : index
    %1217 = memref.load %arg1[%c251] : memref<288xf32, #tpu.memory_space<smem>>
    %1218 = vector.broadcast %1217 : f32 to vector<16x16xf32>
    %1219 = arith.mulf %1218, %1192 : vector<16x16xf32>
    %1220 = arith.addf %1187, %1219 : vector<16x16xf32>
    %c287 = arith.constant 287 : index
    %1221 = memref.load %arg1[%c287] : memref<288xf32, #tpu.memory_space<smem>>
    %1222 = vector.broadcast %1221 : f32 to vector<16x16xf32>
    %1223 = arith.mulf %1222, %1192 : vector<16x16xf32>
    %1224 = arith.addf %1191, %1223 : vector<16x16xf32>
    %c0_25 = arith.constant 0 : index
    %1225 = memref.load %arg2[%c0_25] : memref<8xf32, #tpu.memory_space<smem>>
    %1226 = vector.broadcast %1225 : f32 to vector<16x16xf32>
    %1227 = arith.addf %1196, %1226 : vector<16x16xf32>
    %cst_26 = arith.constant 0.000000e+00 : f32
    %1228 = vector.broadcast %cst_26 : f32 to vector<16x16xf32>
    %1229 = arith.maximumf %1227, %1228 : vector<16x16xf32>
    %c0_27 = arith.constant 0 : index
    %c4_28 = arith.constant 4 : index
    %c0_29 = arith.constant 0 : index
    %c0_30 = arith.constant 0 : index
    %1230 = vector.load %arg4[%c0_27, %c4_28, %c0_29, %c0_30] : memref<1x12x16x16xf32, #tpu.memory_space<vmem>>, vector<1x1x16x16xf32>
    %1231 = vector.shape_cast %1230 : vector<1x1x16x16xf32> to vector<16x16xf32>
    %1232 = vector.shape_cast %1229 : vector<16x16xf32> to vector<1x1x16x16xf32>
    tpu.vector_store %arg4[%c0_27, %c4_28, %c0_29, %c0_30], %1232 {strides = array<i32>} : memref<1x12x16x16xf32, #tpu.memory_space<vmem>>, vector<1x1x16x16xf32>,
    %c1_31 = arith.constant 1 : index
    %1233 = memref.load %arg2[%c1_31] : memref<8xf32, #tpu.memory_space<smem>>
    %1234 = vector.broadcast %1233 : f32 to vector<16x16xf32>
    %1235 = arith.addf %1200, %1234 : vector<16x16xf32>
    %cst_32 = arith.constant 0.000000e+00 : f32
    %1236 = vector.broadcast %cst_32 : f32 to vector<16x16xf32>
    %1237 = arith.maximumf %1235, %1236 : vector<16x16xf32>
    %c0_33 = arith.constant 0 : index
    %c5_34 = arith.constant 5 : index
    %c0_35 = arith.constant 0 : index
    %c0_36 = arith.constant 0 : index
    %1238 = vector.load %arg4[%c0_33, %c5_34, %c0_35, %c0_36] : memref<1x12x16x16xf32, #tpu.memory_space<vmem>>, vector<1x1x16x16xf32>
    %1239 = vector.shape_cast %1238 : vector<1x1x16x16xf32> to vector<16x16xf32>
    %1240 = vector.shape_cast %1237 : vector<16x16xf32> to vector<1x1x16x16xf32>
    tpu.vector_store %arg4[%c0_33, %c5_34, %c0_35, %c0_36], %1240 {strides = array<i32>} : memref<1x12x16x16xf32, #tpu.memory_space<vmem>>, vector<1x1x16x16xf32>,
    %c2_37 = arith.constant 2 : index
    %1241 = memref.load %arg2[%c2_37] : memref<8xf32, #tpu.memory_space<smem>>
    %1242 = vector.broadcast %1241 : f32 to vector<16x16xf32>
    %1243 = arith.addf %1204, %1242 : vector<16x16xf32>
    %cst_38 = arith.constant 0.000000e+00 : f32
    %1244 = vector.broadcast %cst_38 : f32 to vector<16x16xf32>
    %1245 = arith.maximumf %1243, %1244 : vector<16x16xf32>
    %c0_39 = arith.constant 0 : index
    %c6_40 = arith.constant 6 : index
    %c0_41 = arith.constant 0 : index
    %c0_42 = arith.constant 0 : index
    %1246 = vector.load %arg4[%c0_39, %c6_40, %c0_41, %c0_42] : memref<1x12x16x16xf32, #tpu.memory_space<vmem>>, vector<1x1x16x16xf32>
    %1247 = vector.shape_cast %1246 : vector<1x1x16x16xf32> to vector<16x16xf32>
    %1248 = vector.shape_cast %1245 : vector<16x16xf32> to vector<1x1x16x16xf32>
    tpu.vector_store %arg4[%c0_39, %c6_40, %c0_41, %c0_42], %1248 {strides = array<i32>} : memref<1x12x16x16xf32, #tpu.memory_space<vmem>>, vector<1x1x16x16xf32>,
    %c3_43 = arith.constant 3 : index
    %1249 = memref.load %arg2[%c3_43] : memref<8xf32, #tpu.memory_space<smem>>
    %1250 = vector.broadcast %1249 : f32 to vector<16x16xf32>
    %1251 = arith.addf %1208, %1250 : vector<16x16xf32>
    %cst_44 = arith.constant 0.000000e+00 : f32
    %1252 = vector.broadcast %cst_44 : f32 to vector<16x16xf32>
    %1253 = arith.maximumf %1251, %1252 : vector<16x16xf32>
    %c0_45 = arith.constant 0 : index
    %c7_46 = arith.constant 7 : index
    %c0_47 = arith.constant 0 : index
    %c0_48 = arith.constant 0 : index
    %1254 = vector.load %arg4[%c0_45, %c7_46, %c0_47, %c0_48] : memref<1x12x16x16xf32, #tpu.memory_space<vmem>>, vector<1x1x16x16xf32>
    %1255 = vector.shape_cast %1254 : vector<1x1x16x16xf32> to vector<16x16xf32>
    %1256 = vector.shape_cast %1253 : vector<16x16xf32> to vector<1x1x16x16xf32>
    tpu.vector_store %arg4[%c0_45, %c7_46, %c0_47, %c0_48], %1256 {strides = array<i32>} : memref<1x12x16x16xf32, #tpu.memory_space<vmem>>, vector<1x1x16x16xf32>,
    %c4_49 = arith.constant 4 : index
    %1257 = memref.load %arg2[%c4_49] : memref<8xf32, #tpu.memory_space<smem>>
    %1258 = vector.broadcast %1257 : f32 to vector<16x16xf32>
    %1259 = arith.addf %1212, %1258 : vector<16x16xf32>
    %cst_50 = arith.constant 0.000000e+00 : f32
    %1260 = vector.broadcast %cst_50 : f32 to vector<16x16xf32>
    %1261 = arith.maximumf %1259, %1260 : vector<16x16xf32>
    %c0_51 = arith.constant 0 : index
    %c8_52 = arith.constant 8 : index
    %c0_53 = arith.constant 0 : index
    %c0_54 = arith.constant 0 : index
    %1262 = vector.load %arg4[%c0_51, %c8_52, %c0_53, %c0_54] : memref<1x12x16x16xf32, #tpu.memory_space<vmem>>, vector<1x1x16x16xf32>
    %1263 = vector.shape_cast %1262 : vector<1x1x16x16xf32> to vector<16x16xf32>
    %1264 = vector.shape_cast %1261 : vector<16x16xf32> to vector<1x1x16x16xf32>
    tpu.vector_store %arg4[%c0_51, %c8_52, %c0_53, %c0_54], %1264 {strides = array<i32>} : memref<1x12x16x16xf32, #tpu.memory_space<vmem>>, vector<1x1x16x16xf32>,
    %c5_55 = arith.constant 5 : index
    %1265 = memref.load %arg2[%c5_55] : memref<8xf32, #tpu.memory_space<smem>>
    %1266 = vector.broadcast %1265 : f32 to vector<16x16xf32>
    %1267 = arith.addf %1216, %1266 : vector<16x16xf32>
    %cst_56 = arith.constant 0.000000e+00 : f32
    %1268 = vector.broadcast %cst_56 : f32 to vector<16x16xf32>
    %1269 = arith.maximumf %1267, %1268 : vector<16x16xf32>
    %c0_57 = arith.constant 0 : index
    %c9_58 = arith.constant 9 : index
    %c0_59 = arith.constant 0 : index
    %c0_60 = arith.constant 0 : index
    %1270 = vector.load %arg4[%c0_57, %c9_58, %c0_59, %c0_60] : memref<1x12x16x16xf32, #tpu.memory_space<vmem>>, vector<1x1x16x16xf32>
    %1271 = vector.shape_cast %1270 : vector<1x1x16x16xf32> to vector<16x16xf32>
    %1272 = vector.shape_cast %1269 : vector<16x16xf32> to vector<1x1x16x16xf32>
    tpu.vector_store %arg4[%c0_57, %c9_58, %c0_59, %c0_60], %1272 {strides = array<i32>} : memref<1x12x16x16xf32, #tpu.memory_space<vmem>>, vector<1x1x16x16xf32>,
    %c6_61 = arith.constant 6 : index
    %1273 = memref.load %arg2[%c6_61] : memref<8xf32, #tpu.memory_space<smem>>
    %1274 = vector.broadcast %1273 : f32 to vector<16x16xf32>
    %1275 = arith.addf %1220, %1274 : vector<16x16xf32>
    %cst_62 = arith.constant 0.000000e+00 : f32
    %1276 = vector.broadcast %cst_62 : f32 to vector<16x16xf32>
    %1277 = arith.maximumf %1275, %1276 : vector<16x16xf32>
    %c0_63 = arith.constant 0 : index
    %c10_64 = arith.constant 10 : index
    %c0_65 = arith.constant 0 : index
    %c0_66 = arith.constant 0 : index
    %1278 = vector.load %arg4[%c0_63, %c10_64, %c0_65, %c0_66] : memref<1x12x16x16xf32, #tpu.memory_space<vmem>>, vector<1x1x16x16xf32>
    %1279 = vector.shape_cast %1278 : vector<1x1x16x16xf32> to vector<16x16xf32>
    %1280 = vector.shape_cast %1277 : vector<16x16xf32> to vector<1x1x16x16xf32>
    tpu.vector_store %arg4[%c0_63, %c10_64, %c0_65, %c0_66], %1280 {strides = array<i32>} : memref<1x12x16x16xf32, #tpu.memory_space<vmem>>, vector<1x1x16x16xf32>,
    %c7_67 = arith.constant 7 : index
    %1281 = memref.load %arg2[%c7_67] : memref<8xf32, #tpu.memory_space<smem>>
    %1282 = vector.broadcast %1281 : f32 to vector<16x16xf32>
    %1283 = arith.addf %1224, %1282 : vector<16x16xf32>
    %cst_68 = arith.constant 0.000000e+00 : f32
    %1284 = vector.broadcast %cst_68 : f32 to vector<16x16xf32>
    %1285 = arith.maximumf %1283, %1284 : vector<16x16xf32>
    %c0_69 = arith.constant 0 : index
    %c11_70 = arith.constant 11 : index
    %c0_71 = arith.constant 0 : index
    %c0_72 = arith.constant 0 : index
    %1286 = vector.load %arg4[%c0_69, %c11_70, %c0_71, %c0_72] : memref<1x12x16x16xf32, #tpu.memory_space<vmem>>, vector<1x1x16x16xf32>
    %1287 = vector.shape_cast %1286 : vector<1x1x16x16xf32> to vector<16x16xf32>
    %1288 = vector.shape_cast %1285 : vector<16x16xf32> to vector<1x1x16x16xf32>
    tpu.vector_store %arg4[%c0_69, %c11_70, %c0_71, %c0_72], %1288 {strides = array<i32>} : memref<1x12x16x16xf32, #tpu.memory_space<vmem>>, vector<1x1x16x16xf32>,
    return
  }
  func.func @transform_0(%arg0: i32) -> i32 {
    %c0_i32 = arith.constant 0 : i32
    %c0_i32_0 = arith.constant 0 : i32
    return %c0_i32 : i32
  }
  func.func @transform_1(%arg0: i32) -> i32 {
    %c0_i32 = arith.constant 0 : i32
    %c0_i32_0 = arith.constant 0 : i32
    return %c0_i32 : i32
  }
  func.func @transform_2(%arg0: i32) -> (i32, i32, i32, i32) {
    %c0_i32 = arith.constant 0 : i32
    %c0_i32_0 = arith.constant 0 : i32
    %c0_i32_1 = arith.constant 0 : i32
    %c0_i32_2 = arith.constant 0 : i32
    return %arg0, %c0_i32, %c0_i32_0, %c0_i32_1 : i32, i32, i32, i32
  }
  func.func @transform_3(%arg0: i32) -> (i32, i32, i32, i32) {
    %c0_i32 = arith.constant 0 : i32
    %c0_i32_0 = arith.constant 0 : i32
    %c0_i32_1 = arith.constant 0 : i32
    %c0_i32_2 = arith.constant 0 : i32
    return %arg0, %c0_i32, %c0_i32_0, %c0_i32_1 : i32, i32, i32, i32
  }
}

</mosaic_0001>

<llo_original>
// kernel: rdb_g_forward.1
$region0: #{rdb_g_forward.1}
  #allocation0 [shape = 'u32[]', space=smem, size = 0x4, offset = 0x4, fixed_abs, tag = 'smem constant byte address 0x4 - core index']
  #allocation1 [shape = 'u32[144,128]{1,0:T(1,128)}', space=vmem, size = 0x12000, scoped, tag = 'internal scratch']
  #allocation2 [shape = 'f32[4,18,18]{2,1,0:T(8,128)}', space=vmem, size = 0xc000, scoped, tag = 'scratch operand']
  %s0 = inlined_call_operand.vmem [shape: f32[288], index: 0, kind: input, shape index: {}]
  %s1 = inlined_call_operand.vmem [shape: f32[8], index: 1, kind: input, shape index: {}]
  %s2 = inlined_call_operand.vmem [shape: f32[2,4,16,16], index: 2, kind: input, shape index: {}]
  %s3 = inlined_call_operand.hbm [shape: f32[2,12,16,16], index: 3, kind: output, shape index: {}]
  %s4 = sld [smem:[#allocation0]]
  $region53: #{rdb_g_forward.1} parent=0
    _
  %s6 = ssub.s32 1, %s4
  %s7 = scalar_select 0, %s6, %s4
  $region1: #{rdb_g_forward.1} parent=0
    #allocation3 [shape = 'u8[1536]{0}', space=smem, size = 0x600, scoped, tag = 'input window, operand 0, single buffered']
    #allocation4 [shape = 's32[2]{0}', space=sflag, size = 0x8, scoped, tag = 'scoped memory for rdb_g_forward.1']
    #allocation5 [shape = 's32[2]{0}', space=sflag, size = 0x8, scoped, tag = 'scoped memory for rdb_g_forward.1']
    #allocation6 [shape = 'u8[512]{0}', space=smem, size = 0x200, scoped, tag = 'input window, operand 1, single buffered']
    #allocation7 [shape = 's32[1]{0}', space=sflag, size = 0x4, scoped, tag = 'scoped memory for rdb_g_forward.1']
    #allocation8 [shape = 'u8[196608]{0}', space=vmem, size = 0x30000, scoped, tag = 'output window, operand 0']
    %8 = vsyncpa [#allocation5], 0
    %9 = vsyncpa [#allocation7], 0
    %10 = vsyncpa [#allocation4], 0
    %s11 = scalar_lea.sflag [#allocation4], 1
    %12 = vsyncpa %s11, 0
    loop: start=0, step=1, limit=4
    $region2: #{rdb_g_forward.1} parent=1 // loop_pre_header
      _
    $region3: #{rdb_g_forward.1} parent=1 // loop_header
      %s14 = sphi 0, %s18
      %p15 = scmp.ge.s32.totalorder %s14, 4
      %s22 = sphi 0, %s22
      %s24 = sphi 0, %s22
      %s25 = sphi 0, %s24
      %s39 = sphi 0, %s25
      %s43 = sphi 0, %s43
      %s45 = sphi 0, %s43
      %s46 = sphi 0, %s45
      %s60 = sphi 0, %s46
      %s66 = sphi 0, %s68
      %s69 = sphi 0, %s66
      %s70 = sphi 0, %s69
      %s86 = sphi 0, %s70
      %s92 = sphi 0, %s94
      %s95 = sphi 0, %s92
      %s96 = sphi 0, %s95
      %s112 = sphi 0, %s96
    $region4: #{rdb_g_forward.1} parent=1 // loop_header_branch
      %17 = sbr.rel (%p15) target = $region8
    $region5: #{rdb_g_forward.1} parent=1 // loop_body
      %s19 = ssub.s32 %s14, 1
      %s20 = ssub.s32 %s14, 2
      %s21 = sadd.s32 %s14, 1
      %s23 = sadd.s32 %s22, 1
      %p26 = scmp.eq.s32.totalorder %s14, 1
      %p27 = scmp.ne.s32.totalorder %s22, %s24
      %p28 = scmp.eq.s32.totalorder %s14, 0
      %p29 = por %p27, %p28
      %p30 = scmp.ne.s32.totalorder %s22, %s24
      %p31 = scmp.eq.s32.totalorder %s19, 1
      %p32 = por %p30, %p31
      %p33 = scmp.ne.s32.totalorder %s24, %s25
      %p34 = scmp.eq.s32.totalorder %s19, 0
      %p35 = por %p33, %p34
      %p36 = scmp.ne.s32.totalorder %s24, %s25
      %p37 = scmp.eq.s32.totalorder %s20, 1
      %p38 = por %p36, %p37
      %p40 = scmp.ne.s32.totalorder %s25, %s39
      %p41 = scmp.eq.s32.totalorder %s20, 0
      %p42 = por %p40, %p41
      %s44 = sadd.s32 %s43, 1
      %p47 = scmp.eq.s32.totalorder %s14, 1
      %p48 = scmp.ne.s32.totalorder %s43, %s45
      %p49 = scmp.eq.s32.totalorder %s14, 0
      %p50 = por %p48, %p49
      %p51 = scmp.ne.s32.totalorder %s43, %s45
      %p52 = scmp.eq.s32.totalorder %s19, 1
      %p53 = por %p51, %p52
      %p54 = scmp.ne.s32.totalorder %s45, %s46
      %p55 = scmp.eq.s32.totalorder %s19, 0
      %p56 = por %p54, %p55
      %p57 = scmp.ne.s32.totalorder %s45, %s46
      %p58 = scmp.eq.s32.totalorder %s20, 1
      %p59 = por %p57, %p58
      %p61 = scmp.ne.s32.totalorder %s46, %s60
      %p62 = scmp.eq.s32.totalorder %s20, 0
      %p63 = por %p61, %p62
      %s64 = ssub.s32 %s14, %s21
      %p65 = scmp.eq.s32.totalorder %s64, 0
      %s67 = sadd.s32 %s66, 1
      %s68 = scalar_select %p65, %s66, %s67
      %p71 = pneg %p65
      %p72 = scmp.eq.s32.totalorder %s14, 1
      %p73 = por %p71, %p72
      %p74 = scmp.ne.s32.totalorder %s66, %s69
      %p75 = scmp.eq.s32.totalorder %s14, 0
      %p76 = por %p74, %p75
      %p77 = scmp.ne.s32.totalorder %s66, %s69
      %p78 = scmp.eq.s32.totalorder %s19, 1
      %p79 = por %p77, %p78
      %p80 = scmp.ne.s32.totalorder %s69, %s70
      %p81 = scmp.eq.s32.totalorder %s19, 0
      %p82 = por %p80, %p81
      %p83 = scmp.ne.s32.totalorder %s69, %s70
      %p84 = scmp.eq.s32.totalorder %s20, 1
      %p85 = por %p83, %p84
      %p87 = scmp.ne.s32.totalorder %s70, %s86
      %p88 = scmp.eq.s32.totalorder %s20, 0
      %p89 = por %p87, %p88
      %s90 = ssub.s32 %s14, %s21
      %p91 = scmp.eq.s32.totalorder %s90, 0
      %s93 = sadd.s32 %s92, 1
      %s94 = scalar_select %p91, %s92, %s93
      %p97 = pneg %p91
      %p98 = scmp.eq.s32.totalorder %s14, 1
      %p99 = por %p97, %p98
      %p100 = scmp.ne.s32.totalorder %s92, %s95
      %p101 = scmp.eq.s32.totalorder %s14, 0
      %p102 = por %p100, %p101
      %p103 = scmp.ne.s32.totalorder %s92, %s95
      %p104 = scmp.eq.s32.totalorder %s19, 1
      %p105 = por %p103, %p104
      %p106 = scmp.ne.s32.totalorder %s95, %s96
      %p107 = scmp.eq.s32.totalorder %s19, 0
      %p108 = por %p106, %p107
      %p109 = scmp.ne.s32.totalorder %s95, %s96
      %p110 = scmp.eq.s32.totalorder %s20, 1
      %p111 = por %p109, %p110
      %p113 = scmp.ne.s32.totalorder %s96, %s112
      %p114 = scmp.eq.s32.totalorder %s20, 0
      %p115 = por %p113, %p114
      %p116 = scmp.le.s32.totalorder 1, %s14
      %p117 = scmp.lt.s32.totalorder %s14, 3
      %p118 = pnand %p116, %p117
      %p119 = pneg %p118
      // Predicated region
      $region9: #{rdb_g_forward.1} parent=5 // pred_check
        _
      $region10: #{rdb_g_forward.1} parent=5 // pred_check_branch
        %121 = sbr.rel (%p118) target = $region12
      $region11: #{rdb_g_forward.1} parent=5 // pred_region
        %s122 = ssub.s32 %s14, 1
        // Predicated region
        $region13: #{rdb_g_forward.1} parent=11 // pred_check
          %p123 = pneg %p35
        $region14: #{rdb_g_forward.1} parent=11 // pred_check_branch
          %125 = sbr.rel (%p123) target = $region16
        $region15: #{rdb_g_forward.1} parent=11 // pred_region
          %s127 = ssub.s32 48, 48
          %128 = vsyncadd [#allocation5], %s127
          %s130 = sshll.u32 %s0, 4
          %s131 = int_to_ptr.vmem [resolvable:$true] %s130
          %133 = dma.vmem_to_smem %s131, 48, [#allocation3], [#allocation5]
        $region16: #{rdb_g_forward.1} parent=11 // pred_fallthru
          _
        // Predicated region
        $region17: #{rdb_g_forward.1} parent=11 // pred_check
          %p134 = pneg %p56
        $region18: #{rdb_g_forward.1} parent=11 // pred_check_branch
          %136 = sbr.rel (%p134) target = $region20
        $region19: #{rdb_g_forward.1} parent=11 // pred_region
          %s138 = ssub.s32 16, 16
          %139 = vsyncadd [#allocation7], %s138
          %s141 = sshll.u32 %s1, 4
          %s142 = int_to_ptr.vmem [resolvable:$true] %s141
          %144 = dma.vmem_to_smem %s142, 16, [#allocation6], [#allocation7]
        $region20: #{rdb_g_forward.1} parent=11 // pred_fallthru
          _
      $region12: #{rdb_g_forward.1} parent=5 // pred_fallthru
        _
      %p145 = scmp.lt.s32.totalorder %s14, 2
      // Predicated region
      $region21: #{rdb_g_forward.1} parent=5 // pred_check
        %p146 = pneg %p145
      $region22: #{rdb_g_forward.1} parent=5 // pred_check_branch
        %148 = sbr.rel (%p146) target = $region24
      $region23: #{rdb_g_forward.1} parent=5 // pred_region
        // Predicated region
        $region25: #{rdb_g_forward.1} parent=23 // pred_check
          %p149 = pneg %p76
        $region26: #{rdb_g_forward.1} parent=23 // pred_check_branch
          %151 = sbr.rel (%p149) target = $region28
        $region27: #{rdb_g_forward.1} parent=23 // pred_region
          %p152 = scmp.lt.s32.totalorder %s14, 1
          %s153 = scalar_select %p152, %s14, 1
          %s154 = smul.addr %s153, 8
          %s155 = smul.addr %s154, 8
          %s156 = scalar_lea.vmem %s2, %s155
        $region28: #{rdb_g_forward.1} parent=23 // pred_fallthru
          _
      $region24: #{rdb_g_forward.1} parent=5 // pred_fallthru
        _
      %p157 = scmp.le.s32.totalorder 1, %s14
      %p158 = scmp.lt.s32.totalorder %s14, 3
      %p159 = pnand %p157, %p158
      %p160 = pneg %p159
      // Predicated region
      $region29: #{rdb_g_forward.1} parent=5 // pred_check
        _
      $region30: #{rdb_g_forward.1} parent=5 // pred_check_branch
        %162 = sbr.rel (%p159) target = $region32
      $region31: #{rdb_g_forward.1} parent=5 // pred_region
        %s163 = ssub.s32 %s14, 1
        // Predicated region
        $region33: #{rdb_g_forward.1} parent=31 // pred_check
          %p164 = pneg %p35
        $region34: #{rdb_g_forward.1} parent=31 // pred_check_branch
          %166 = sbr.rel (%p164) target = $region36
        $region35: #{rdb_g_forward.1} parent=31 // pred_region
          %167 = dma.done [#allocation5], 48
        $region36: #{rdb_g_forward.1} parent=31 // pred_fallthru
          _
        // Predicated region
        $region37: #{rdb_g_forward.1} parent=31 // pred_check
          %p168 = pneg %p56
        $region38: #{rdb_g_forward.1} parent=31 // pred_check_branch
          %170 = sbr.rel (%p168) target = $region40
        $region39: #{rdb_g_forward.1} parent=31 // pred_region
          %171 = dma.done [#allocation7], 16
        $region40: #{rdb_g_forward.1} parent=31 // pred_fallthru
          _
        %172 = sfence
        %p173 = pneg %p35
        %p174 = pneg %p32
        %p175 = pneg %p56
        %p176 = pneg %p53
        %p177 = scmp.lt.s32.totalorder %s19, 1
        %s178 = scalar_select %p177, %s19, 1
        %s179 = smul.addr %s178, 8
        %s180 = smul.addr %s179, 8
        %s181 = scalar_lea.vmem %s2, %s180
        %p182 = pneg %p82
        %p183 = pneg %p79
        %p184 = pneg %p108
        %p185 = pneg %p105
        %s186 = sand.u32 %s95, 1
        %s187 = scalar_lea.sflag [#allocation4], %s186
        %s188 = sand.u32 %s95, 1
        %s189 = smul.addr %s188, 192
        %s190 = scalar_lea.vmem [#allocation8], %s189
        %p191 = scmp.lt.s32.totalorder %s19, 1
        %s192 = scalar_select %p191, %s19, 1
        %s193 = smul.addr %s192, 8
        %s194 = smul.addr %s193, 8
        %s195 = scalar_lea.vmem %s2, %s194
        %v196 = vld [vmem:[%s195] sm:$0xff]
        %v197 = vld [vmem:[%s195 + $0x8] sm:$0xff]
        %v198 = vld [vmem:[%s195 + $0x10] sm:$0xff]
        %v199 = vld [vmem:[%s195 + $0x18] sm:$0xff]
        %v200 = vld [vmem:[%s195 + $0x20] sm:$0xff]
        %v201 = vld [vmem:[%s195 + $0x28] sm:$0xff]
        %v202 = vld [vmem:[%s195 + $0x30] sm:$0xff]
        %v203 = vld [vmem:[%s195 + $0x38] sm:$0xff]
        %vm204 = vcmask 130048
        %205 = vst.msk [vmem:[%s190] sm:$0xff] %vm204, %v196
        %206 = vst.msk [vmem:[%s190 + $0x8] sm:$0xff] %vm204, %v197
        %207 = vst.msk [vmem:[%s190 + $0x10] sm:$0xff] %vm204, %v198
        %208 = vst.msk [vmem:[%s190 + $0x18] sm:$0xff] %vm204, %v199
        %209 = vst.msk [vmem:[%s190 + $0x20] sm:$0xff] %vm204, %v200
        %210 = vst.msk [vmem:[%s190 + $0x28] sm:$0xff] %vm204, %v201
        %211 = vst.msk [vmem:[%s190 + $0x30] sm:$0xff] %vm204, %v202
        %212 = vst.msk [vmem:[%s190 + $0x38] sm:$0xff] %vm204, %v203
        %vm213 = vcmask 146432
        %214 = vst.msk [vmem:[#allocation2] sm:$0xff] %vm213, 0.0
        %215 = vst.msk [vmem:[#allocation2 + $0x8] sm:$0xff] %vm213, 0.0
        %vm216 = vcmask 140288
        %217 = vst.msk [vmem:[#allocation2 + $0x10] sm:$0x3] %vm216, 0.0
        %218 = vst.msk [vmem:[#allocation2 + $0x18] sm:$0xff] %vm213, 0.0
        %219 = vst.msk [vmem:[#allocation2 + $0x20] sm:$0xff] %vm213, 0.0
        %220 = vst.msk [vmem:[#allocation2 + $0x28] sm:$0x3] %vm216, 0.0
        %221 = vst.msk [vmem:[#allocation2 + $0x30] sm:$0xff] %vm213, 0.0
        %222 = vst.msk [vmem:[#allocation2 + $0x38] sm:$0xff] %vm213, 0.0
        %223 = vst.msk [vmem:[#allocation2 + $0x40] sm:$0x3] %vm216, 0.0
        %224 = vst.msk [vmem:[#allocation2 + $0x48] sm:$0xff] %vm213, 0.0
        %225 = vst.msk [vmem:[#allocation2 + $0x50] sm:$0xff] %vm213, 0.0
        %226 = vst.msk [vmem:[#allocation2 + $0x58] sm:$0x3] %vm216, 0.0
        %235 = vrot.lane.b32.xlu0 %v196, 1
        %v236 = vpop.permute.xlu0 %235
        %237 = vrot.lane.b32.xlu0 %v197, 1
        %v238 = vpop.permute.xlu0 %237
        %239 = vrot.lane.b32.xlu0 %v198, 1
        %v240 = vpop.permute.xlu0 %239
        %241 = vrot.lane.b32.xlu0 %v199, 1
        %v242 = vpop.permute.xlu0 %241
        %243 = vrot.lane.b32.xlu0 %v200, 1
        %v244 = vpop.permute.xlu0 %243
        %245 = vrot.lane.b32.xlu0 %v201, 1
        %v246 = vpop.permute.xlu0 %245
        %247 = vrot.lane.b32.xlu0 %v202, 1
        %v248 = vpop.permute.xlu0 %247
        %249 = vrot.lane.b32.xlu0 %v203, 1
        %v250 = vpop.permute.xlu0 %249
        %vm259 = vcmask 138248
        %260 = vst.msk [vmem:[#allocation2 + $0x1] sm:$0xff] %vm259, %v236
        %261 = vst.msk [vmem:[#allocation2 + $0x9] sm:$0xff] %vm259, %v238
        %262 = vst.msk [vmem:[#allocation2 + $0x19] sm:$0xff] %vm259, %v240
        %263 = vst.msk [vmem:[#allocation2 + $0x21] sm:$0xff] %vm259, %v242
        %264 = vst.msk [vmem:[#allocation2 + $0x31] sm:$0xff] %vm259, %v244
        %265 = vst.msk [vmem:[#allocation2 + $0x39] sm:$0xff] %vm259, %v246
        %266 = vst.msk [vmem:[#allocation2 + $0x49] sm:$0xff] %vm259, %v248
        %267 = vst.msk [vmem:[#allocation2 + $0x51] sm:$0xff] %vm259, %v250
        %v268 = vld [vmem:[#allocation2] sm:$0xff]
        %v269 = vld [vmem:[#allocation2 + $0x8] sm:$0xff]
        %v270 = vld [vmem:[#allocation2 + $0x10] sm:$0x3]
        %v271 = vld [vmem:[#allocation2 + $0x18] sm:$0xff]
        %v272 = vld [vmem:[#allocation2 + $0x20] sm:$0xff]
        %v273 = vld [vmem:[#allocation2 + $0x28] sm:$0x3]
        %v274 = vld [vmem:[#allocation2 + $0x30] sm:$0xff]
        %v275 = vld [vmem:[#allocation2 + $0x38] sm:$0xff]
        %v276 = vld [vmem:[#allocation2 + $0x40] sm:$0x3]
        %v277 = vld [vmem:[#allocation2 + $0x48] sm:$0xff]
        %v278 = vld [vmem:[#allocation2 + $0x50] sm:$0xff]
        %v279 = vld [vmem:[#allocation2 + $0x58] sm:$0x3]
        %s280 = sld [smem:[#allocation3]]
        %v281 = vstv %s280
        %v282 = vmul.f32 %v281, %v268
        %v283 = vmul.f32 %v281, %v269
        %v284 = vadd.f32 %v282, 0.0
        %v285 = vadd.f32 %v283, 0.0
        %s286 = sld [smem:[#allocation3 + $0x24]]
        %v287 = vstv %s286
        %v288 = vmul.f32 %v287, %v268
        %v289 = vmul.f32 %v287, %v269
        %v290 = vadd.f32 %v288, 0.0
        %v291 = vadd.f32 %v289, 0.0
        %s292 = sld [smem:[#allocation3 + $0x48]]
        %v293 = vstv %s292
        %v294 = vmul.f32 %v293, %v268
        %v295 = vmul.f32 %v293, %v269
        %v296 = vadd.f32 %v294, 0.0
        %v297 = vadd.f32 %v295, 0.0
        %s298 = sld [smem:[#allocation3 + $0x6c]]
        %v299 = vstv %s298
        %v300 = vmul.f32 %v299, %v268
        %v301 = vmul.f32 %v299, %v269
        %v302 = vadd.f32 %v300, 0.0
        %v303 = vadd.f32 %v301, 0.0
        %s304 = sld [smem:[#allocation3 + $0x90]]
        %v305 = vstv %s304
        %v306 = vmul.f32 %v305, %v268
        %v307 = vmul.f32 %v305, %v269
        %v308 = vadd.f32 %v306, 0.0
        %v309 = vadd.f32 %v307, 0.0
        %s310 = sld [smem:[#allocation3 + $0xb4]]
        %v311 = vstv %s310
        %v312 = vmul.f32 %v311, %v268
        %v313 = vmul.f32 %v311, %v269
        %v314 = vadd.f32 %v312, 0.0
        %v315 = vadd.f32 %v313, 0.0
        %s316 = sld [smem:[#allocation3 + $0xd8]]
        %v317 = vstv %s316
        %v318 = vmul.f32 %v317, %v268
        %v319 = vmul.f32 %v317, %v269
        %v320 = vadd.f32 %v318, 0.0
        %v321 = vadd.f32 %v319, 0.0
        %s322 = sld [smem:[#allocation3 + $0xfc]]
        %v323 = vstv %s322
        %v324 = vmul.f32 %v323, %v268
        %v325 = vmul.f32 %v323, %v269
        %v326 = vadd.f32 %v324, 0.0
        %v327 = vadd.f32 %v325, 0.0
        %s328 = sld [smem:[#allocation3 + $0x1]]
        %v329 = vstv %s328
        %v330 = vmul.f32 %v329, %v268
        %v331 = vmul.f32 %v329, %v269
        %334 = vrot.lane.b32.xlu0 %v330, 127
        %v335 = vpop.permute.xlu0 %334
        %336 = vrot.lane.b32.xlu0 %v331, 127
        %v337 = vpop.permute.xlu0 %336
        %v340 = vadd.f32 %v284, %v335
        %v341 = vadd.f32 %v285, %v337
        %s342 = sld [smem:[#allocation3 + $0x25]]
        %v343 = vstv %s342
        %v344 = vmul.f32 %v343, %v268
        %v345 = vmul.f32 %v343, %v269
        %348 = vrot.lane.b32.xlu0 %v344, 127
        %v349 = vpop.permute.xlu0 %348
        %350 = vrot.lane.b32.xlu0 %v345, 127
        %v351 = vpop.permute.xlu0 %350
        %v354 = vadd.f32 %v290, %v349
        %v355 = vadd.f32 %v291, %v351
        %s356 = sld [smem:[#allocation3 + $0x49]]
        %v357 = vstv %s356
        %v358 = vmul.f32 %v357, %v268
        %v359 = vmul.f32 %v357, %v269
        %362 = vrot.lane.b32.xlu0 %v358, 127
        %v363 = vpop.permute.xlu0 %362
        %364 = vrot.lane.b32.xlu0 %v359, 127
        %v365 = vpop.permute.xlu0 %364
        %v368 = vadd.f32 %v296, %v363
        %v369 = vadd.f32 %v297, %v365
        %s370 = sld [smem:[#allocation3 + $0x6d]]
        %v371 = vstv %s370
        %v372 = vmul.f32 %v371, %v268
        %v373 = vmul.f32 %v371, %v269
        %376 = vrot.lane.b32.xlu0 %v372, 127
        %v377 = vpop.permute.xlu0 %376
        %378 = vrot.lane.b32.xlu0 %v373, 127
        %v379 = vpop.permute.xlu0 %378
        %v382 = vadd.f32 %v302, %v377
        %v383 = vadd.f32 %v303, %v379
        %s384 = sld [smem:[#allocation3 + $0x91]]
        %v385 = vstv %s384
        %v386 = vmul.f32 %v385, %v268
        %v387 = vmul.f32 %v385, %v269
        %390 = vrot.lane.b32.xlu0 %v386, 127
        %v391 = vpop.permute.xlu0 %390
        %392 = vrot.lane.b32.xlu0 %v387, 127
        %v393 = vpop.permute.xlu0 %392
        %v396 = vadd.f32 %v308, %v391
        %v397 = vadd.f32 %v309, %v393
        %s398 = sld [smem:[#allocation3 + $0xb5]]
        %v399 = vstv %s398
        %v400 = vmul.f32 %v399, %v268
        %v401 = vmul.f32 %v399, %v269
        %404 = vrot.lane.b32.xlu0 %v400, 127
        %v405 = vpop.permute.xlu0 %404
        %406 = vrot.lane.b32.xlu0 %v401, 127
        %v407 = vpop.permute.xlu0 %406
        %v410 = vadd.f32 %v314, %v405
        %v411 = vadd.f32 %v315, %v407
        %s412 = sld [smem:[#allocation3 + $0xd9]]
        %v413 = vstv %s412
        %v414 = vmul.f32 %v413, %v268
        %v415 = vmul.f32 %v413, %v269
        %418 = vrot.lane.b32.xlu0 %v414, 127
        %v419 = vpop.permute.xlu0 %418
        %420 = vrot.lane.b32.xlu0 %v415, 127
        %v421 = vpop.permute.xlu0 %420
        %v424 = vadd.f32 %v320, %v419
        %v425 = vadd.f32 %v321, %v421
        %s426 = sld [smem:[#allocation3 + $0xfd]]
        %v427 = vstv %s426
        %v428 = vmul.f32 %v427, %v268
        %v429 = vmul.f32 %v427, %v269
        %432 = vrot.lane.b32.xlu0 %v428, 127
        %v433 = vpop.permute.xlu0 %432
        %434 = vrot.lane.b32.xlu0 %v429, 127
        %v435 = vpop.permute.xlu0 %434
        %v438 = vadd.f32 %v326, %v433
        %v439 = vadd.f32 %v327, %v435
        %s440 = sld [smem:[#allocation3 + $0x2]]
        %v441 = vstv %s440
        %v442 = vmul.f32 %v441, %v268
        %v443 = vmul.f32 %v441, %v269
        %446 = vrot.lane.b32.xlu0 %v442, 126
        %v447 = vpop.permute.xlu0 %446
        %448 = vrot.lane.b32.xlu0 %v443, 126
        %v449 = vpop.permute.xlu0 %448
        %v452 = vadd.f32 %v340, %v447
        %v453 = vadd.f32 %v341, %v449
        %s454 = sld [smem:[#allocation3 + $0x26]]
        %v455 = vstv %s454
        %v456 = vmul.f32 %v455, %v268
        %v457 = vmul.f32 %v455, %v269
        %460 = vrot.lane.b32.xlu0 %v456, 126
        %v461 = vpop.permute.xlu0 %460
        %462 = vrot.lane.b32.xlu0 %v457, 126
        %v463 = vpop.permute.xlu0 %462
        %v466 = vadd.f32 %v354, %v461
        %v467 = vadd.f32 %v355, %v463
        %s468 = sld [smem:[#allocation3 + $0x4a]]
        %v469 = vstv %s468
        %v470 = vmul.f32 %v469, %v268
        %v471 = vmul.f32 %v469, %v269
        %474 = vrot.lane.b32.xlu0 %v470, 126
        %v475 = vpop.permute.xlu0 %474
        %476 = vrot.lane.b32.xlu0 %v471, 126
        %v477 = vpop.permute.xlu0 %476
        %v480 = vadd.f32 %v368, %v475
        %v481 = vadd.f32 %v369, %v477
        %s482 = sld [smem:[#allocation3 + $0x6e]]
        %v483 = vstv %s482
        %v484 = vmul.f32 %v483, %v268
        %v485 = vmul.f32 %v483, %v269
        %488 = vrot.lane.b32.xlu0 %v484, 126
        %v489 = vpop.permute.xlu0 %488
        %490 = vrot.lane.b32.xlu0 %v485, 126
        %v491 = vpop.permute.xlu0 %490
        %v494 = vadd.f32 %v382, %v489
        %v495 = vadd.f32 %v383, %v491
        %s496 = sld [smem:[#allocation3 + $0x92]]
        %v497 = vstv %s496
        %v498 = vmul.f32 %v497, %v268
        %v499 = vmul.f32 %v497, %v269
        %502 = vrot.lane.b32.xlu0 %v498, 126
        %v503 = vpop.permute.xlu0 %502
        %504 = vrot.lane.b32.xlu0 %v499, 126
        %v505 = vpop.permute.xlu0 %504
        %v508 = vadd.f32 %v396, %v503
        %v509 = vadd.f32 %v397, %v505
        %s510 = sld [smem:[#allocation3 + $0xb6]]
        %v511 = vstv %s510
        %v512 = vmul.f32 %v511, %v268
        %v513 = vmul.f32 %v511, %v269
        %516 = vrot.lane.b32.xlu0 %v512, 126
        %v517 = vpop.permute.xlu0 %516
        %518 = vrot.lane.b32.xlu0 %v513, 126
        %v519 = vpop.permute.xlu0 %518
        %v522 = vadd.f32 %v410, %v517
        %v523 = vadd.f32 %v411, %v519
        %s524 = sld [smem:[#allocation3 + $0xda]]
        %v525 = vstv %s524
        %v526 = vmul.f32 %v525, %v268
        %v527 = vmul.f32 %v525, %v269
        %530 = vrot.lane.b32.xlu0 %v526, 126
        %v531 = vpop.permute.xlu0 %530
        %532 = vrot.lane.b32.xlu0 %v527, 126
        %v533 = vpop.permute.xlu0 %532
        %v536 = vadd.f32 %v424, %v531
        %v537 = vadd.f32 %v425, %v533
        %s538 = sld [smem:[#allocation3 + $0xfe]]
        %v539 = vstv %s538
        %v540 = vmul.f32 %v539, %v268
        %v541 = vmul.f32 %v539, %v269
        %544 = vrot.lane.b32.xlu0 %v540, 126
        %v545 = vpop.permute.xlu0 %544
        %546 = vrot.lane.b32.xlu0 %v541, 126
        %v547 = vpop.permute.xlu0 %546
        %v550 = vadd.f32 %v438, %v545
        %v551 = vadd.f32 %v439, %v547
        %s552 = sld [smem:[#allocation3 + $0x3]]
        %v553 = vstv %s552
        %v554 = vmul.f32 %v553, %v268
        %v555 = vmul.f32 %v553, %v269
        %v556 = vmul.f32 %v553, %v270
        %vm560 = vcmask 1046528
        %v561 = vrot.slane %v554, 1
        %v562 = vrot.slane %v555, 1
        %v563 = vsel %vm560, %v561, %v562
        %v564 = vrot.slane %v556, 1
        %v565 = vsel %vm560, %v562, %v564
        %v568 = vadd.f32 %v452, %v563
        %v569 = vadd.f32 %v453, %v565
        %s570 = sld [smem:[#allocation3 + $0x27]]
        %v571 = vstv %s570
        %v572 = vmul.f32 %v571, %v268
        %v573 = vmul.f32 %v571, %v269
        %v574 = vmul.f32 %v571, %v270
        %v578 = vrot.slane %v572, 1
        %v579 = vrot.slane %v573, 1
        %v580 = vsel %vm560, %v578, %v579
        %v581 = vrot.slane %v574, 1
        %v582 = vsel %vm560, %v579, %v581
        %v585 = vadd.f32 %v466, %v580
        %v586 = vadd.f32 %v467, %v582
        %s587 = sld [smem:[#allocation3 + $0x4b]]
        %v588 = vstv %s587
        %v589 = vmul.f32 %v588, %v268
        %v590 = vmul.f32 %v588, %v269
        %v591 = vmul.f32 %v588, %v270
        %v595 = vrot.slane %v589, 1
        %v596 = vrot.slane %v590, 1
        %v597 = vsel %vm560, %v595, %v596
        %v598 = vrot.slane %v591, 1
        %v599 = vsel %vm560, %v596, %v598
        %v602 = vadd.f32 %v480, %v597
        %v603 = vadd.f32 %v481, %v599
        %s604 = sld [smem:[#allocation3 + $0x6f]]
        %v605 = vstv %s604
        %v606 = vmul.f32 %v605, %v268
        %v607 = vmul.f32 %v605, %v269
        %v608 = vmul.f32 %v605, %v270
        %v612 = vrot.slane %v606, 1
        %v613 = vrot.slane %v607, 1
        %v614 = vsel %vm560, %v612, %v613
        %v615 = vrot.slane %v608, 1
        %v616 = vsel %vm560, %v613, %v615
        %v619 = vadd.f32 %v494, %v614
        %v620 = vadd.f32 %v495, %v616
        %s621 = sld [smem:[#allocation3 + $0x93]]
        %v622 = vstv %s621
        %v623 = vmul.f32 %v622, %v268
        %v624 = vmul.f32 %v622, %v269
        %v625 = vmul.f32 %v622, %v270
        %v629 = vrot.slane %v623, 1
        %v630 = vrot.slane %v624, 1
        %v631 = vsel %vm560, %v629, %v630
        %v632 = vrot.slane %v625, 1
        %v633 = vsel %vm560, %v630, %v632
        %v636 = vadd.f32 %v508, %v631
        %v637 = vadd.f32 %v509, %v633
        %s638 = sld [smem:[#allocation3 + $0xb7]]
        %v639 = vstv %s638
        %v640 = vmul.f32 %v639, %v268
        %v641 = vmul.f32 %v639, %v269
        %v642 = vmul.f32 %v639, %v270
        %v646 = vrot.slane %v640, 1
        %v647 = vrot.slane %v641, 1
        %v648 = vsel %vm560, %v646, %v647
        %v649 = vrot.slane %v642, 1
        %v650 = vsel %vm560, %v647, %v649
        %v653 = vadd.f32 %v522, %v648
        %v654 = vadd.f32 %v523, %v650
        %s655 = sld [smem:[#allocation3 + $0xdb]]
        %v656 = vstv %s655
        %v657 = vmul.f32 %v656, %v268
        %v658 = vmul.f32 %v656, %v269
        %v659 = vmul.f32 %v656, %v270
        %v663 = vrot.slane %v657, 1
        %v664 = vrot.slane %v658, 1
        %v665 = vsel %vm560, %v663, %v664
        %v666 = vrot.slane %v659, 1
        %v667 = vsel %vm560, %v664, %v666
        %v670 = vadd.f32 %v536, %v665
        %v671 = vadd.f32 %v537, %v667
        %s672 = sld [smem:[#allocation3 + $0xff]]
        %v673 = vstv %s672
        %v674 = vmul.f32 %v673, %v268
        %v675 = vmul.f32 %v673, %v269
        %v676 = vmul.f32 %v673, %v270
        %v680 = vrot.slane %v674, 1
        %v681 = vrot.slane %v675, 1
        %v682 = vsel %vm560, %v680, %v681
        %v683 = vrot.slane %v676, 1
        %v684 = vsel %vm560, %v681, %v683
        %v687 = vadd.f32 %v550, %v682
        %v688 = vadd.f32 %v551, %v684
        %s689 = sld [smem:[#allocation3 + $0x4]]
        %v690 = vstv %s689
        %v691 = vmul.f32 %v690, %v268
        %v692 = vmul.f32 %v690, %v269
        %v693 = vmul.f32 %v690, %v270
        %v697 = vrot.slane %v691, 1
        %v698 = vrot.slane %v692, 1
        %v699 = vsel %vm560, %v697, %v698
        %v700 = vrot.slane %v693, 1
        %v701 = vsel %vm560, %v698, %v700
        %702 = vrot.lane.b32.xlu0 %v699, 127
        %v703 = vpop.permute.xlu0 %702
        %704 = vrot.lane.b32.xlu0 %v701, 127
        %v705 = vpop.permute.xlu0 %704
        %v708 = vadd.f32 %v568, %v703
        %v709 = vadd.f32 %v569, %v705
        %s710 = sld [smem:[#allocation3 + $0x28]]
        %v711 = vstv %s710
        %v712 = vmul.f32 %v711, %v268
        %v713 = vmul.f32 %v711, %v269
        %v714 = vmul.f32 %v711, %v270
        %v718 = vrot.slane %v712, 1
        %v719 = vrot.slane %v713, 1
        %v720 = vsel %vm560, %v718, %v719
        %v721 = vrot.slane %v714, 1
        %v722 = vsel %vm560, %v719, %v721
        %723 = vrot.lane.b32.xlu0 %v720, 127
        %v724 = vpop.permute.xlu0 %723
        %725 = vrot.lane.b32.xlu0 %v722, 127
        %v726 = vpop.permute.xlu0 %725
        %v729 = vadd.f32 %v585, %v724
        %v730 = vadd.f32 %v586, %v726
        %s731 = sld [smem:[#allocation3 + $0x4c]]
        %v732 = vstv %s731
        %v733 = vmul.f32 %v732, %v268
        %v734 = vmul.f32 %v732, %v269
        %v735 = vmul.f32 %v732, %v270
        %v739 = vrot.slane %v733, 1
        %v740 = vrot.slane %v734, 1
        %v741 = vsel %vm560, %v739, %v740
        %v742 = vrot.slane %v735, 1
        %v743 = vsel %vm560, %v740, %v742
        %744 = vrot.lane.b32.xlu0 %v741, 127
        %v745 = vpop.permute.xlu0 %744
        %746 = vrot.lane.b32.xlu0 %v743, 127
        %v747 = vpop.permute.xlu0 %746
        %v750 = vadd.f32 %v602, %v745
        %v751 = vadd.f32 %v603, %v747
        %s752 = sld [smem:[#allocation3 + $0x70]]
        %v753 = vstv %s752
        %v754 = vmul.f32 %v753, %v268
        %v755 = vmul.f32 %v753, %v269
        %v756 = vmul.f32 %v753, %v270
        %v760 = vrot.slane %v754, 1
        %v761 = vrot.slane %v755, 1
        %v762 = vsel %vm560, %v760, %v761
        %v763 = vrot.slane %v756, 1
        %v764 = vsel %vm560, %v761, %v763
        %765 = vrot.lane.b32.xlu0 %v762, 127
        %v766 = vpop.permute.xlu0 %765
        %767 = vrot.lane.b32.xlu0 %v764, 127
        %v768 = vpop.permute.xlu0 %767
        %v771 = vadd.f32 %v619, %v766
        %v772 = vadd.f32 %v620, %v768
        %s773 = sld [smem:[#allocation3 + $0x94]]
        %v774 = vstv %s773
        %v775 = vmul.f32 %v774, %v268
        %v776 = vmul.f32 %v774, %v269
        %v777 = vmul.f32 %v774, %v270
        %v781 = vrot.slane %v775, 1
        %v782 = vrot.slane %v776, 1
        %v783 = vsel %vm560, %v781, %v782
        %v784 = vrot.slane %v777, 1
        %v785 = vsel %vm560, %v782, %v784
        %786 = vrot.lane.b32.xlu0 %v783, 127
        %v787 = vpop.permute.xlu0 %786
        %788 = vrot.lane.b32.xlu0 %v785, 127
        %v789 = vpop.permute.xlu0 %788
        %v792 = vadd.f32 %v636, %v787
        %v793 = vadd.f32 %v637, %v789
        %s794 = sld [smem:[#allocation3 + $0xb8]]
        %v795 = vstv %s794
        %v796 = vmul.f32 %v795, %v268
        %v797 = vmul.f32 %v795, %v269
        %v798 = vmul.f32 %v795, %v270
        %v802 = vrot.slane %v796, 1
        %v803 = vrot.slane %v797, 1
        %v804 = vsel %vm560, %v802, %v803
        %v805 = vrot.slane %v798, 1
        %v806 = vsel %vm560, %v803, %v805
        %807 = vrot.lane.b32.xlu0 %v804, 127
        %v808 = vpop.permute.xlu0 %807
        %809 = vrot.lane.b32.xlu0 %v806, 127
        %v810 = vpop.permute.xlu0 %809
        %v813 = vadd.f32 %v653, %v808
        %v814 = vadd.f32 %v654, %v810
        %s815 = sld [smem:[#allocation3 + $0xdc]]
        %v816 = vstv %s815
        %v817 = vmul.f32 %v816, %v268
        %v818 = vmul.f32 %v816, %v269
        %v819 = vmul.f32 %v816, %v270
        %v823 = vrot.slane %v817, 1
        %v824 = vrot.slane %v818, 1
        %v825 = vsel %vm560, %v823, %v824
        %v826 = vrot.slane %v819, 1
        %v827 = vsel %vm560, %v824, %v826
        %828 = vrot.lane.b32.xlu0 %v825, 127
        %v829 = vpop.permute.xlu0 %828
        %830 = vrot.lane.b32.xlu0 %v827, 127
        %v831 = vpop.permute.xlu0 %830
        %v834 = vadd.f32 %v670, %v829
        %v835 = vadd.f32 %v671, %v831
        %s836 = sld [smem:[#allocation3 + $0x100]]
        %v837 = vstv %s836
        %v838 = vmul.f32 %v837, %v268
        %v839 = vmul.f32 %v837, %v269
        %v840 = vmul.f32 %v837, %v270
        %v844 = vrot.slane %v838, 1
        %v845 = vrot.slane %v839, 1
        %v846 = vsel %vm560, %v844, %v845
        %v847 = vrot.slane %v840, 1
        %v848 = vsel %vm560, %v845, %v847
        %849 = vrot.lane.b32.xlu0 %v846, 127
        %v850 = vpop.permute.xlu0 %849
        %851 = vrot.lane.b32.xlu0 %v848, 127
        %v852 = vpop.permute.xlu0 %851
        %v855 = vadd.f32 %v687, %v850
        %v856 = vadd.f32 %v688, %v852
        %s857 = sld [smem:[#allocation3 + $0x5]]
        %v858 = vstv %s857
        %v859 = vmul.f32 %v858, %v268
        %v860 = vmul.f32 %v858, %v269
        %v861 = vmul.f32 %v858, %v270
        %v865 = vrot.slane %v859, 1
        %v866 = vrot.slane %v860, 1
        %v867 = vsel %vm560, %v865, %v866
        %v868 = vrot.slane %v861, 1
        %v869 = vsel %vm560, %v866, %v868
        %870 = vrot.lane.b32.xlu0 %v867, 126
        %v871 = vpop.permute.xlu0 %870
        %872 = vrot.lane.b32.xlu0 %v869, 126
        %v873 = vpop.permute.xlu0 %872
        %v876 = vadd.f32 %v708, %v871
        %v877 = vadd.f32 %v709, %v873
        %s878 = sld [smem:[#allocation3 + $0x29]]
        %v879 = vstv %s878
        %v880 = vmul.f32 %v879, %v268
        %v881 = vmul.f32 %v879, %v269
        %v882 = vmul.f32 %v879, %v270
        %v886 = vrot.slane %v880, 1
        %v887 = vrot.slane %v881, 1
        %v888 = vsel %vm560, %v886, %v887
        %v889 = vrot.slane %v882, 1
        %v890 = vsel %vm560, %v887, %v889
        %891 = vrot.lane.b32.xlu0 %v888, 126
        %v892 = vpop.permute.xlu0 %891
        %893 = vrot.lane.b32.xlu0 %v890, 126
        %v894 = vpop.permute.xlu0 %893
        %v897 = vadd.f32 %v729, %v892
        %v898 = vadd.f32 %v730, %v894
        %s899 = sld [smem:[#allocation3 + $0x4d]]
        %v900 = vstv %s899
        %v901 = vmul.f32 %v900, %v268
        %v902 = vmul.f32 %v900, %v269
        %v903 = vmul.f32 %v900, %v270
        %v907 = vrot.slane %v901, 1
        %v908 = vrot.slane %v902, 1
        %v909 = vsel %vm560, %v907, %v908
        %v910 = vrot.slane %v903, 1
        %v911 = vsel %vm560, %v908, %v910
        %912 = vrot.lane.b32.xlu0 %v909, 126
        %v913 = vpop.permute.xlu0 %912
        %914 = vrot.lane.b32.xlu0 %v911, 126
        %v915 = vpop.permute.xlu0 %914
        %v918 = vadd.f32 %v750, %v913
        %v919 = vadd.f32 %v751, %v915
        %s920 = sld [smem:[#allocation3 + $0x71]]
        %v921 = vstv %s920
        %v922 = vmul.f32 %v921, %v268
        %v923 = vmul.f32 %v921, %v269
        %v924 = vmul.f32 %v921, %v270
        %v928 = vrot.slane %v922, 1
        %v929 = vrot.slane %v923, 1
        %v930 = vsel %vm560, %v928, %v929
        %v931 = vrot.slane %v924, 1
        %v932 = vsel %vm560, %v929, %v931
        %933 = vrot.lane.b32.xlu0 %v930, 126
        %v934 = vpop.permute.xlu0 %933
        %935 = vrot.lane.b32.xlu0 %v932, 126
        %v936 = vpop.permute.xlu0 %935
        %v939 = vadd.f32 %v771, %v934
        %v940 = vadd.f32 %v772, %v936
        %s941 = sld [smem:[#allocation3 + $0x95]]
        %v942 = vstv %s941
        %v943 = vmul.f32 %v942, %v268
        %v944 = vmul.f32 %v942, %v269
        %v945 = vmul.f32 %v942, %v270
        %v949 = vrot.slane %v943, 1
        %v950 = vrot.slane %v944, 1
        %v951 = vsel %vm560, %v949, %v950
        %v952 = vrot.slane %v945, 1
        %v953 = vsel %vm560, %v950, %v952
        %954 = vrot.lane.b32.xlu0 %v951, 126
        %v955 = vpop.permute.xlu0 %954
        %956 = vrot.lane.b32.xlu0 %v953, 126
        %v957 = vpop.permute.xlu0 %956
        %v960 = vadd.f32 %v792, %v955
        %v961 = vadd.f32 %v793, %v957
        %s962 = sld [smem:[#allocation3 + $0xb9]]
        %v963 = vstv %s962
        %v964 = vmul.f32 %v963, %v268
        %v965 = vmul.f32 %v963, %v269
        %v966 = vmul.f32 %v963, %v270
        %v970 = vrot.slane %v964, 1
        %v971 = vrot.slane %v965, 1
        %v972 = vsel %vm560, %v970, %v971
        %v973 = vrot.slane %v966, 1
        %v974 = vsel %vm560, %v971, %v973
        %975 = vrot.lane.b32.xlu0 %v972, 126
        %v976 = vpop.permute.xlu0 %975
        %977 = vrot.lane.b32.xlu0 %v974, 126
        %v978 = vpop.permute.xlu0 %977
        %v981 = vadd.f32 %v813, %v976
        %v982 = vadd.f32 %v814, %v978
        %s983 = sld [smem:[#allocation3 + $0xdd]]
        %v984 = vstv %s983
        %v985 = vmul.f32 %v984, %v268
        %v986 = vmul.f32 %v984, %v269
        %v987 = vmul.f32 %v984, %v270
        %v991 = vrot.slane %v985, 1
        %v992 = vrot.slane %v986, 1
        %v993 = vsel %vm560, %v991, %v992
        %v994 = vrot.slane %v987, 1
        %v995 = vsel %vm560, %v992, %v994
        %996 = vrot.lane.b32.xlu0 %v993, 126
        %v997 = vpop.permute.xlu0 %996
        %998 = vrot.lane.b32.xlu0 %v995, 126
        %v999 = vpop.permute.xlu0 %998
        %v1002 = vadd.f32 %v834, %v997
        %v1003 = vadd.f32 %v835, %v999
        %s1004 = sld [smem:[#allocation3 + $0x101]]
        %v1005 = vstv %s1004
        %v1006 = vmul.f32 %v1005, %v268
        %v1007 = vmul.f32 %v1005, %v269
        %v1008 = vmul.f32 %v1005, %v270
        %v1012 = vrot.slane %v1006, 1
        %v1013 = vrot.slane %v1007, 1
        %v1014 = vsel %vm560, %v1012, %v1013
        %v1015 = vrot.slane %v1008, 1
        %v1016 = vsel %vm560, %v1013, %v1015
        %1017 = vrot.lane.b32.xlu0 %v1014, 126
        %v1018 = vpop.permute.xlu0 %1017
        %1019 = vrot.lane.b32.xlu0 %v1016, 126
        %v1020 = vpop.permute.xlu0 %1019
        %v1023 = vadd.f32 %v855, %v1018
        %v1024 = vadd.f32 %v856, %v1020
        %s1025 = sld [smem:[#allocation3 + $0x6]]
        %v1026 = vstv %s1025
        %v1027 = vmul.f32 %v1026, %v268
        %v1028 = vmul.f32 %v1026, %v269
        %v1029 = vmul.f32 %v1026, %v270
        %vm1033 = vcmask 1045504
        %v1034 = vrot.slane %v1027, 2
        %v1035 = vrot.slane %v1028, 2
        %v1036 = vsel %vm1033, %v1034, %v1035
        %v1037 = vrot.slane %v1029, 2
        %v1038 = vsel %vm1033, %v1035, %v1037
        %v1041 = vadd.f32 %v876, %v1036
        %v1042 = vadd.f32 %v877, %v1038
        %s1043 = sld [smem:[#allocation3 + $0x2a]]
        %v1044 = vstv %s1043
        %v1045 = vmul.f32 %v1044, %v268
        %v1046 = vmul.f32 %v1044, %v269
        %v1047 = vmul.f32 %v1044, %v270
        %v1051 = vrot.slane %v1045, 2
        %v1052 = vrot.slane %v1046, 2
        %v1053 = vsel %vm1033, %v1051, %v1052
        %v1054 = vrot.slane %v1047, 2
        %v1055 = vsel %vm1033, %v1052, %v1054
        %v1058 = vadd.f32 %v897, %v1053
        %v1059 = vadd.f32 %v898, %v1055
        %s1060 = sld [smem:[#allocation3 + $0x4e]]
        %v1061 = vstv %s1060
        %v1062 = vmul.f32 %v1061, %v268
        %v1063 = vmul.f32 %v1061, %v269
        %v1064 = vmul.f32 %v1061, %v270
        %v1068 = vrot.slane %v1062, 2
        %v1069 = vrot.slane %v1063, 2
        %v1070 = vsel %vm1033, %v1068, %v1069
        %v1071 = vrot.slane %v1064, 2
        %v1072 = vsel %vm1033, %v1069, %v1071
        %v1075 = vadd.f32 %v918, %v1070
        %v1076 = vadd.f32 %v919, %v1072
        %s1077 = sld [smem:[#allocation3 + $0x72]]
        %v1078 = vstv %s1077
        %v1079 = vmul.f32 %v1078, %v268
        %v1080 = vmul.f32 %v1078, %v269
        %v1081 = vmul.f32 %v1078, %v270
        %v1085 = vrot.slane %v1079, 2
        %v1086 = vrot.slane %v1080, 2
        %v1087 = vsel %vm1033, %v1085, %v1086
        %v1088 = vrot.slane %v1081, 2
        %v1089 = vsel %vm1033, %v1086, %v1088
        %v1092 = vadd.f32 %v939, %v1087
        %v1093 = vadd.f32 %v940, %v1089
        %s1094 = sld [smem:[#allocation3 + $0x96]]
        %v1095 = vstv %s1094
        %v1096 = vmul.f32 %v1095, %v268
        %v1097 = vmul.f32 %v1095, %v269
        %v1098 = vmul.f32 %v1095, %v270
        %v1102 = vrot.slane %v1096, 2
        %v1103 = vrot.slane %v1097, 2
        %v1104 = vsel %vm1033, %v1102, %v1103
        %v1105 = vrot.slane %v1098, 2
        %v1106 = vsel %vm1033, %v1103, %v1105
        %v1109 = vadd.f32 %v960, %v1104
        %v1110 = vadd.f32 %v961, %v1106
        %s1111 = sld [smem:[#allocation3 + $0xba]]
        %v1112 = vstv %s1111
        %v1113 = vmul.f32 %v1112, %v268
        %v1114 = vmul.f32 %v1112, %v269
        %v1115 = vmul.f32 %v1112, %v270
        %v1119 = vrot.slane %v1113, 2
        %v1120 = vrot.slane %v1114, 2
        %v1121 = vsel %vm1033, %v1119, %v1120
        %v1122 = vrot.slane %v1115, 2
        %v1123 = vsel %vm1033, %v1120, %v1122
        %v1126 = vadd.f32 %v981, %v1121
        %v1127 = vadd.f32 %v982, %v1123
        %s1128 = sld [smem:[#allocation3 + $0xde]]
        %v1129 = vstv %s1128
        %v1130 = vmul.f32 %v1129, %v268
        %v1131 = vmul.f32 %v1129, %v269
        %v1132 = vmul.f32 %v1129, %v270
        %v1136 = vrot.slane %v1130, 2
        %v1137 = vrot.slane %v1131, 2
        %v1138 = vsel %vm1033, %v1136, %v1137
        %v1139 = vrot.slane %v1132, 2
        %v1140 = vsel %vm1033, %v1137, %v1139
        %v1143 = vadd.f32 %v1002, %v1138
        %v1144 = vadd.f32 %v1003, %v1140
        %s1145 = sld [smem:[#allocation3 + $0x102]]
        %v1146 = vstv %s1145
        %v1147 = vmul.f32 %v1146, %v268
        %v1148 = vmul.f32 %v1146, %v269
        %v1149 = vmul.f32 %v1146, %v270
        %v1153 = vrot.slane %v1147, 2
        %v1154 = vrot.slane %v1148, 2
        %v1155 = vsel %vm1033, %v1153, %v1154
        %v1156 = vrot.slane %v1149, 2
        %v1157 = vsel %vm1033, %v1154, %v1156
        %v1160 = vadd.f32 %v1023, %v1155
        %v1161 = vadd.f32 %v1024, %v1157
        %s1162 = sld [smem:[#allocation3 + $0x7]]
        %v1163 = vstv %s1162
        %v1164 = vmul.f32 %v1163, %v268
        %v1165 = vmul.f32 %v1163, %v269
        %v1166 = vmul.f32 %v1163, %v270
        %v1170 = vrot.slane %v1164, 2
        %v1171 = vrot.slane %v1165, 2
        %v1172 = vsel %vm1033, %v1170, %v1171
        %v1173 = vrot.slane %v1166, 2
        %v1174 = vsel %vm1033, %v1171, %v1173
        %1175 = vrot.lane.b32.xlu0 %v1172, 127
        %v1176 = vpop.permute.xlu0 %1175
        %1177 = vrot.lane.b32.xlu0 %v1174, 127
        %v1178 = vpop.permute.xlu0 %1177
        %v1181 = vadd.f32 %v1041, %v1176
        %v1182 = vadd.f32 %v1042, %v1178
        %s1183 = sld [smem:[#allocation3 + $0x2b]]
        %v1184 = vstv %s1183
        %v1185 = vmul.f32 %v1184, %v268
        %v1186 = vmul.f32 %v1184, %v269
        %v1187 = vmul.f32 %v1184, %v270
        %v1191 = vrot.slane %v1185, 2
        %v1192 = vrot.slane %v1186, 2
        %v1193 = vsel %vm1033, %v1191, %v1192
        %v1194 = vrot.slane %v1187, 2
        %v1195 = vsel %vm1033, %v1192, %v1194
        %1196 = vrot.lane.b32.xlu0 %v1193, 127
        %v1197 = vpop.permute.xlu0 %1196
        %1198 = vrot.lane.b32.xlu0 %v1195, 127
        %v1199 = vpop.permute.xlu0 %1198
        %v1202 = vadd.f32 %v1058, %v1197
        %v1203 = vadd.f32 %v1059, %v1199
        %s1204 = sld [smem:[#allocation3 + $0x4f]]
        %v1205 = vstv %s1204
        %v1206 = vmul.f32 %v1205, %v268
        %v1207 = vmul.f32 %v1205, %v269
        %v1208 = vmul.f32 %v1205, %v270
        %v1212 = vrot.slane %v1206, 2
        %v1213 = vrot.slane %v1207, 2
        %v1214 = vsel %vm1033, %v1212, %v1213
        %v1215 = vrot.slane %v1208, 2
        %v1216 = vsel %vm1033, %v1213, %v1215
        %1217 = vrot.lane.b32.xlu0 %v1214, 127
        %v1218 = vpop.permute.xlu0 %1217
        %1219 = vrot.lane.b32.xlu0 %v1216, 127
        %v1220 = vpop.permute.xlu0 %1219
        %v1223 = vadd.f32 %v1075, %v1218
        %v1224 = vadd.f32 %v1076, %v1220
        %s1225 = sld [smem:[#allocation3 + $0x73]]
        %v1226 = vstv %s1225
        %v1227 = vmul.f32 %v1226, %v268
        %v1228 = vmul.f32 %v1226, %v269
        %v1229 = vmul.f32 %v1226, %v270
        %v1233 = vrot.slane %v1227, 2
        %v1234 = vrot.slane %v1228, 2
        %v1235 = vsel %vm1033, %v1233, %v1234
        %v1236 = vrot.slane %v1229, 2
        %v1237 = vsel %vm1033, %v1234, %v1236
        %1238 = vrot.lane.b32.xlu0 %v1235, 127
        %v1239 = vpop.permute.xlu0 %1238
        %1240 = vrot.lane.b32.xlu0 %v1237, 127
        %v1241 = vpop.permute.xlu0 %1240
        %v1244 = vadd.f32 %v1092, %v1239
        %v1245 = vadd.f32 %v1093, %v1241
        %s1246 = sld [smem:[#allocation3 + $0x97]]
        %v1247 = vstv %s1246
        %v1248 = vmul.f32 %v1247, %v268
        %v1249 = vmul.f32 %v1247, %v269
        %v1250 = vmul.f32 %v1247, %v270
        %v1254 = vrot.slane %v1248, 2
        %v1255 = vrot.slane %v1249, 2
        %v1256 = vsel %vm1033, %v1254, %v1255
        %v1257 = vrot.slane %v1250, 2
        %v1258 = vsel %vm1033, %v1255, %v1257
        %1259 = vrot.lane.b32.xlu0 %v1256, 127
        %v1260 = vpop.permute.xlu0 %1259
        %1261 = vrot.lane.b32.xlu0 %v1258, 127
        %v1262 = vpop.permute.xlu0 %1261
        %v1265 = vadd.f32 %v1109, %v1260
        %v1266 = vadd.f32 %v1110, %v1262
        %s1267 = sld [smem:[#allocation3 + $0xbb]]
        %v1268 = vstv %s1267
        %v1269 = vmul.f32 %v1268, %v268
        %v1270 = vmul.f32 %v1268, %v269
        %v1271 = vmul.f32 %v1268, %v270
        %v1275 = vrot.slane %v1269, 2
        %v1276 = vrot.slane %v1270, 2
        %v1277 = vsel %vm1033, %v1275, %v1276
        %v1278 = vrot.slane %v1271, 2
        %v1279 = vsel %vm1033, %v1276, %v1278
        %1280 = vrot.lane.b32.xlu0 %v1277, 127
        %v1281 = vpop.permute.xlu0 %1280
        %1282 = vrot.lane.b32.xlu0 %v1279, 127
        %v1283 = vpop.permute.xlu0 %1282
        %v1286 = vadd.f32 %v1126, %v1281
        %v1287 = vadd.f32 %v1127, %v1283
        %s1288 = sld [smem:[#allocation3 + $0xdf]]
        %v1289 = vstv %s1288
        %v1290 = vmul.f32 %v1289, %v268
        %v1291 = vmul.f32 %v1289, %v269
        %v1292 = vmul.f32 %v1289, %v270
        %v1296 = vrot.slane %v1290, 2
        %v1297 = vrot.slane %v1291, 2
        %v1298 = vsel %vm1033, %v1296, %v1297
        %v1299 = vrot.slane %v1292, 2
        %v1300 = vsel %vm1033, %v1297, %v1299
        %1301 = vrot.lane.b32.xlu0 %v1298, 127
        %v1302 = vpop.permute.xlu0 %1301
        %1303 = vrot.lane.b32.xlu0 %v1300, 127
        %v1304 = vpop.permute.xlu0 %1303
        %v1307 = vadd.f32 %v1143, %v1302
        %v1308 = vadd.f32 %v1144, %v1304
        %s1309 = sld [smem:[#allocation3 + $0x103]]
        %v1310 = vstv %s1309
        %v1311 = vmul.f32 %v1310, %v268
        %v1312 = vmul.f32 %v1310, %v269
        %v1313 = vmul.f32 %v1310, %v270
        %v1317 = vrot.slane %v1311, 2
        %v1318 = vrot.slane %v1312, 2
        %v1319 = vsel %vm1033, %v1317, %v1318
        %v1320 = vrot.slane %v1313, 2
        %v1321 = vsel %vm1033, %v1318, %v1320
        %1322 = vrot.lane.b32.xlu0 %v1319, 127
        %v1323 = vpop.permute.xlu0 %1322
        %1324 = vrot.lane.b32.xlu0 %v1321, 127
        %v1325 = vpop.permute.xlu0 %1324
        %v1328 = vadd.f32 %v1160, %v1323
        %v1329 = vadd.f32 %v1161, %v1325
        %s1330 = sld [smem:[#allocation3 + $0x8]]
        %v1331 = vstv %s1330
        %v1332 = vmul.f32 %v1331, %v268
        %v1333 = vmul.f32 %v1331, %v269
        %v1334 = vmul.f32 %v1331, %v270
        %v1338 = vrot.slane %v1332, 2
        %v1339 = vrot.slane %v1333, 2
        %v1340 = vsel %vm1033, %v1338, %v1339
        %v1341 = vrot.slane %v1334, 2
        %v1342 = vsel %vm1033, %v1339, %v1341
        %1343 = vrot.lane.b32.xlu0 %v1340, 126
        %v1344 = vpop.permute.xlu0 %1343
        %1345 = vrot.lane.b32.xlu0 %v1342, 126
        %v1346 = vpop.permute.xlu0 %1345
        %v1349 = vadd.f32 %v1181, %v1344
        %v1350 = vadd.f32 %v1182, %v1346
        %s1351 = sld [smem:[#allocation3 + $0x2c]]
        %v1352 = vstv %s1351
        %v1353 = vmul.f32 %v1352, %v268
        %v1354 = vmul.f32 %v1352, %v269
        %v1355 = vmul.f32 %v1352, %v270
        %v1359 = vrot.slane %v1353, 2
        %v1360 = vrot.slane %v1354, 2
        %v1361 = vsel %vm1033, %v1359, %v1360
        %v1362 = vrot.slane %v1355, 2
        %v1363 = vsel %vm1033, %v1360, %v1362
        %1364 = vrot.lane.b32.xlu0 %v1361, 126
        %v1365 = vpop.permute.xlu0 %1364
        %1366 = vrot.lane.b32.xlu0 %v1363, 126
        %v1367 = vpop.permute.xlu0 %1366
        %v1370 = vadd.f32 %v1202, %v1365
        %v1371 = vadd.f32 %v1203, %v1367
        %s1372 = sld [smem:[#allocation3 + $0x50]]
        %v1373 = vstv %s1372
        %v1374 = vmul.f32 %v1373, %v268
        %v1375 = vmul.f32 %v1373, %v269
        %v1376 = vmul.f32 %v1373, %v270
        %v1380 = vrot.slane %v1374, 2
        %v1381 = vrot.slane %v1375, 2
        %v1382 = vsel %vm1033, %v1380, %v1381
        %v1383 = vrot.slane %v1376, 2
        %v1384 = vsel %vm1033, %v1381, %v1383
        %1385 = vrot.lane.b32.xlu0 %v1382, 126
        %v1386 = vpop.permute.xlu0 %1385
        %1387 = vrot.lane.b32.xlu0 %v1384, 126
        %v1388 = vpop.permute.xlu0 %1387
        %v1391 = vadd.f32 %v1223, %v1386
        %v1392 = vadd.f32 %v1224, %v1388
        %s1393 = sld [smem:[#allocation3 + $0x74]]
        %v1394 = vstv %s1393
        %v1395 = vmul.f32 %v1394, %v268
        %v1396 = vmul.f32 %v1394, %v269
        %v1397 = vmul.f32 %v1394, %v270
        %v1401 = vrot.slane %v1395, 2
        %v1402 = vrot.slane %v1396, 2
        %v1403 = vsel %vm1033, %v1401, %v1402
        %v1404 = vrot.slane %v1397, 2
        %v1405 = vsel %vm1033, %v1402, %v1404
        %1406 = vrot.lane.b32.xlu0 %v1403, 126
        %v1407 = vpop.permute.xlu0 %1406
        %1408 = vrot.lane.b32.xlu0 %v1405, 126
        %v1409 = vpop.permute.xlu0 %1408
        %v1412 = vadd.f32 %v1244, %v1407
        %v1413 = vadd.f32 %v1245, %v1409
        %s1414 = sld [smem:[#allocation3 + $0x98]]
        %v1415 = vstv %s1414
        %v1416 = vmul.f32 %v1415, %v268
        %v1417 = vmul.f32 %v1415, %v269
        %v1418 = vmul.f32 %v1415, %v270
        %v1422 = vrot.slane %v1416, 2
        %v1423 = vrot.slane %v1417, 2
        %v1424 = vsel %vm1033, %v1422, %v1423
        %v1425 = vrot.slane %v1418, 2
        %v1426 = vsel %vm1033, %v1423, %v1425
        %1427 = vrot.lane.b32.xlu0 %v1424, 126
        %v1428 = vpop.permute.xlu0 %1427
        %1429 = vrot.lane.b32.xlu0 %v1426, 126
        %v1430 = vpop.permute.xlu0 %1429
        %v1433 = vadd.f32 %v1265, %v1428
        %v1434 = vadd.f32 %v1266, %v1430
        %s1435 = sld [smem:[#allocation3 + $0xbc]]
        %v1436 = vstv %s1435
        %v1437 = vmul.f32 %v1436, %v268
        %v1438 = vmul.f32 %v1436, %v269
        %v1439 = vmul.f32 %v1436, %v270
        %v1443 = vrot.slane %v1437, 2
        %v1444 = vrot.slane %v1438, 2
        %v1445 = vsel %vm1033, %v1443, %v1444
        %v1446 = vrot.slane %v1439, 2
        %v1447 = vsel %vm1033, %v1444, %v1446
        %1448 = vrot.lane.b32.xlu0 %v1445, 126
        %v1449 = vpop.permute.xlu0 %1448
        %1450 = vrot.lane.b32.xlu0 %v1447, 126
        %v1451 = vpop.permute.xlu0 %1450
        %v1454 = vadd.f32 %v1286, %v1449
        %v1455 = vadd.f32 %v1287, %v1451
        %s1456 = sld [smem:[#allocation3 + $0xe0]]
        %v1457 = vstv %s1456
        %v1458 = vmul.f32 %v1457, %v268
        %v1459 = vmul.f32 %v1457, %v269
        %v1460 = vmul.f32 %v1457, %v270
        %v1464 = vrot.slane %v1458, 2
        %v1465 = vrot.slane %v1459, 2
        %v1466 = vsel %vm1033, %v1464, %v1465
        %v1467 = vrot.slane %v1460, 2
        %v1468 = vsel %vm1033, %v1465, %v1467
        %1469 = vrot.lane.b32.xlu0 %v1466, 126
        %v1470 = vpop.permute.xlu0 %1469
        %1471 = vrot.lane.b32.xlu0 %v1468, 126
        %v1472 = vpop.permute.xlu0 %1471
        %v1475 = vadd.f32 %v1307, %v1470
        %v1476 = vadd.f32 %v1308, %v1472
        %s1477 = sld [smem:[#allocation3 + $0x104]]
        %v1478 = vstv %s1477
        %v1479 = vmul.f32 %v1478, %v268
        %v1480 = vmul.f32 %v1478, %v269
        %v1481 = vmul.f32 %v1478, %v270
        %v1485 = vrot.slane %v1479, 2
        %v1486 = vrot.slane %v1480, 2
        %v1487 = vsel %vm1033, %v1485, %v1486
        %v1488 = vrot.slane %v1481, 2
        %v1489 = vsel %vm1033, %v1486, %v1488
        %1490 = vrot.lane.b32.xlu0 %v1487, 126
        %v1491 = vpop.permute.xlu0 %1490
        %1492 = vrot.lane.b32.xlu0 %v1489, 126
        %v1493 = vpop.permute.xlu0 %1492
        %v1496 = vadd.f32 %v1328, %v1491
        %v1497 = vadd.f32 %v1329, %v1493
        %s1498 = sld [smem:[#allocation3 + $0x9]]
        %v1499 = vstv %s1498
        %v1500 = vmul.f32 %v1499, %v271
        %v1501 = vmul.f32 %v1499, %v272
        %v1502 = vadd.f32 %v1349, %v1500
        %v1503 = vadd.f32 %v1350, %v1501
        %s1504 = sld [smem:[#allocation3 + $0x2d]]
        %v1505 = vstv %s1504
        %v1506 = vmul.f32 %v1505, %v271
        %v1507 = vmul.f32 %v1505, %v272
        %v1508 = vadd.f32 %v1370, %v1506
        %v1509 = vadd.f32 %v1371, %v1507
        %s1510 = sld [smem:[#allocation3 + $0x51]]
        %v1511 = vstv %s1510
        %v1512 = vmul.f32 %v1511, %v271
        %v1513 = vmul.f32 %v1511, %v272
        %v1514 = vadd.f32 %v1391, %v1512
        %v1515 = vadd.f32 %v1392, %v1513
        %s1516 = sld [smem:[#allocation3 + $0x75]]
        %v1517 = vstv %s1516
        %v1518 = vmul.f32 %v1517, %v271
        %v1519 = vmul.f32 %v1517, %v272
        %v1520 = vadd.f32 %v1412, %v1518
        %v1521 = vadd.f32 %v1413, %v1519
        %s1522 = sld [smem:[#allocation3 + $0x99]]
        %v1523 = vstv %s1522
        %v1524 = vmul.f32 %v1523, %v271
        %v1525 = vmul.f32 %v1523, %v272
        %v1526 = vadd.f32 %v1433, %v1524
        %v1527 = vadd.f32 %v1434, %v1525
        %s1528 = sld [smem:[#allocation3 + $0xbd]]
        %v1529 = vstv %s1528
        %v1530 = vmul.f32 %v1529, %v271
        %v1531 = vmul.f32 %v1529, %v272
        %v1532 = vadd.f32 %v1454, %v1530
        %v1533 = vadd.f32 %v1455, %v1531
        %s1534 = sld [smem:[#allocation3 + $0xe1]]
        %v1535 = vstv %s1534
        %v1536 = vmul.f32 %v1535, %v271
        %v1537 = vmul.f32 %v1535, %v272
        %v1538 = vadd.f32 %v1475, %v1536
        %v1539 = vadd.f32 %v1476, %v1537
        %s1540 = sld [smem:[#allocation3 + $0x105]]
        %v1541 = vstv %s1540
        %v1542 = vmul.f32 %v1541, %v271
        %v1543 = vmul.f32 %v1541, %v272
        %v1544 = vadd.f32 %v1496, %v1542
        %v1545 = vadd.f32 %v1497, %v1543
        %s1546 = sld [smem:[#allocation3 + $0xa]]
        %v1547 = vstv %s1546
        %v1548 = vmul.f32 %v1547, %v271
        %v1549 = vmul.f32 %v1547, %v272
        %1552 = vrot.lane.b32.xlu0 %v1548, 127
        %v1553 = vpop.permute.xlu0 %1552
        %1554 = vrot.lane.b32.xlu0 %v1549, 127
        %v1555 = vpop.permute.xlu0 %1554
        %v1558 = vadd.f32 %v1502, %v1553
        %v1559 = vadd.f32 %v1503, %v1555
        %s1560 = sld [smem:[#allocation3 + $0x2e]]
        %v1561 = vstv %s1560
        %v1562 = vmul.f32 %v1561, %v271
        %v1563 = vmul.f32 %v1561, %v272
        %1566 = vrot.lane.b32.xlu0 %v1562, 127
        %v1567 = vpop.permute.xlu0 %1566
        %1568 = vrot.lane.b32.xlu0 %v1563, 127
        %v1569 = vpop.permute.xlu0 %1568
        %v1572 = vadd.f32 %v1508, %v1567
        %v1573 = vadd.f32 %v1509, %v1569
        %s1574 = sld [smem:[#allocation3 + $0x52]]
        %v1575 = vstv %s1574
        %v1576 = vmul.f32 %v1575, %v271
        %v1577 = vmul.f32 %v1575, %v272
        %1580 = vrot.lane.b32.xlu0 %v1576, 127
        %v1581 = vpop.permute.xlu0 %1580
        %1582 = vrot.lane.b32.xlu0 %v1577, 127
        %v1583 = vpop.permute.xlu0 %1582
        %v1586 = vadd.f32 %v1514, %v1581
        %v1587 = vadd.f32 %v1515, %v1583
        %s1588 = sld [smem:[#allocation3 + $0x76]]
        %v1589 = vstv %s1588
        %v1590 = vmul.f32 %v1589, %v271
        %v1591 = vmul.f32 %v1589, %v272
        %1594 = vrot.lane.b32.xlu0 %v1590, 127
        %v1595 = vpop.permute.xlu0 %1594
        %1596 = vrot.lane.b32.xlu0 %v1591, 127
        %v1597 = vpop.permute.xlu0 %1596
        %v1600 = vadd.f32 %v1520, %v1595
        %v1601 = vadd.f32 %v1521, %v1597
        %s1602 = sld [smem:[#allocation3 + $0x9a]]
        %v1603 = vstv %s1602
        %v1604 = vmul.f32 %v1603, %v271
        %v1605 = vmul.f32 %v1603, %v272
        %1608 = vrot.lane.b32.xlu0 %v1604, 127
        %v1609 = vpop.permute.xlu0 %1608
        %1610 = vrot.lane.b32.xlu0 %v1605, 127
        %v1611 = vpop.permute.xlu0 %1610
        %v1614 = vadd.f32 %v1526, %v1609
        %v1615 = vadd.f32 %v1527, %v1611
        %s1616 = sld [smem:[#allocation3 + $0xbe]]
        %v1617 = vstv %s1616
        %v1618 = vmul.f32 %v1617, %v271
        %v1619 = vmul.f32 %v1617, %v272
        %1622 = vrot.lane.b32.xlu0 %v1618, 127
        %v1623 = vpop.permute.xlu0 %1622
        %1624 = vrot.lane.b32.xlu0 %v1619, 127
        %v1625 = vpop.permute.xlu0 %1624
        %v1628 = vadd.f32 %v1532, %v1623
        %v1629 = vadd.f32 %v1533, %v1625
        %s1630 = sld [smem:[#allocation3 + $0xe2]]
        %v1631 = vstv %s1630
        %v1632 = vmul.f32 %v1631, %v271
        %v1633 = vmul.f32 %v1631, %v272
        %1636 = vrot.lane.b32.xlu0 %v1632, 127
        %v1637 = vpop.permute.xlu0 %1636
        %1638 = vrot.lane.b32.xlu0 %v1633, 127
        %v1639 = vpop.permute.xlu0 %1638
        %v1642 = vadd.f32 %v1538, %v1637
        %v1643 = vadd.f32 %v1539, %v1639
        %s1644 = sld [smem:[#allocation3 + $0x106]]
        %v1645 = vstv %s1644
        %v1646 = vmul.f32 %v1645, %v271
        %v1647 = vmul.f32 %v1645, %v272
        %1650 = vrot.lane.b32.xlu0 %v1646, 127
        %v1651 = vpop.permute.xlu0 %1650
        %1652 = vrot.lane.b32.xlu0 %v1647, 127
        %v1653 = vpop.permute.xlu0 %1652
        %v1656 = vadd.f32 %v1544, %v1651
        %v1657 = vadd.f32 %v1545, %v1653
        %s1658 = sld [smem:[#allocation3 + $0xb]]
        %v1659 = vstv %s1658
        %v1660 = vmul.f32 %v1659, %v271
        %v1661 = vmul.f32 %v1659, %v272
        %1664 = vrot.lane.b32.xlu0 %v1660, 126
        %v1665 = vpop.permute.xlu0 %1664
        %1666 = vrot.lane.b32.xlu0 %v1661, 126
        %v1667 = vpop.permute.xlu0 %1666
        %v1670 = vadd.f32 %v1558, %v1665
        %v1671 = vadd.f32 %v1559, %v1667
        %s1672 = sld [smem:[#allocation3 + $0x2f]]
        %v1673 = vstv %s1672
        %v1674 = vmul.f32 %v1673, %v271
        %v1675 = vmul.f32 %v1673, %v272
        %1678 = vrot.lane.b32.xlu0 %v1674, 126
        %v1679 = vpop.permute.xlu0 %1678
        %1680 = vrot.lane.b32.xlu0 %v1675, 126
        %v1681 = vpop.permute.xlu0 %1680
        %v1684 = vadd.f32 %v1572, %v1679
        %v1685 = vadd.f32 %v1573, %v1681
        %s1686 = sld [smem:[#allocation3 + $0x53]]
        %v1687 = vstv %s1686
        %v1688 = vmul.f32 %v1687, %v271
        %v1689 = vmul.f32 %v1687, %v272
        %1692 = vrot.lane.b32.xlu0 %v1688, 126
        %v1693 = vpop.permute.xlu0 %1692
        %1694 = vrot.lane.b32.xlu0 %v1689, 126
        %v1695 = vpop.permute.xlu0 %1694
        %v1698 = vadd.f32 %v1586, %v1693
        %v1699 = vadd.f32 %v1587, %v1695
        %s1700 = sld [smem:[#allocation3 + $0x77]]
        %v1701 = vstv %s1700
        %v1702 = vmul.f32 %v1701, %v271
        %v1703 = vmul.f32 %v1701, %v272
        %1706 = vrot.lane.b32.xlu0 %v1702, 126
        %v1707 = vpop.permute.xlu0 %1706
        %1708 = vrot.lane.b32.xlu0 %v1703, 126
        %v1709 = vpop.permute.xlu0 %1708
        %v1712 = vadd.f32 %v1600, %v1707
        %v1713 = vadd.f32 %v1601, %v1709
        %s1714 = sld [smem:[#allocation3 + $0x9b]]
        %v1715 = vstv %s1714
        %v1716 = vmul.f32 %v1715, %v271
        %v1717 = vmul.f32 %v1715, %v272
        %1720 = vrot.lane.b32.xlu0 %v1716, 126
        %v1721 = vpop.permute.xlu0 %1720
        %1722 = vrot.lane.b32.xlu0 %v1717, 126
        %v1723 = vpop.permute.xlu0 %1722
        %v1726 = vadd.f32 %v1614, %v1721
        %v1727 = vadd.f32 %v1615, %v1723
        %s1728 = sld [smem:[#allocation3 + $0xbf]]
        %v1729 = vstv %s1728
        %v1730 = vmul.f32 %v1729, %v271
        %v1731 = vmul.f32 %v1729, %v272
        %1734 = vrot.lane.b32.xlu0 %v1730, 126
        %v1735 = vpop.permute.xlu0 %1734
        %1736 = vrot.lane.b32.xlu0 %v1731, 126
        %v1737 = vpop.permute.xlu0 %1736
        %v1740 = vadd.f32 %v1628, %v1735
        %v1741 = vadd.f32 %v1629, %v1737
        %s1742 = sld [smem:[#allocation3 + $0xe3]]
        %v1743 = vstv %s1742
        %v1744 = vmul.f32 %v1743, %v271
        %v1745 = vmul.f32 %v1743, %v272
        %1748 = vrot.lane.b32.xlu0 %v1744, 126
        %v1749 = vpop.permute.xlu0 %1748
        %1750 = vrot.lane.b32.xlu0 %v1745, 126
        %v1751 = vpop.permute.xlu0 %1750
        %v1754 = vadd.f32 %v1642, %v1749
        %v1755 = vadd.f32 %v1643, %v1751
        %s1756 = sld [smem:[#allocation3 + $0x107]]
        %v1757 = vstv %s1756
        %v1758 = vmul.f32 %v1757, %v271
        %v1759 = vmul.f32 %v1757, %v272
        %1762 = vrot.lane.b32.xlu0 %v1758, 126
        %v1763 = vpop.permute.xlu0 %1762
        %1764 = vrot.lane.b32.xlu0 %v1759, 126
        %v1765 = vpop.permute.xlu0 %1764
        %v1768 = vadd.f32 %v1656, %v1763
        %v1769 = vadd.f32 %v1657, %v1765
        %s1770 = sld [smem:[#allocation3 + $0xc]]
        %v1771 = vstv %s1770
        %v1772 = vmul.f32 %v1771, %v271
        %v1773 = vmul.f32 %v1771, %v272
        %v1774 = vmul.f32 %v1771, %v273
        %v1778 = vrot.slane %v1772, 1
        %v1779 = vrot.slane %v1773, 1
        %v1780 = vsel %vm560, %v1778, %v1779
        %v1781 = vrot.slane %v1774, 1
        %v1782 = vsel %vm560, %v1779, %v1781
        %v1785 = vadd.f32 %v1670, %v1780
        %v1786 = vadd.f32 %v1671, %v1782
        %s1787 = sld [smem:[#allocation3 + $0x30]]
        %v1788 = vstv %s1787
        %v1789 = vmul.f32 %v1788, %v271
        %v1790 = vmul.f32 %v1788, %v272
        %v1791 = vmul.f32 %v1788, %v273
        %v1795 = vrot.slane %v1789, 1
        %v1796 = vrot.slane %v1790, 1
        %v1797 = vsel %vm560, %v1795, %v1796
        %v1798 = vrot.slane %v1791, 1
        %v1799 = vsel %vm560, %v1796, %v1798
        %v1802 = vadd.f32 %v1684, %v1797
        %v1803 = vadd.f32 %v1685, %v1799
        %s1804 = sld [smem:[#allocation3 + $0x54]]
        %v1805 = vstv %s1804
        %v1806 = vmul.f32 %v1805, %v271
        %v1807 = vmul.f32 %v1805, %v272
        %v1808 = vmul.f32 %v1805, %v273
        %v1812 = vrot.slane %v1806, 1
        %v1813 = vrot.slane %v1807, 1
        %v1814 = vsel %vm560, %v1812, %v1813
        %v1815 = vrot.slane %v1808, 1
        %v1816 = vsel %vm560, %v1813, %v1815
        %v1819 = vadd.f32 %v1698, %v1814
        %v1820 = vadd.f32 %v1699, %v1816
        %s1821 = sld [smem:[#allocation3 + $0x78]]
        %v1822 = vstv %s1821
        %v1823 = vmul.f32 %v1822, %v271
        %v1824 = vmul.f32 %v1822, %v272
        %v1825 = vmul.f32 %v1822, %v273
        %v1829 = vrot.slane %v1823, 1
        %v1830 = vrot.slane %v1824, 1
        %v1831 = vsel %vm560, %v1829, %v1830
        %v1832 = vrot.slane %v1825, 1
        %v1833 = vsel %vm560, %v1830, %v1832
        %v1836 = vadd.f32 %v1712, %v1831
        %v1837 = vadd.f32 %v1713, %v1833
        %s1838 = sld [smem:[#allocation3 + $0x9c]]
        %v1839 = vstv %s1838
        %v1840 = vmul.f32 %v1839, %v271
        %v1841 = vmul.f32 %v1839, %v272
        %v1842 = vmul.f32 %v1839, %v273
        %v1846 = vrot.slane %v1840, 1
        %v1847 = vrot.slane %v1841, 1
        %v1848 = vsel %vm560, %v1846, %v1847
        %v1849 = vrot.slane %v1842, 1
        %v1850 = vsel %vm560, %v1847, %v1849
        %v1853 = vadd.f32 %v1726, %v1848
        %v1854 = vadd.f32 %v1727, %v1850
        %s1855 = sld [smem:[#allocation3 + $0xc0]]
        %v1856 = vstv %s1855
        %v1857 = vmul.f32 %v1856, %v271
        %v1858 = vmul.f32 %v1856, %v272
        %v1859 = vmul.f32 %v1856, %v273
        %v1863 = vrot.slane %v1857, 1
        %v1864 = vrot.slane %v1858, 1
        %v1865 = vsel %vm560, %v1863, %v1864
        %v1866 = vrot.slane %v1859, 1
        %v1867 = vsel %vm560, %v1864, %v1866
        %v1870 = vadd.f32 %v1740, %v1865
        %v1871 = vadd.f32 %v1741, %v1867
        %s1872 = sld [smem:[#allocation3 + $0xe4]]
        %v1873 = vstv %s1872
        %v1874 = vmul.f32 %v1873, %v271
        %v1875 = vmul.f32 %v1873, %v272
        %v1876 = vmul.f32 %v1873, %v273
        %v1880 = vrot.slane %v1874, 1
        %v1881 = vrot.slane %v1875, 1
        %v1882 = vsel %vm560, %v1880, %v1881
        %v1883 = vrot.slane %v1876, 1
        %v1884 = vsel %vm560, %v1881, %v1883
        %v1887 = vadd.f32 %v1754, %v1882
        %v1888 = vadd.f32 %v1755, %v1884
        %s1889 = sld [smem:[#allocation3 + $0x108]]
        %v1890 = vstv %s1889
        %v1891 = vmul.f32 %v1890, %v271
        %v1892 = vmul.f32 %v1890, %v272
        %v1893 = vmul.f32 %v1890, %v273
        %v1897 = vrot.slane %v1891, 1
        %v1898 = vrot.slane %v1892, 1
        %v1899 = vsel %vm560, %v1897, %v1898
        %v1900 = vrot.slane %v1893, 1
        %v1901 = vsel %vm560, %v1898, %v1900
        %v1904 = vadd.f32 %v1768, %v1899
        %v1905 = vadd.f32 %v1769, %v1901
        %s1906 = sld [smem:[#allocation3 + $0xd]]
        %v1907 = vstv %s1906
        %v1908 = vmul.f32 %v1907, %v271
        %v1909 = vmul.f32 %v1907, %v272
        %v1910 = vmul.f32 %v1907, %v273
        %v1914 = vrot.slane %v1908, 1
        %v1915 = vrot.slane %v1909, 1
        %v1916 = vsel %vm560, %v1914, %v1915
        %v1917 = vrot.slane %v1910, 1
        %v1918 = vsel %vm560, %v1915, %v1917
        %1919 = vrot.lane.b32.xlu0 %v1916, 127
        %v1920 = vpop.permute.xlu0 %1919
        %1921 = vrot.lane.b32.xlu0 %v1918, 127
        %v1922 = vpop.permute.xlu0 %1921
        %v1925 = vadd.f32 %v1785, %v1920
        %v1926 = vadd.f32 %v1786, %v1922
        %s1927 = sld [smem:[#allocation3 + $0x31]]
        %v1928 = vstv %s1927
        %v1929 = vmul.f32 %v1928, %v271
        %v1930 = vmul.f32 %v1928, %v272
        %v1931 = vmul.f32 %v1928, %v273
        %v1935 = vrot.slane %v1929, 1
        %v1936 = vrot.slane %v1930, 1
        %v1937 = vsel %vm560, %v1935, %v1936
        %v1938 = vrot.slane %v1931, 1
        %v1939 = vsel %vm560, %v1936, %v1938
        %1940 = vrot.lane.b32.xlu0 %v1937, 127
        %v1941 = vpop.permute.xlu0 %1940
        %1942 = vrot.lane.b32.xlu0 %v1939, 127
        %v1943 = vpop.permute.xlu0 %1942
        %v1946 = vadd.f32 %v1802, %v1941
        %v1947 = vadd.f32 %v1803, %v1943
        %s1948 = sld [smem:[#allocation3 + $0x55]]
        %v1949 = vstv %s1948
        %v1950 = vmul.f32 %v1949, %v271
        %v1951 = vmul.f32 %v1949, %v272
        %v1952 = vmul.f32 %v1949, %v273
        %v1956 = vrot.slane %v1950, 1
        %v1957 = vrot.slane %v1951, 1
        %v1958 = vsel %vm560, %v1956, %v1957
        %v1959 = vrot.slane %v1952, 1
        %v1960 = vsel %vm560, %v1957, %v1959
        %1961 = vrot.lane.b32.xlu0 %v1958, 127
        %v1962 = vpop.permute.xlu0 %1961
        %1963 = vrot.lane.b32.xlu0 %v1960, 127
        %v1964 = vpop.permute.xlu0 %1963
        %v1967 = vadd.f32 %v1819, %v1962
        %v1968 = vadd.f32 %v1820, %v1964
        %s1969 = sld [smem:[#allocation3 + $0x79]]
        %v1970 = vstv %s1969
        %v1971 = vmul.f32 %v1970, %v271
        %v1972 = vmul.f32 %v1970, %v272
        %v1973 = vmul.f32 %v1970, %v273
        %v1977 = vrot.slane %v1971, 1
        %v1978 = vrot.slane %v1972, 1
        %v1979 = vsel %vm560, %v1977, %v1978
        %v1980 = vrot.slane %v1973, 1
        %v1981 = vsel %vm560, %v1978, %v1980
        %1982 = vrot.lane.b32.xlu0 %v1979, 127
        %v1983 = vpop.permute.xlu0 %1982
        %1984 = vrot.lane.b32.xlu0 %v1981, 127
        %v1985 = vpop.permute.xlu0 %1984
        %v1988 = vadd.f32 %v1836, %v1983
        %v1989 = vadd.f32 %v1837, %v1985
        %s1990 = sld [smem:[#allocation3 + $0x9d]]
        %v1991 = vstv %s1990
        %v1992 = vmul.f32 %v1991, %v271
        %v1993 = vmul.f32 %v1991, %v272
        %v1994 = vmul.f32 %v1991, %v273
        %v1998 = vrot.slane %v1992, 1
        %v1999 = vrot.slane %v1993, 1
        %v2000 = vsel %vm560, %v1998, %v1999
        %v2001 = vrot.slane %v1994, 1
        %v2002 = vsel %vm560, %v1999, %v2001
        %2003 = vrot.lane.b32.xlu0 %v2000, 127
        %v2004 = vpop.permute.xlu0 %2003
        %2005 = vrot.lane.b32.xlu0 %v2002, 127
        %v2006 = vpop.permute.xlu0 %2005
        %v2009 = vadd.f32 %v1853, %v2004
        %v2010 = vadd.f32 %v1854, %v2006
        %s2011 = sld [smem:[#allocation3 + $0xc1]]
        %v2012 = vstv %s2011
        %v2013 = vmul.f32 %v2012, %v271
        %v2014 = vmul.f32 %v2012, %v272
        %v2015 = vmul.f32 %v2012, %v273
        %v2019 = vrot.slane %v2013, 1
        %v2020 = vrot.slane %v2014, 1
        %v2021 = vsel %vm560, %v2019, %v2020
        %v2022 = vrot.slane %v2015, 1
        %v2023 = vsel %vm560, %v2020, %v2022
        %2024 = vrot.lane.b32.xlu0 %v2021, 127
        %v2025 = vpop.permute.xlu0 %2024
        %2026 = vrot.lane.b32.xlu0 %v2023, 127
        %v2027 = vpop.permute.xlu0 %2026
        %v2030 = vadd.f32 %v1870, %v2025
        %v2031 = vadd.f32 %v1871, %v2027
        %s2032 = sld [smem:[#allocation3 + $0xe5]]
        %v2033 = vstv %s2032
        %v2034 = vmul.f32 %v2033, %v271
        %v2035 = vmul.f32 %v2033, %v272
        %v2036 = vmul.f32 %v2033, %v273
        %v2040 = vrot.slane %v2034, 1
        %v2041 = vrot.slane %v2035, 1
        %v2042 = vsel %vm560, %v2040, %v2041
        %v2043 = vrot.slane %v2036, 1
        %v2044 = vsel %vm560, %v2041, %v2043
        %2045 = vrot.lane.b32.xlu0 %v2042, 127
        %v2046 = vpop.permute.xlu0 %2045
        %2047 = vrot.lane.b32.xlu0 %v2044, 127
        %v2048 = vpop.permute.xlu0 %2047
        %v2051 = vadd.f32 %v1887, %v2046
        %v2052 = vadd.f32 %v1888, %v2048
        %s2053 = sld [smem:[#allocation3 + $0x109]]
        %v2054 = vstv %s2053
        %v2055 = vmul.f32 %v2054, %v271
        %v2056 = vmul.f32 %v2054, %v272
        %v2057 = vmul.f32 %v2054, %v273
        %v2061 = vrot.slane %v2055, 1
        %v2062 = vrot.slane %v2056, 1
        %v2063 = vsel %vm560, %v2061, %v2062
        %v2064 = vrot.slane %v2057, 1
        %v2065 = vsel %vm560, %v2062, %v2064
        %2066 = vrot.lane.b32.xlu0 %v2063, 127
        %v2067 = vpop.permute.xlu0 %2066
        %2068 = vrot.lane.b32.xlu0 %v2065, 127
        %v2069 = vpop.permute.xlu0 %2068
        %v2072 = vadd.f32 %v1904, %v2067
        %v2073 = vadd.f32 %v1905, %v2069
        %s2074 = sld [smem:[#allocation3 + $0xe]]
        %v2075 = vstv %s2074
        %v2076 = vmul.f32 %v2075, %v271
        %v2077 = vmul.f32 %v2075, %v272
        %v2078 = vmul.f32 %v2075, %v273
        %v2082 = vrot.slane %v2076, 1
        %v2083 = vrot.slane %v2077, 1
        %v2084 = vsel %vm560, %v2082, %v2083
        %v2085 = vrot.slane %v2078, 1
        %v2086 = vsel %vm560, %v2083, %v2085
        %2087 = vrot.lane.b32.xlu0 %v2084, 126
        %v2088 = vpop.permute.xlu0 %2087
        %2089 = vrot.lane.b32.xlu0 %v2086, 126
        %v2090 = vpop.permute.xlu0 %2089
        %v2093 = vadd.f32 %v1925, %v2088
        %v2094 = vadd.f32 %v1926, %v2090
        %s2095 = sld [smem:[#allocation3 + $0x32]]
        %v2096 = vstv %s2095
        %v2097 = vmul.f32 %v2096, %v271
        %v2098 = vmul.f32 %v2096, %v272
        %v2099 = vmul.f32 %v2096, %v273
        %v2103 = vrot.slane %v2097, 1
        %v2104 = vrot.slane %v2098, 1
        %v2105 = vsel %vm560, %v2103, %v2104
        %v2106 = vrot.slane %v2099, 1
        %v2107 = vsel %vm560, %v2104, %v2106
        %2108 = vrot.lane.b32.xlu0 %v2105, 126
        %v2109 = vpop.permute.xlu0 %2108
        %2110 = vrot.lane.b32.xlu0 %v2107, 126
        %v2111 = vpop.permute.xlu0 %2110
        %v2114 = vadd.f32 %v1946, %v2109
        %v2115 = vadd.f32 %v1947, %v2111
        %s2116 = sld [smem:[#allocation3 + $0x56]]
        %v2117 = vstv %s2116
        %v2118 = vmul.f32 %v2117, %v271
        %v2119 = vmul.f32 %v2117, %v272
        %v2120 = vmul.f32 %v2117, %v273
        %v2124 = vrot.slane %v2118, 1
        %v2125 = vrot.slane %v2119, 1
        %v2126 = vsel %vm560, %v2124, %v2125
        %v2127 = vrot.slane %v2120, 1
        %v2128 = vsel %vm560, %v2125, %v2127
        %2129 = vrot.lane.b32.xlu0 %v2126, 126
        %v2130 = vpop.permute.xlu0 %2129
        %2131 = vrot.lane.b32.xlu0 %v2128, 126
        %v2132 = vpop.permute.xlu0 %2131
        %v2135 = vadd.f32 %v1967, %v2130
        %v2136 = vadd.f32 %v1968, %v2132
        %s2137 = sld [smem:[#allocation3 + $0x7a]]
        %v2138 = vstv %s2137
        %v2139 = vmul.f32 %v2138, %v271
        %v2140 = vmul.f32 %v2138, %v272
        %v2141 = vmul.f32 %v2138, %v273
        %v2145 = vrot.slane %v2139, 1
        %v2146 = vrot.slane %v2140, 1
        %v2147 = vsel %vm560, %v2145, %v2146
        %v2148 = vrot.slane %v2141, 1
        %v2149 = vsel %vm560, %v2146, %v2148
        %2150 = vrot.lane.b32.xlu0 %v2147, 126
        %v2151 = vpop.permute.xlu0 %2150
        %2152 = vrot.lane.b32.xlu0 %v2149, 126
        %v2153 = vpop.permute.xlu0 %2152
        %v2156 = vadd.f32 %v1988, %v2151
        %v2157 = vadd.f32 %v1989, %v2153
        %s2158 = sld [smem:[#allocation3 + $0x9e]]
        %v2159 = vstv %s2158
        %v2160 = vmul.f32 %v2159, %v271
        %v2161 = vmul.f32 %v2159, %v272
        %v2162 = vmul.f32 %v2159, %v273
        %v2166 = vrot.slane %v2160, 1
        %v2167 = vrot.slane %v2161, 1
        %v2168 = vsel %vm560, %v2166, %v2167
        %v2169 = vrot.slane %v2162, 1
        %v2170 = vsel %vm560, %v2167, %v2169
        %2171 = vrot.lane.b32.xlu0 %v2168, 126
        %v2172 = vpop.permute.xlu0 %2171
        %2173 = vrot.lane.b32.xlu0 %v2170, 126
        %v2174 = vpop.permute.xlu0 %2173
        %v2177 = vadd.f32 %v2009, %v2172
        %v2178 = vadd.f32 %v2010, %v2174
        %s2179 = sld [smem:[#allocation3 + $0xc2]]
        %v2180 = vstv %s2179
        %v2181 = vmul.f32 %v2180, %v271
        %v2182 = vmul.f32 %v2180, %v272
        %v2183 = vmul.f32 %v2180, %v273
        %v2187 = vrot.slane %v2181, 1
        %v2188 = vrot.slane %v2182, 1
        %v2189 = vsel %vm560, %v2187, %v2188
        %v2190 = vrot.slane %v2183, 1
        %v2191 = vsel %vm560, %v2188, %v2190
        %2192 = vrot.lane.b32.xlu0 %v2189, 126
        %v2193 = vpop.permute.xlu0 %2192
        %2194 = vrot.lane.b32.xlu0 %v2191, 126
        %v2195 = vpop.permute.xlu0 %2194
        %v2198 = vadd.f32 %v2030, %v2193
        %v2199 = vadd.f32 %v2031, %v2195
        %s2200 = sld [smem:[#allocation3 + $0xe6]]
        %v2201 = vstv %s2200
        %v2202 = vmul.f32 %v2201, %v271
        %v2203 = vmul.f32 %v2201, %v272
        %v2204 = vmul.f32 %v2201, %v273
        %v2208 = vrot.slane %v2202, 1
        %v2209 = vrot.slane %v2203, 1
        %v2210 = vsel %vm560, %v2208, %v2209
        %v2211 = vrot.slane %v2204, 1
        %v2212 = vsel %vm560, %v2209, %v2211
        %2213 = vrot.lane.b32.xlu0 %v2210, 126
        %v2214 = vpop.permute.xlu0 %2213
        %2215 = vrot.lane.b32.xlu0 %v2212, 126
        %v2216 = vpop.permute.xlu0 %2215
        %v2219 = vadd.f32 %v2051, %v2214
        %v2220 = vadd.f32 %v2052, %v2216
        %s2221 = sld [smem:[#allocation3 + $0x10a]]
        %v2222 = vstv %s2221
        %v2223 = vmul.f32 %v2222, %v271
        %v2224 = vmul.f32 %v2222, %v272
        %v2225 = vmul.f32 %v2222, %v273
        %v2229 = vrot.slane %v2223, 1
        %v2230 = vrot.slane %v2224, 1
        %v2231 = vsel %vm560, %v2229, %v2230
        %v2232 = vrot.slane %v2225, 1
        %v2233 = vsel %vm560, %v2230, %v2232
        %2234 = vrot.lane.b32.xlu0 %v2231, 126
        %v2235 = vpop.permute.xlu0 %2234
        %2236 = vrot.lane.b32.xlu0 %v2233, 126
        %v2237 = vpop.permute.xlu0 %2236
        %v2240 = vadd.f32 %v2072, %v2235
        %v2241 = vadd.f32 %v2073, %v2237
        %s2242 = sld [smem:[#allocation3 + $0xf]]
        %v2243 = vstv %s2242
        %v2244 = vmul.f32 %v2243, %v271
        %v2245 = vmul.f32 %v2243, %v272
        %v2246 = vmul.f32 %v2243, %v273
        %v2250 = vrot.slane %v2244, 2
        %v2251 = vrot.slane %v2245, 2
        %v2252 = vsel %vm1033, %v2250, %v2251
        %v2253 = vrot.slane %v2246, 2
        %v2254 = vsel %vm1033, %v2251, %v2253
        %v2257 = vadd.f32 %v2093, %v2252
        %v2258 = vadd.f32 %v2094, %v2254
        %s2259 = sld [smem:[#allocation3 + $0x33]]
        %v2260 = vstv %s2259
        %v2261 = vmul.f32 %v2260, %v271
        %v2262 = vmul.f32 %v2260, %v272
        %v2263 = vmul.f32 %v2260, %v273
        %v2267 = vrot.slane %v2261, 2
        %v2268 = vrot.slane %v2262, 2
        %v2269 = vsel %vm1033, %v2267, %v2268
        %v2270 = vrot.slane %v2263, 2
        %v2271 = vsel %vm1033, %v2268, %v2270
        %v2274 = vadd.f32 %v2114, %v2269
        %v2275 = vadd.f32 %v2115, %v2271
        %s2276 = sld [smem:[#allocation3 + $0x57]]
        %v2277 = vstv %s2276
        %v2278 = vmul.f32 %v2277, %v271
        %v2279 = vmul.f32 %v2277, %v272
        %v2280 = vmul.f32 %v2277, %v273
        %v2284 = vrot.slane %v2278, 2
        %v2285 = vrot.slane %v2279, 2
        %v2286 = vsel %vm1033, %v2284, %v2285
        %v2287 = vrot.slane %v2280, 2
        %v2288 = vsel %vm1033, %v2285, %v2287
        %v2291 = vadd.f32 %v2135, %v2286
        %v2292 = vadd.f32 %v2136, %v2288
        %s2293 = sld [smem:[#allocation3 + $0x7b]]
        %v2294 = vstv %s2293
        %v2295 = vmul.f32 %v2294, %v271
        %v2296 = vmul.f32 %v2294, %v272
        %v2297 = vmul.f32 %v2294, %v273
        %v2301 = vrot.slane %v2295, 2
        %v2302 = vrot.slane %v2296, 2
        %v2303 = vsel %vm1033, %v2301, %v2302
        %v2304 = vrot.slane %v2297, 2
        %v2305 = vsel %vm1033, %v2302, %v2304
        %v2308 = vadd.f32 %v2156, %v2303
        %v2309 = vadd.f32 %v2157, %v2305
        %s2310 = sld [smem:[#allocation3 + $0x9f]]
        %v2311 = vstv %s2310
        %v2312 = vmul.f32 %v2311, %v271
        %v2313 = vmul.f32 %v2311, %v272
        %v2314 = vmul.f32 %v2311, %v273
        %v2318 = vrot.slane %v2312, 2
        %v2319 = vrot.slane %v2313, 2
        %v2320 = vsel %vm1033, %v2318, %v2319
        %v2321 = vrot.slane %v2314, 2
        %v2322 = vsel %vm1033, %v2319, %v2321
        %v2325 = vadd.f32 %v2177, %v2320
        %v2326 = vadd.f32 %v2178, %v2322
        %s2327 = sld [smem:[#allocation3 + $0xc3]]
        %v2328 = vstv %s2327
        %v2329 = vmul.f32 %v2328, %v271
        %v2330 = vmul.f32 %v2328, %v272
        %v2331 = vmul.f32 %v2328, %v273
        %v2335 = vrot.slane %v2329, 2
        %v2336 = vrot.slane %v2330, 2
        %v2337 = vsel %vm1033, %v2335, %v2336
        %v2338 = vrot.slane %v2331, 2
        %v2339 = vsel %vm1033, %v2336, %v2338
        %v2342 = vadd.f32 %v2198, %v2337
        %v2343 = vadd.f32 %v2199, %v2339
        %s2344 = sld [smem:[#allocation3 + $0xe7]]
        %v2345 = vstv %s2344
        %v2346 = vmul.f32 %v2345, %v271
        %v2347 = vmul.f32 %v2345, %v272
        %v2348 = vmul.f32 %v2345, %v273
        %v2352 = vrot.slane %v2346, 2
        %v2353 = vrot.slane %v2347, 2
        %v2354 = vsel %vm1033, %v2352, %v2353
        %v2355 = vrot.slane %v2348, 2
        %v2356 = vsel %vm1033, %v2353, %v2355
        %v2359 = vadd.f32 %v2219, %v2354
        %v2360 = vadd.f32 %v2220, %v2356
        %s2361 = sld [smem:[#allocation3 + $0x10b]]
        %v2362 = vstv %s2361
        %v2363 = vmul.f32 %v2362, %v271
        %v2364 = vmul.f32 %v2362, %v272
        %v2365 = vmul.f32 %v2362, %v273
        %v2369 = vrot.slane %v2363, 2
        %v2370 = vrot.slane %v2364, 2
        %v2371 = vsel %vm1033, %v2369, %v2370
        %v2372 = vrot.slane %v2365, 2
        %v2373 = vsel %vm1033, %v2370, %v2372
        %v2376 = vadd.f32 %v2240, %v2371
        %v2377 = vadd.f32 %v2241, %v2373
        %s2378 = sld [smem:[#allocation3 + $0x10]]
        %v2379 = vstv %s2378
        %v2380 = vmul.f32 %v2379, %v271
        %v2381 = vmul.f32 %v2379, %v272
        %v2382 = vmul.f32 %v2379, %v273
        %v2386 = vrot.slane %v2380, 2
        %v2387 = vrot.slane %v2381, 2
        %v2388 = vsel %vm1033, %v2386, %v2387
        %v2389 = vrot.slane %v2382, 2
        %v2390 = vsel %vm1033, %v2387, %v2389
        %2391 = vrot.lane.b32.xlu0 %v2388, 127
        %v2392 = vpop.permute.xlu0 %2391
        %2393 = vrot.lane.b32.xlu0 %v2390, 127
        %v2394 = vpop.permute.xlu0 %2393
        %v2397 = vadd.f32 %v2257, %v2392
        %v2398 = vadd.f32 %v2258, %v2394
        %s2399 = sld [smem:[#allocation3 + $0x34]]
        %v2400 = vstv %s2399
        %v2401 = vmul.f32 %v2400, %v271
        %v2402 = vmul.f32 %v2400, %v272
        %v2403 = vmul.f32 %v2400, %v273
        %v2407 = vrot.slane %v2401, 2
        %v2408 = vrot.slane %v2402, 2
        %v2409 = vsel %vm1033, %v2407, %v2408
        %v2410 = vrot.slane %v2403, 2
        %v2411 = vsel %vm1033, %v2408, %v2410
        %2412 = vrot.lane.b32.xlu0 %v2409, 127
        %v2413 = vpop.permute.xlu0 %2412
        %2414 = vrot.lane.b32.xlu0 %v2411, 127
        %v2415 = vpop.permute.xlu0 %2414
        %v2418 = vadd.f32 %v2274, %v2413
        %v2419 = vadd.f32 %v2275, %v2415
        %s2420 = sld [smem:[#allocation3 + $0x58]]
        %v2421 = vstv %s2420
        %v2422 = vmul.f32 %v2421, %v271
        %v2423 = vmul.f32 %v2421, %v272
        %v2424 = vmul.f32 %v2421, %v273
        %v2428 = vrot.slane %v2422, 2
        %v2429 = vrot.slane %v2423, 2
        %v2430 = vsel %vm1033, %v2428, %v2429
        %v2431 = vrot.slane %v2424, 2
        %v2432 = vsel %vm1033, %v2429, %v2431
        %2433 = vrot.lane.b32.xlu0 %v2430, 127
        %v2434 = vpop.permute.xlu0 %2433
        %2435 = vrot.lane.b32.xlu0 %v2432, 127
        %v2436 = vpop.permute.xlu0 %2435
        %v2439 = vadd.f32 %v2291, %v2434
        %v2440 = vadd.f32 %v2292, %v2436
        %s2441 = sld [smem:[#allocation3 + $0x7c]]
        %v2442 = vstv %s2441
        %v2443 = vmul.f32 %v2442, %v271
        %v2444 = vmul.f32 %v2442, %v272
        %v2445 = vmul.f32 %v2442, %v273
        %v2449 = vrot.slane %v2443, 2
        %v2450 = vrot.slane %v2444, 2
        %v2451 = vsel %vm1033, %v2449, %v2450
        %v2452 = vrot.slane %v2445, 2
        %v2453 = vsel %vm1033, %v2450, %v2452
        %2454 = vrot.lane.b32.xlu0 %v2451, 127
        %v2455 = vpop.permute.xlu0 %2454
        %2456 = vrot.lane.b32.xlu0 %v2453, 127
        %v2457 = vpop.permute.xlu0 %2456
        %v2460 = vadd.f32 %v2308, %v2455
        %v2461 = vadd.f32 %v2309, %v2457
        %s2462 = sld [smem:[#allocation3 + $0xa0]]
        %v2463 = vstv %s2462
        %v2464 = vmul.f32 %v2463, %v271
        %v2465 = vmul.f32 %v2463, %v272
        %v2466 = vmul.f32 %v2463, %v273
        %v2470 = vrot.slane %v2464, 2
        %v2471 = vrot.slane %v2465, 2
        %v2472 = vsel %vm1033, %v2470, %v2471
        %v2473 = vrot.slane %v2466, 2
        %v2474 = vsel %vm1033, %v2471, %v2473
        %2475 = vrot.lane.b32.xlu0 %v2472, 127
        %v2476 = vpop.permute.xlu0 %2475
        %2477 = vrot.lane.b32.xlu0 %v2474, 127
        %v2478 = vpop.permute.xlu0 %2477
        %v2481 = vadd.f32 %v2325, %v2476
        %v2482 = vadd.f32 %v2326, %v2478
        %s2483 = sld [smem:[#allocation3 + $0xc4]]
        %v2484 = vstv %s2483
        %v2485 = vmul.f32 %v2484, %v271
        %v2486 = vmul.f32 %v2484, %v272
        %v2487 = vmul.f32 %v2484, %v273
        %v2491 = vrot.slane %v2485, 2
        %v2492 = vrot.slane %v2486, 2
        %v2493 = vsel %vm1033, %v2491, %v2492
        %v2494 = vrot.slane %v2487, 2
        %v2495 = vsel %vm1033, %v2492, %v2494
        %2496 = vrot.lane.b32.xlu0 %v2493, 127
        %v2497 = vpop.permute.xlu0 %2496
        %2498 = vrot.lane.b32.xlu0 %v2495, 127
        %v2499 = vpop.permute.xlu0 %2498
        %v2502 = vadd.f32 %v2342, %v2497
        %v2503 = vadd.f32 %v2343, %v2499
        %s2504 = sld [smem:[#allocation3 + $0xe8]]
        %v2505 = vstv %s2504
        %v2506 = vmul.f32 %v2505, %v271
        %v2507 = vmul.f32 %v2505, %v272
        %v2508 = vmul.f32 %v2505, %v273
        %v2512 = vrot.slane %v2506, 2
        %v2513 = vrot.slane %v2507, 2
        %v2514 = vsel %vm1033, %v2512, %v2513
        %v2515 = vrot.slane %v2508, 2
        %v2516 = vsel %vm1033, %v2513, %v2515
        %2517 = vrot.lane.b32.xlu0 %v2514, 127
        %v2518 = vpop.permute.xlu0 %2517
        %2519 = vrot.lane.b32.xlu0 %v2516, 127
        %v2520 = vpop.permute.xlu0 %2519
        %v2523 = vadd.f32 %v2359, %v2518
        %v2524 = vadd.f32 %v2360, %v2520
        %s2525 = sld [smem:[#allocation3 + $0x10c]]
        %v2526 = vstv %s2525
        %v2527 = vmul.f32 %v2526, %v271
        %v2528 = vmul.f32 %v2526, %v272
        %v2529 = vmul.f32 %v2526, %v273
        %v2533 = vrot.slane %v2527, 2
        %v2534 = vrot.slane %v2528, 2
        %v2535 = vsel %vm1033, %v2533, %v2534
        %v2536 = vrot.slane %v2529, 2
        %v2537 = vsel %vm1033, %v2534, %v2536
        %2538 = vrot.lane.b32.xlu0 %v2535, 127
        %v2539 = vpop.permute.xlu0 %2538
        %2540 = vrot.lane.b32.xlu0 %v2537, 127
        %v2541 = vpop.permute.xlu0 %2540
        %v2544 = vadd.f32 %v2376, %v2539
        %v2545 = vadd.f32 %v2377, %v2541
        %s2546 = sld [smem:[#allocation3 + $0x11]]
        %v2547 = vstv %s2546
        %v2548 = vmul.f32 %v2547, %v271
        %v2549 = vmul.f32 %v2547, %v272
        %v2550 = vmul.f32 %v2547, %v273
        %v2554 = vrot.slane %v2548, 2
        %v2555 = vrot.slane %v2549, 2
        %v2556 = vsel %vm1033, %v2554, %v2555
        %v2557 = vrot.slane %v2550, 2
        %v2558 = vsel %vm1033, %v2555, %v2557
        %2559 = vrot.lane.b32.xlu0 %v2556, 126
        %v2560 = vpop.permute.xlu0 %2559
        %2561 = vrot.lane.b32.xlu0 %v2558, 126
        %v2562 = vpop.permute.xlu0 %2561
        %v2565 = vadd.f32 %v2397, %v2560
        %v2566 = vadd.f32 %v2398, %v2562
        %s2567 = sld [smem:[#allocation3 + $0x35]]
        %v2568 = vstv %s2567
        %v2569 = vmul.f32 %v2568, %v271
        %v2570 = vmul.f32 %v2568, %v272
        %v2571 = vmul.f32 %v2568, %v273
        %v2575 = vrot.slane %v2569, 2
        %v2576 = vrot.slane %v2570, 2
        %v2577 = vsel %vm1033, %v2575, %v2576
        %v2578 = vrot.slane %v2571, 2
        %v2579 = vsel %vm1033, %v2576, %v2578
        %2580 = vrot.lane.b32.xlu0 %v2577, 126
        %v2581 = vpop.permute.xlu0 %2580
        %2582 = vrot.lane.b32.xlu0 %v2579, 126
        %v2583 = vpop.permute.xlu0 %2582
        %v2586 = vadd.f32 %v2418, %v2581
        %v2587 = vadd.f32 %v2419, %v2583
        %s2588 = sld [smem:[#allocation3 + $0x59]]
        %v2589 = vstv %s2588
        %v2590 = vmul.f32 %v2589, %v271
        %v2591 = vmul.f32 %v2589, %v272
        %v2592 = vmul.f32 %v2589, %v273
        %v2596 = vrot.slane %v2590, 2
        %v2597 = vrot.slane %v2591, 2
        %v2598 = vsel %vm1033, %v2596, %v2597
        %v2599 = vrot.slane %v2592, 2
        %v2600 = vsel %vm1033, %v2597, %v2599
        %2601 = vrot.lane.b32.xlu0 %v2598, 126
        %v2602 = vpop.permute.xlu0 %2601
        %2603 = vrot.lane.b32.xlu0 %v2600, 126
        %v2604 = vpop.permute.xlu0 %2603
        %v2607 = vadd.f32 %v2439, %v2602
        %v2608 = vadd.f32 %v2440, %v2604
        %s2609 = sld [smem:[#allocation3 + $0x7d]]
        %v2610 = vstv %s2609
        %v2611 = vmul.f32 %v2610, %v271
        %v2612 = vmul.f32 %v2610, %v272
        %v2613 = vmul.f32 %v2610, %v273
        %v2617 = vrot.slane %v2611, 2
        %v2618 = vrot.slane %v2612, 2
        %v2619 = vsel %vm1033, %v2617, %v2618
        %v2620 = vrot.slane %v2613, 2
        %v2621 = vsel %vm1033, %v2618, %v2620
        %2622 = vrot.lane.b32.xlu0 %v2619, 126
        %v2623 = vpop.permute.xlu0 %2622
        %2624 = vrot.lane.b32.xlu0 %v2621, 126
        %v2625 = vpop.permute.xlu0 %2624
        %v2628 = vadd.f32 %v2460, %v2623
        %v2629 = vadd.f32 %v2461, %v2625
        %s2630 = sld [smem:[#allocation3 + $0xa1]]
        %v2631 = vstv %s2630
        %v2632 = vmul.f32 %v2631, %v271
        %v2633 = vmul.f32 %v2631, %v272
        %v2634 = vmul.f32 %v2631, %v273
        %v2638 = vrot.slane %v2632, 2
        %v2639 = vrot.slane %v2633, 2
        %v2640 = vsel %vm1033, %v2638, %v2639
        %v2641 = vrot.slane %v2634, 2
        %v2642 = vsel %vm1033, %v2639, %v2641
        %2643 = vrot.lane.b32.xlu0 %v2640, 126
        %v2644 = vpop.permute.xlu0 %2643
        %2645 = vrot.lane.b32.xlu0 %v2642, 126
        %v2646 = vpop.permute.xlu0 %2645
        %v2649 = vadd.f32 %v2481, %v2644
        %v2650 = vadd.f32 %v2482, %v2646
        %s2651 = sld [smem:[#allocation3 + $0xc5]]
        %v2652 = vstv %s2651
        %v2653 = vmul.f32 %v2652, %v271
        %v2654 = vmul.f32 %v2652, %v272
        %v2655 = vmul.f32 %v2652, %v273
        %v2659 = vrot.slane %v2653, 2
        %v2660 = vrot.slane %v2654, 2
        %v2661 = vsel %vm1033, %v2659, %v2660
        %v2662 = vrot.slane %v2655, 2
        %v2663 = vsel %vm1033, %v2660, %v2662
        %2664 = vrot.lane.b32.xlu0 %v2661, 126
        %v2665 = vpop.permute.xlu0 %2664
        %2666 = vrot.lane.b32.xlu0 %v2663, 126
        %v2667 = vpop.permute.xlu0 %2666
        %v2670 = vadd.f32 %v2502, %v2665
        %v2671 = vadd.f32 %v2503, %v2667
        %s2672 = sld [smem:[#allocation3 + $0xe9]]
        %v2673 = vstv %s2672
        %v2674 = vmul.f32 %v2673, %v271
        %v2675 = vmul.f32 %v2673, %v272
        %v2676 = vmul.f32 %v2673, %v273
        %v2680 = vrot.slane %v2674, 2
        %v2681 = vrot.slane %v2675, 2
        %v2682 = vsel %vm1033, %v2680, %v2681
        %v2683 = vrot.slane %v2676, 2
        %v2684 = vsel %vm1033, %v2681, %v2683
        %2685 = vrot.lane.b32.xlu0 %v2682, 126
        %v2686 = vpop.permute.xlu0 %2685
        %2687 = vrot.lane.b32.xlu0 %v2684, 126
        %v2688 = vpop.permute.xlu0 %2687
        %v2691 = vadd.f32 %v2523, %v2686
        %v2692 = vadd.f32 %v2524, %v2688
        %s2693 = sld [smem:[#allocation3 + $0x10d]]
        %v2694 = vstv %s2693
        %v2695 = vmul.f32 %v2694, %v271
        %v2696 = vmul.f32 %v2694, %v272
        %v2697 = vmul.f32 %v2694, %v273
        %v2701 = vrot.slane %v2695, 2
        %v2702 = vrot.slane %v2696, 2
        %v2703 = vsel %vm1033, %v2701, %v2702
        %v2704 = vrot.slane %v2697, 2
        %v2705 = vsel %vm1033, %v2702, %v2704
        %2706 = vrot.lane.b32.xlu0 %v2703, 126
        %v2707 = vpop.permute.xlu0 %2706
        %2708 = vrot.lane.b32.xlu0 %v2705, 126
        %v2709 = vpop.permute.xlu0 %2708
        %v2712 = vadd.f32 %v2544, %v2707
        %v2713 = vadd.f32 %v2545, %v2709
        %s2714 = sld [smem:[#allocation3 + $0x12]]
        %v2715 = vstv %s2714
        %v2716 = vmul.f32 %v2715, %v274
        %v2717 = vmul.f32 %v2715, %v275
        %v2718 = vadd.f32 %v2565, %v2716
        %v2719 = vadd.f32 %v2566, %v2717
        %s2720 = sld [smem:[#allocation3 + $0x36]]
        %v2721 = vstv %s2720
        %v2722 = vmul.f32 %v2721, %v274
        %v2723 = vmul.f32 %v2721, %v275
        %v2724 = vadd.f32 %v2586, %v2722
        %v2725 = vadd.f32 %v2587, %v2723
        %s2726 = sld [smem:[#allocation3 + $0x5a]]
        %v2727 = vstv %s2726
        %v2728 = vmul.f32 %v2727, %v274
        %v2729 = vmul.f32 %v2727, %v275
        %v2730 = vadd.f32 %v2607, %v2728
        %v2731 = vadd.f32 %v2608, %v2729
        %s2732 = sld [smem:[#allocation3 + $0x7e]]
        %v2733 = vstv %s2732
        %v2734 = vmul.f32 %v2733, %v274
        %v2735 = vmul.f32 %v2733, %v275
        %v2736 = vadd.f32 %v2628, %v2734
        %v2737 = vadd.f32 %v2629, %v2735
        %s2738 = sld [smem:[#allocation3 + $0xa2]]
        %v2739 = vstv %s2738
        %v2740 = vmul.f32 %v2739, %v274
        %v2741 = vmul.f32 %v2739, %v275
        %v2742 = vadd.f32 %v2649, %v2740
        %v2743 = vadd.f32 %v2650, %v2741
        %s2744 = sld [smem:[#allocation3 + $0xc6]]
        %v2745 = vstv %s2744
        %v2746 = vmul.f32 %v2745, %v274
        %v2747 = vmul.f32 %v2745, %v275
        %v2748 = vadd.f32 %v2670, %v2746
        %v2749 = vadd.f32 %v2671, %v2747
        %s2750 = sld [smem:[#allocation3 + $0xea]]
        %v2751 = vstv %s2750
        %v2752 = vmul.f32 %v2751, %v274
        %v2753 = vmul.f32 %v2751, %v275
        %v2754 = vadd.f32 %v2691, %v2752
        %v2755 = vadd.f32 %v2692, %v2753
        %s2756 = sld [smem:[#allocation3 + $0x10e]]
        %v2757 = vstv %s2756
        %v2758 = vmul.f32 %v2757, %v274
        %v2759 = vmul.f32 %v2757, %v275
        %v2760 = vadd.f32 %v2712, %v2758
        %v2761 = vadd.f32 %v2713, %v2759
        %s2762 = sld [smem:[#allocation3 + $0x13]]
        %v2763 = vstv %s2762
        %v2764 = vmul.f32 %v2763, %v274
        %v2765 = vmul.f32 %v2763, %v275
        %2768 = vrot.lane.b32.xlu0 %v2764, 127
        %v2769 = vpop.permute.xlu0 %2768
        %2770 = vrot.lane.b32.xlu0 %v2765, 127
        %v2771 = vpop.permute.xlu0 %2770
        %v2774 = vadd.f32 %v2718, %v2769
        %v2775 = vadd.f32 %v2719, %v2771
        %s2776 = sld [smem:[#allocation3 + $0x37]]
        %v2777 = vstv %s2776
        %v2778 = vmul.f32 %v2777, %v274
        %v2779 = vmul.f32 %v2777, %v275
        %2782 = vrot.lane.b32.xlu0 %v2778, 127
        %v2783 = vpop.permute.xlu0 %2782
        %2784 = vrot.lane.b32.xlu0 %v2779, 127
        %v2785 = vpop.permute.xlu0 %2784
        %v2788 = vadd.f32 %v2724, %v2783
        %v2789 = vadd.f32 %v2725, %v2785
        %s2790 = sld [smem:[#allocation3 + $0x5b]]
        %v2791 = vstv %s2790
        %v2792 = vmul.f32 %v2791, %v274
        %v2793 = vmul.f32 %v2791, %v275
        %2796 = vrot.lane.b32.xlu0 %v2792, 127
        %v2797 = vpop.permute.xlu0 %2796
        %2798 = vrot.lane.b32.xlu0 %v2793, 127
        %v2799 = vpop.permute.xlu0 %2798
        %v2802 = vadd.f32 %v2730, %v2797
        %v2803 = vadd.f32 %v2731, %v2799
        %s2804 = sld [smem:[#allocation3 + $0x7f]]
        %v2805 = vstv %s2804
        %v2806 = vmul.f32 %v2805, %v274
        %v2807 = vmul.f32 %v2805, %v275
        %2810 = vrot.lane.b32.xlu0 %v2806, 127
        %v2811 = vpop.permute.xlu0 %2810
        %2812 = vrot.lane.b32.xlu0 %v2807, 127
        %v2813 = vpop.permute.xlu0 %2812
        %v2816 = vadd.f32 %v2736, %v2811
        %v2817 = vadd.f32 %v2737, %v2813
        %s2818 = sld [smem:[#allocation3 + $0xa3]]
        %v2819 = vstv %s2818
        %v2820 = vmul.f32 %v2819, %v274
        %v2821 = vmul.f32 %v2819, %v275
        %2824 = vrot.lane.b32.xlu0 %v2820, 127
        %v2825 = vpop.permute.xlu0 %2824
        %2826 = vrot.lane.b32.xlu0 %v2821, 127
        %v2827 = vpop.permute.xlu0 %2826
        %v2830 = vadd.f32 %v2742, %v2825
        %v2831 = vadd.f32 %v2743, %v2827
        %s2832 = sld [smem:[#allocation3 + $0xc7]]
        %v2833 = vstv %s2832
        %v2834 = vmul.f32 %v2833, %v274
        %v2835 = vmul.f32 %v2833, %v275
        %2838 = vrot.lane.b32.xlu0 %v2834, 127
        %v2839 = vpop.permute.xlu0 %2838
        %2840 = vrot.lane.b32.xlu0 %v2835, 127
        %v2841 = vpop.permute.xlu0 %2840
        %v2844 = vadd.f32 %v2748, %v2839
        %v2845 = vadd.f32 %v2749, %v2841
        %s2846 = sld [smem:[#allocation3 + $0xeb]]
        %v2847 = vstv %s2846
        %v2848 = vmul.f32 %v2847, %v274
        %v2849 = vmul.f32 %v2847, %v275
        %2852 = vrot.lane.b32.xlu0 %v2848, 127
        %v2853 = vpop.permute.xlu0 %2852
        %2854 = vrot.lane.b32.xlu0 %v2849, 127
        %v2855 = vpop.permute.xlu0 %2854
        %v2858 = vadd.f32 %v2754, %v2853
        %v2859 = vadd.f32 %v2755, %v2855
        %s2860 = sld [smem:[#allocation3 + $0x10f]]
        %v2861 = vstv %s2860
        %v2862 = vmul.f32 %v2861, %v274
        %v2863 = vmul.f32 %v2861, %v275
        %2866 = vrot.lane.b32.xlu0 %v2862, 127
        %v2867 = vpop.permute.xlu0 %2866
        %2868 = vrot.lane.b32.xlu0 %v2863, 127
        %v2869 = vpop.permute.xlu0 %2868
        %v2872 = vadd.f32 %v2760, %v2867
        %v2873 = vadd.f32 %v2761, %v2869
        %s2874 = sld [smem:[#allocation3 + $0x14]]
        %v2875 = vstv %s2874
        %v2876 = vmul.f32 %v2875, %v274
        %v2877 = vmul.f32 %v2875, %v275
        %2880 = vrot.lane.b32.xlu0 %v2876, 126
        %v2881 = vpop.permute.xlu0 %2880
        %2882 = vrot.lane.b32.xlu0 %v2877, 126
        %v2883 = vpop.permute.xlu0 %2882
        %v2886 = vadd.f32 %v2774, %v2881
        %v2887 = vadd.f32 %v2775, %v2883
        %s2888 = sld [smem:[#allocation3 + $0x38]]
        %v2889 = vstv %s2888
        %v2890 = vmul.f32 %v2889, %v274
        %v2891 = vmul.f32 %v2889, %v275
        %2894 = vrot.lane.b32.xlu0 %v2890, 126
        %v2895 = vpop.permute.xlu0 %2894
        %2896 = vrot.lane.b32.xlu0 %v2891, 126
        %v2897 = vpop.permute.xlu0 %2896
        %v2900 = vadd.f32 %v2788, %v2895
        %v2901 = vadd.f32 %v2789, %v2897
        %s2902 = sld [smem:[#allocation3 + $0x5c]]
        %v2903 = vstv %s2902
        %v2904 = vmul.f32 %v2903, %v274
        %v2905 = vmul.f32 %v2903, %v275
        %2908 = vrot.lane.b32.xlu0 %v2904, 126
        %v2909 = vpop.permute.xlu0 %2908
        %2910 = vrot.lane.b32.xlu0 %v2905, 126
        %v2911 = vpop.permute.xlu0 %2910
        %v2914 = vadd.f32 %v2802, %v2909
        %v2915 = vadd.f32 %v2803, %v2911
        %s2916 = sld [smem:[#allocation3 + $0x80]]
        %v2917 = vstv %s2916
        %v2918 = vmul.f32 %v2917, %v274
        %v2919 = vmul.f32 %v2917, %v275
        %2922 = vrot.lane.b32.xlu0 %v2918, 126
        %v2923 = vpop.permute.xlu0 %2922
        %2924 = vrot.lane.b32.xlu0 %v2919, 126
        %v2925 = vpop.permute.xlu0 %2924
        %v2928 = vadd.f32 %v2816, %v2923
        %v2929 = vadd.f32 %v2817, %v2925
        %s2930 = sld [smem:[#allocation3 + $0xa4]]
        %v2931 = vstv %s2930
        %v2932 = vmul.f32 %v2931, %v274
        %v2933 = vmul.f32 %v2931, %v275
        %2936 = vrot.lane.b32.xlu0 %v2932, 126
        %v2937 = vpop.permute.xlu0 %2936
        %2938 = vrot.lane.b32.xlu0 %v2933, 126
        %v2939 = vpop.permute.xlu0 %2938
        %v2942 = vadd.f32 %v2830, %v2937
        %v2943 = vadd.f32 %v2831, %v2939
        %s2944 = sld [smem:[#allocation3 + $0xc8]]
        %v2945 = vstv %s2944
        %v2946 = vmul.f32 %v2945, %v274
        %v2947 = vmul.f32 %v2945, %v275
        %2950 = vrot.lane.b32.xlu0 %v2946, 126
        %v2951 = vpop.permute.xlu0 %2950
        %2952 = vrot.lane.b32.xlu0 %v2947, 126
        %v2953 = vpop.permute.xlu0 %2952
        %v2956 = vadd.f32 %v2844, %v2951
        %v2957 = vadd.f32 %v2845, %v2953
        %s2958 = sld [smem:[#allocation3 + $0xec]]
        %v2959 = vstv %s2958
        %v2960 = vmul.f32 %v2959, %v274
        %v2961 = vmul.f32 %v2959, %v275
        %2964 = vrot.lane.b32.xlu0 %v2960, 126
        %v2965 = vpop.permute.xlu0 %2964
        %2966 = vrot.lane.b32.xlu0 %v2961, 126
        %v2967 = vpop.permute.xlu0 %2966
        %v2970 = vadd.f32 %v2858, %v2965
        %v2971 = vadd.f32 %v2859, %v2967
        %s2972 = sld [smem:[#allocation3 + $0x110]]
        %v2973 = vstv %s2972
        %v2974 = vmul.f32 %v2973, %v274
        %v2975 = vmul.f32 %v2973, %v275
        %2978 = vrot.lane.b32.xlu0 %v2974, 126
        %v2979 = vpop.permute.xlu0 %2978
        %2980 = vrot.lane.b32.xlu0 %v2975, 126
        %v2981 = vpop.permute.xlu0 %2980
        %v2984 = vadd.f32 %v2872, %v2979
        %v2985 = vadd.f32 %v2873, %v2981
        %s2986 = sld [smem:[#allocation3 + $0x15]]
        %v2987 = vstv %s2986
        %v2988 = vmul.f32 %v2987, %v274
        %v2989 = vmul.f32 %v2987, %v275
        %v2990 = vmul.f32 %v2987, %v276
        %v2994 = vrot.slane %v2988, 1
        %v2995 = vrot.slane %v2989, 1
        %v2996 = vsel %vm560, %v2994, %v2995
        %v2997 = vrot.slane %v2990, 1
        %v2998 = vsel %vm560, %v2995, %v2997
        %v3001 = vadd.f32 %v2886, %v2996
        %v3002 = vadd.f32 %v2887, %v2998
        %s3003 = sld [smem:[#allocation3 + $0x39]]
        %v3004 = vstv %s3003
        %v3005 = vmul.f32 %v3004, %v274
        %v3006 = vmul.f32 %v3004, %v275
        %v3007 = vmul.f32 %v3004, %v276
        %v3011 = vrot.slane %v3005, 1
        %v3012 = vrot.slane %v3006, 1
        %v3013 = vsel %vm560, %v3011, %v3012
        %v3014 = vrot.slane %v3007, 1
        %v3015 = vsel %vm560, %v3012, %v3014
        %v3018 = vadd.f32 %v2900, %v3013
        %v3019 = vadd.f32 %v2901, %v3015
        %s3020 = sld [smem:[#allocation3 + $0x5d]]
        %v3021 = vstv %s3020
        %v3022 = vmul.f32 %v3021, %v274
        %v3023 = vmul.f32 %v3021, %v275
        %v3024 = vmul.f32 %v3021, %v276
        %v3028 = vrot.slane %v3022, 1
        %v3029 = vrot.slane %v3023, 1
        %v3030 = vsel %vm560, %v3028, %v3029
        %v3031 = vrot.slane %v3024, 1
        %v3032 = vsel %vm560, %v3029, %v3031
        %v3035 = vadd.f32 %v2914, %v3030
        %v3036 = vadd.f32 %v2915, %v3032
        %s3037 = sld [smem:[#allocation3 + $0x81]]
        %v3038 = vstv %s3037
        %v3039 = vmul.f32 %v3038, %v274
        %v3040 = vmul.f32 %v3038, %v275
        %v3041 = vmul.f32 %v3038, %v276
        %v3045 = vrot.slane %v3039, 1
        %v3046 = vrot.slane %v3040, 1
        %v3047 = vsel %vm560, %v3045, %v3046
        %v3048 = vrot.slane %v3041, 1
        %v3049 = vsel %vm560, %v3046, %v3048
        %v3052 = vadd.f32 %v2928, %v3047
        %v3053 = vadd.f32 %v2929, %v3049
        %s3054 = sld [smem:[#allocation3 + $0xa5]]
        %v3055 = vstv %s3054
        %v3056 = vmul.f32 %v3055, %v274
        %v3057 = vmul.f32 %v3055, %v275
        %v3058 = vmul.f32 %v3055, %v276
        %v3062 = vrot.slane %v3056, 1
        %v3063 = vrot.slane %v3057, 1
        %v3064 = vsel %vm560, %v3062, %v3063
        %v3065 = vrot.slane %v3058, 1
        %v3066 = vsel %vm560, %v3063, %v3065
        %v3069 = vadd.f32 %v2942, %v3064
        %v3070 = vadd.f32 %v2943, %v3066
        %s3071 = sld [smem:[#allocation3 + $0xc9]]
        %v3072 = vstv %s3071
        %v3073 = vmul.f32 %v3072, %v274
        %v3074 = vmul.f32 %v3072, %v275
        %v3075 = vmul.f32 %v3072, %v276
        %v3079 = vrot.slane %v3073, 1
        %v3080 = vrot.slane %v3074, 1
        %v3081 = vsel %vm560, %v3079, %v3080
        %v3082 = vrot.slane %v3075, 1
        %v3083 = vsel %vm560, %v3080, %v3082
        %v3086 = vadd.f32 %v2956, %v3081
        %v3087 = vadd.f32 %v2957, %v3083
        %s3088 = sld [smem:[#allocation3 + $0xed]]
        %v3089 = vstv %s3088
        %v3090 = vmul.f32 %v3089, %v274
        %v3091 = vmul.f32 %v3089, %v275
        %v3092 = vmul.f32 %v3089, %v276
        %v3096 = vrot.slane %v3090, 1
        %v3097 = vrot.slane %v3091, 1
        %v3098 = vsel %vm560, %v3096, %v3097
        %v3099 = vrot.slane %v3092, 1
        %v3100 = vsel %vm560, %v3097, %v3099
        %v3103 = vadd.f32 %v2970, %v3098
        %v3104 = vadd.f32 %v2971, %v3100
        %s3105 = sld [smem:[#allocation3 + $0x111]]
        %v3106 = vstv %s3105
        %v3107 = vmul.f32 %v3106, %v274
        %v3108 = vmul.f32 %v3106, %v275
        %v3109 = vmul.f32 %v3106, %v276
        %v3113 = vrot.slane %v3107, 1
        %v3114 = vrot.slane %v3108, 1
        %v3115 = vsel %vm560, %v3113, %v3114
        %v3116 = vrot.slane %v3109, 1
        %v3117 = vsel %vm560, %v3114, %v3116
        %v3120 = vadd.f32 %v2984, %v3115
        %v3121 = vadd.f32 %v2985, %v3117
        %s3122 = sld [smem:[#allocation3 + $0x16]]
        %v3123 = vstv %s3122
        %v3124 = vmul.f32 %v3123, %v274
        %v3125 = vmul.f32 %v3123, %v275
        %v3126 = vmul.f32 %v3123, %v276
        %v3130 = vrot.slane %v3124, 1
        %v3131 = vrot.slane %v3125, 1
        %v3132 = vsel %vm560, %v3130, %v3131
        %v3133 = vrot.slane %v3126, 1
        %v3134 = vsel %vm560, %v3131, %v3133
        %3135 = vrot.lane.b32.xlu0 %v3132, 127
        %v3136 = vpop.permute.xlu0 %3135
        %3137 = vrot.lane.b32.xlu0 %v3134, 127
        %v3138 = vpop.permute.xlu0 %3137
        %v3141 = vadd.f32 %v3001, %v3136
        %v3142 = vadd.f32 %v3002, %v3138
        %s3143 = sld [smem:[#allocation3 + $0x3a]]
        %v3144 = vstv %s3143
        %v3145 = vmul.f32 %v3144, %v274
        %v3146 = vmul.f32 %v3144, %v275
        %v3147 = vmul.f32 %v3144, %v276
        %v3151 = vrot.slane %v3145, 1
        %v3152 = vrot.slane %v3146, 1
        %v3153 = vsel %vm560, %v3151, %v3152
        %v3154 = vrot.slane %v3147, 1
        %v3155 = vsel %vm560, %v3152, %v3154
        %3156 = vrot.lane.b32.xlu0 %v3153, 127
        %v3157 = vpop.permute.xlu0 %3156
        %3158 = vrot.lane.b32.xlu0 %v3155, 127
        %v3159 = vpop.permute.xlu0 %3158
        %v3162 = vadd.f32 %v3018, %v3157
        %v3163 = vadd.f32 %v3019, %v3159
        %s3164 = sld [smem:[#allocation3 + $0x5e]]
        %v3165 = vstv %s3164
        %v3166 = vmul.f32 %v3165, %v274
        %v3167 = vmul.f32 %v3165, %v275
        %v3168 = vmul.f32 %v3165, %v276
        %v3172 = vrot.slane %v3166, 1
        %v3173 = vrot.slane %v3167, 1
        %v3174 = vsel %vm560, %v3172, %v3173
        %v3175 = vrot.slane %v3168, 1
        %v3176 = vsel %vm560, %v3173, %v3175
        %3177 = vrot.lane.b32.xlu0 %v3174, 127
        %v3178 = vpop.permute.xlu0 %3177
        %3179 = vrot.lane.b32.xlu0 %v3176, 127
        %v3180 = vpop.permute.xlu0 %3179
        %v3183 = vadd.f32 %v3035, %v3178
        %v3184 = vadd.f32 %v3036, %v3180
        %s3185 = sld [smem:[#allocation3 + $0x82]]
        %v3186 = vstv %s3185
        %v3187 = vmul.f32 %v3186, %v274
        %v3188 = vmul.f32 %v3186, %v275
        %v3189 = vmul.f32 %v3186, %v276
        %v3193 = vrot.slane %v3187, 1
        %v3194 = vrot.slane %v3188, 1
        %v3195 = vsel %vm560, %v3193, %v3194
        %v3196 = vrot.slane %v3189, 1
        %v3197 = vsel %vm560, %v3194, %v3196
        %3198 = vrot.lane.b32.xlu0 %v3195, 127
        %v3199 = vpop.permute.xlu0 %3198
        %3200 = vrot.lane.b32.xlu0 %v3197, 127
        %v3201 = vpop.permute.xlu0 %3200
        %v3204 = vadd.f32 %v3052, %v3199
        %v3205 = vadd.f32 %v3053, %v3201
        %s3206 = sld [smem:[#allocation3 + $0xa6]]
        %v3207 = vstv %s3206
        %v3208 = vmul.f32 %v3207, %v274
        %v3209 = vmul.f32 %v3207, %v275
        %v3210 = vmul.f32 %v3207, %v276
        %v3214 = vrot.slane %v3208, 1
        %v3215 = vrot.slane %v3209, 1
        %v3216 = vsel %vm560, %v3214, %v3215
        %v3217 = vrot.slane %v3210, 1
        %v3218 = vsel %vm560, %v3215, %v3217
        %3219 = vrot.lane.b32.xlu0 %v3216, 127
        %v3220 = vpop.permute.xlu0 %3219
        %3221 = vrot.lane.b32.xlu0 %v3218, 127
        %v3222 = vpop.permute.xlu0 %3221
        %v3225 = vadd.f32 %v3069, %v3220
        %v3226 = vadd.f32 %v3070, %v3222
        %s3227 = sld [smem:[#allocation3 + $0xca]]
        %v3228 = vstv %s3227
        %v3229 = vmul.f32 %v3228, %v274
        %v3230 = vmul.f32 %v3228, %v275
        %v3231 = vmul.f32 %v3228, %v276
        %v3235 = vrot.slane %v3229, 1
        %v3236 = vrot.slane %v3230, 1
        %v3237 = vsel %vm560, %v3235, %v3236
        %v3238 = vrot.slane %v3231, 1
        %v3239 = vsel %vm560, %v3236, %v3238
        %3240 = vrot.lane.b32.xlu0 %v3237, 127
        %v3241 = vpop.permute.xlu0 %3240
        %3242 = vrot.lane.b32.xlu0 %v3239, 127
        %v3243 = vpop.permute.xlu0 %3242
        %v3246 = vadd.f32 %v3086, %v3241
        %v3247 = vadd.f32 %v3087, %v3243
        %s3248 = sld [smem:[#allocation3 + $0xee]]
        %v3249 = vstv %s3248
        %v3250 = vmul.f32 %v3249, %v274
        %v3251 = vmul.f32 %v3249, %v275
        %v3252 = vmul.f32 %v3249, %v276
        %v3256 = vrot.slane %v3250, 1
        %v3257 = vrot.slane %v3251, 1
        %v3258 = vsel %vm560, %v3256, %v3257
        %v3259 = vrot.slane %v3252, 1
        %v3260 = vsel %vm560, %v3257, %v3259
        %3261 = vrot.lane.b32.xlu0 %v3258, 127
        %v3262 = vpop.permute.xlu0 %3261
        %3263 = vrot.lane.b32.xlu0 %v3260, 127
        %v3264 = vpop.permute.xlu0 %3263
        %v3267 = vadd.f32 %v3103, %v3262
        %v3268 = vadd.f32 %v3104, %v3264
        %s3269 = sld [smem:[#allocation3 + $0x112]]
        %v3270 = vstv %s3269
        %v3271 = vmul.f32 %v3270, %v274
        %v3272 = vmul.f32 %v3270, %v275
        %v3273 = vmul.f32 %v3270, %v276
        %v3277 = vrot.slane %v3271, 1
        %v3278 = vrot.slane %v3272, 1
        %v3279 = vsel %vm560, %v3277, %v3278
        %v3280 = vrot.slane %v3273, 1
        %v3281 = vsel %vm560, %v3278, %v3280
        %3282 = vrot.lane.b32.xlu0 %v3279, 127
        %v3283 = vpop.permute.xlu0 %3282
        %3284 = vrot.lane.b32.xlu0 %v3281, 127
        %v3285 = vpop.permute.xlu0 %3284
        %v3288 = vadd.f32 %v3120, %v3283
        %v3289 = vadd.f32 %v3121, %v3285
        %s3290 = sld [smem:[#allocation3 + $0x17]]
        %v3291 = vstv %s3290
        %v3292 = vmul.f32 %v3291, %v274
        %v3293 = vmul.f32 %v3291, %v275
        %v3294 = vmul.f32 %v3291, %v276
        %v3298 = vrot.slane %v3292, 1
        %v3299 = vrot.slane %v3293, 1
        %v3300 = vsel %vm560, %v3298, %v3299
        %v3301 = vrot.slane %v3294, 1
        %v3302 = vsel %vm560, %v3299, %v3301
        %3303 = vrot.lane.b32.xlu0 %v3300, 126
        %v3304 = vpop.permute.xlu0 %3303
        %3305 = vrot.lane.b32.xlu0 %v3302, 126
        %v3306 = vpop.permute.xlu0 %3305
        %v3309 = vadd.f32 %v3141, %v3304
        %v3310 = vadd.f32 %v3142, %v3306
        %s3311 = sld [smem:[#allocation3 + $0x3b]]
        %v3312 = vstv %s3311
        %v3313 = vmul.f32 %v3312, %v274
        %v3314 = vmul.f32 %v3312, %v275
        %v3315 = vmul.f32 %v3312, %v276
        %v3319 = vrot.slane %v3313, 1
        %v3320 = vrot.slane %v3314, 1
        %v3321 = vsel %vm560, %v3319, %v3320
        %v3322 = vrot.slane %v3315, 1
        %v3323 = vsel %vm560, %v3320, %v3322
        %3324 = vrot.lane.b32.xlu0 %v3321, 126
        %v3325 = vpop.permute.xlu0 %3324
        %3326 = vrot.lane.b32.xlu0 %v3323, 126
        %v3327 = vpop.permute.xlu0 %3326
        %v3330 = vadd.f32 %v3162, %v3325
        %v3331 = vadd.f32 %v3163, %v3327
        %s3332 = sld [smem:[#allocation3 + $0x5f]]
        %v3333 = vstv %s3332
        %v3334 = vmul.f32 %v3333, %v274
        %v3335 = vmul.f32 %v3333, %v275
        %v3336 = vmul.f32 %v3333, %v276
        %v3340 = vrot.slane %v3334, 1
        %v3341 = vrot.slane %v3335, 1
        %v3342 = vsel %vm560, %v3340, %v3341
        %v3343 = vrot.slane %v3336, 1
        %v3344 = vsel %vm560, %v3341, %v3343
        %3345 = vrot.lane.b32.xlu0 %v3342, 126
        %v3346 = vpop.permute.xlu0 %3345
        %3347 = vrot.lane.b32.xlu0 %v3344, 126
        %v3348 = vpop.permute.xlu0 %3347
        %v3351 = vadd.f32 %v3183, %v3346
        %v3352 = vadd.f32 %v3184, %v3348
        %s3353 = sld [smem:[#allocation3 + $0x83]]
        %v3354 = vstv %s3353
        %v3355 = vmul.f32 %v3354, %v274
        %v3356 = vmul.f32 %v3354, %v275
        %v3357 = vmul.f32 %v3354, %v276
        %v3361 = vrot.slane %v3355, 1
        %v3362 = vrot.slane %v3356, 1
        %v3363 = vsel %vm560, %v3361, %v3362
        %v3364 = vrot.slane %v3357, 1
        %v3365 = vsel %vm560, %v3362, %v3364
        %3366 = vrot.lane.b32.xlu0 %v3363, 126
        %v3367 = vpop.permute.xlu0 %3366
        %3368 = vrot.lane.b32.xlu0 %v3365, 126
        %v3369 = vpop.permute.xlu0 %3368
        %v3372 = vadd.f32 %v3204, %v3367
        %v3373 = vadd.f32 %v3205, %v3369
        %s3374 = sld [smem:[#allocation3 + $0xa7]]
        %v3375 = vstv %s3374
        %v3376 = vmul.f32 %v3375, %v274
        %v3377 = vmul.f32 %v3375, %v275
        %v3378 = vmul.f32 %v3375, %v276
        %v3382 = vrot.slane %v3376, 1
        %v3383 = vrot.slane %v3377, 1
        %v3384 = vsel %vm560, %v3382, %v3383
        %v3385 = vrot.slane %v3378, 1
        %v3386 = vsel %vm560, %v3383, %v3385
        %3387 = vrot.lane.b32.xlu0 %v3384, 126
        %v3388 = vpop.permute.xlu0 %3387
        %3389 = vrot.lane.b32.xlu0 %v3386, 126
        %v3390 = vpop.permute.xlu0 %3389
        %v3393 = vadd.f32 %v3225, %v3388
        %v3394 = vadd.f32 %v3226, %v3390
        %s3395 = sld [smem:[#allocation3 + $0xcb]]
        %v3396 = vstv %s3395
        %v3397 = vmul.f32 %v3396, %v274
        %v3398 = vmul.f32 %v3396, %v275
        %v3399 = vmul.f32 %v3396, %v276
        %v3403 = vrot.slane %v3397, 1
        %v3404 = vrot.slane %v3398, 1
        %v3405 = vsel %vm560, %v3403, %v3404
        %v3406 = vrot.slane %v3399, 1
        %v3407 = vsel %vm560, %v3404, %v3406
        %3408 = vrot.lane.b32.xlu0 %v3405, 126
        %v3409 = vpop.permute.xlu0 %3408
        %3410 = vrot.lane.b32.xlu0 %v3407, 126
        %v3411 = vpop.permute.xlu0 %3410
        %v3414 = vadd.f32 %v3246, %v3409
        %v3415 = vadd.f32 %v3247, %v3411
        %s3416 = sld [smem:[#allocation3 + $0xef]]
        %v3417 = vstv %s3416
        %v3418 = vmul.f32 %v3417, %v274
        %v3419 = vmul.f32 %v3417, %v275
        %v3420 = vmul.f32 %v3417, %v276
        %v3424 = vrot.slane %v3418, 1
        %v3425 = vrot.slane %v3419, 1
        %v3426 = vsel %vm560, %v3424, %v3425
        %v3427 = vrot.slane %v3420, 1
        %v3428 = vsel %vm560, %v3425, %v3427
        %3429 = vrot.lane.b32.xlu0 %v3426, 126
        %v3430 = vpop.permute.xlu0 %3429
        %3431 = vrot.lane.b32.xlu0 %v3428, 126
        %v3432 = vpop.permute.xlu0 %3431
        %v3435 = vadd.f32 %v3267, %v3430
        %v3436 = vadd.f32 %v3268, %v3432
        %s3437 = sld [smem:[#allocation3 + $0x113]]
        %v3438 = vstv %s3437
        %v3439 = vmul.f32 %v3438, %v274
        %v3440 = vmul.f32 %v3438, %v275
        %v3441 = vmul.f32 %v3438, %v276
        %v3445 = vrot.slane %v3439, 1
        %v3446 = vrot.slane %v3440, 1
        %v3447 = vsel %vm560, %v3445, %v3446
        %v3448 = vrot.slane %v3441, 1
        %v3449 = vsel %vm560, %v3446, %v3448
        %3450 = vrot.lane.b32.xlu0 %v3447, 126
        %v3451 = vpop.permute.xlu0 %3450
        %3452 = vrot.lane.b32.xlu0 %v3449, 126
        %v3453 = vpop.permute.xlu0 %3452
        %v3456 = vadd.f32 %v3288, %v3451
        %v3457 = vadd.f32 %v3289, %v3453
        %s3458 = sld [smem:[#allocation3 + $0x18]]
        %v3459 = vstv %s3458
        %v3460 = vmul.f32 %v3459, %v274
        %v3461 = vmul.f32 %v3459, %v275
        %v3462 = vmul.f32 %v3459, %v276
        %v3466 = vrot.slane %v3460, 2
        %v3467 = vrot.slane %v3461, 2
        %v3468 = vsel %vm1033, %v3466, %v3467
        %v3469 = vrot.slane %v3462, 2
        %v3470 = vsel %vm1033, %v3467, %v3469
        %v3473 = vadd.f32 %v3309, %v3468
        %v3474 = vadd.f32 %v3310, %v3470
        %s3475 = sld [smem:[#allocation3 + $0x3c]]
        %v3476 = vstv %s3475
        %v3477 = vmul.f32 %v3476, %v274
        %v3478 = vmul.f32 %v3476, %v275
        %v3479 = vmul.f32 %v3476, %v276
        %v3483 = vrot.slane %v3477, 2
        %v3484 = vrot.slane %v3478, 2
        %v3485 = vsel %vm1033, %v3483, %v3484
        %v3486 = vrot.slane %v3479, 2
        %v3487 = vsel %vm1033, %v3484, %v3486
        %v3490 = vadd.f32 %v3330, %v3485
        %v3491 = vadd.f32 %v3331, %v3487
        %s3492 = sld [smem:[#allocation3 + $0x60]]
        %v3493 = vstv %s3492
        %v3494 = vmul.f32 %v3493, %v274
        %v3495 = vmul.f32 %v3493, %v275
        %v3496 = vmul.f32 %v3493, %v276
        %v3500 = vrot.slane %v3494, 2
        %v3501 = vrot.slane %v3495, 2
        %v3502 = vsel %vm1033, %v3500, %v3501
        %v3503 = vrot.slane %v3496, 2
        %v3504 = vsel %vm1033, %v3501, %v3503
        %v3507 = vadd.f32 %v3351, %v3502
        %v3508 = vadd.f32 %v3352, %v3504
        %s3509 = sld [smem:[#allocation3 + $0x84]]
        %v3510 = vstv %s3509
        %v3511 = vmul.f32 %v3510, %v274
        %v3512 = vmul.f32 %v3510, %v275
        %v3513 = vmul.f32 %v3510, %v276
        %v3517 = vrot.slane %v3511, 2
        %v3518 = vrot.slane %v3512, 2
        %v3519 = vsel %vm1033, %v3517, %v3518
        %v3520 = vrot.slane %v3513, 2
        %v3521 = vsel %vm1033, %v3518, %v3520
        %v3524 = vadd.f32 %v3372, %v3519
        %v3525 = vadd.f32 %v3373, %v3521
        %s3526 = sld [smem:[#allocation3 + $0xa8]]
        %v3527 = vstv %s3526
        %v3528 = vmul.f32 %v3527, %v274
        %v3529 = vmul.f32 %v3527, %v275
        %v3530 = vmul.f32 %v3527, %v276
        %v3534 = vrot.slane %v3528, 2
        %v3535 = vrot.slane %v3529, 2
        %v3536 = vsel %vm1033, %v3534, %v3535
        %v3537 = vrot.slane %v3530, 2
        %v3538 = vsel %vm1033, %v3535, %v3537
        %v3541 = vadd.f32 %v3393, %v3536
        %v3542 = vadd.f32 %v3394, %v3538
        %s3543 = sld [smem:[#allocation3 + $0xcc]]
        %v3544 = vstv %s3543
        %v3545 = vmul.f32 %v3544, %v274
        %v3546 = vmul.f32 %v3544, %v275
        %v3547 = vmul.f32 %v3544, %v276
        %v3551 = vrot.slane %v3545, 2
        %v3552 = vrot.slane %v3546, 2
        %v3553 = vsel %vm1033, %v3551, %v3552
        %v3554 = vrot.slane %v3547, 2
        %v3555 = vsel %vm1033, %v3552, %v3554
        %v3558 = vadd.f32 %v3414, %v3553
        %v3559 = vadd.f32 %v3415, %v3555
        %s3560 = sld [smem:[#allocation3 + $0xf0]]
        %v3561 = vstv %s3560
        %v3562 = vmul.f32 %v3561, %v274
        %v3563 = vmul.f32 %v3561, %v275
        %v3564 = vmul.f32 %v3561, %v276
        %v3568 = vrot.slane %v3562, 2
        %v3569 = vrot.slane %v3563, 2
        %v3570 = vsel %vm1033, %v3568, %v3569
        %v3571 = vrot.slane %v3564, 2
        %v3572 = vsel %vm1033, %v3569, %v3571
        %v3575 = vadd.f32 %v3435, %v3570
        %v3576 = vadd.f32 %v3436, %v3572
        %s3577 = sld [smem:[#allocation3 + $0x114]]
        %v3578 = vstv %s3577
        %v3579 = vmul.f32 %v3578, %v274
        %v3580 = vmul.f32 %v3578, %v275
        %v3581 = vmul.f32 %v3578, %v276
        %v3585 = vrot.slane %v3579, 2
        %v3586 = vrot.slane %v3580, 2
        %v3587 = vsel %vm1033, %v3585, %v3586
        %v3588 = vrot.slane %v3581, 2
        %v3589 = vsel %vm1033, %v3586, %v3588
        %v3592 = vadd.f32 %v3456, %v3587
        %v3593 = vadd.f32 %v3457, %v3589
        %s3594 = sld [smem:[#allocation3 + $0x19]]
        %v3595 = vstv %s3594
        %v3596 = vmul.f32 %v3595, %v274
        %v3597 = vmul.f32 %v3595, %v275
        %v3598 = vmul.f32 %v3595, %v276
        %v3602 = vrot.slane %v3596, 2
        %v3603 = vrot.slane %v3597, 2
        %v3604 = vsel %vm1033, %v3602, %v3603
        %v3605 = vrot.slane %v3598, 2
        %v3606 = vsel %vm1033, %v3603, %v3605
        %3607 = vrot.lane.b32.xlu0 %v3604, 127
        %v3608 = vpop.permute.xlu0 %3607
        %3609 = vrot.lane.b32.xlu0 %v3606, 127
        %v3610 = vpop.permute.xlu0 %3609
        %v3613 = vadd.f32 %v3473, %v3608
        %v3614 = vadd.f32 %v3474, %v3610
        %s3615 = sld [smem:[#allocation3 + $0x3d]]
        %v3616 = vstv %s3615
        %v3617 = vmul.f32 %v3616, %v274
        %v3618 = vmul.f32 %v3616, %v275
        %v3619 = vmul.f32 %v3616, %v276
        %v3623 = vrot.slane %v3617, 2
        %v3624 = vrot.slane %v3618, 2
        %v3625 = vsel %vm1033, %v3623, %v3624
        %v3626 = vrot.slane %v3619, 2
        %v3627 = vsel %vm1033, %v3624, %v3626
        %3628 = vrot.lane.b32.xlu0 %v3625, 127
        %v3629 = vpop.permute.xlu0 %3628
        %3630 = vrot.lane.b32.xlu0 %v3627, 127
        %v3631 = vpop.permute.xlu0 %3630
        %v3634 = vadd.f32 %v3490, %v3629
        %v3635 = vadd.f32 %v3491, %v3631
        %s3636 = sld [smem:[#allocation3 + $0x61]]
        %v3637 = vstv %s3636
        %v3638 = vmul.f32 %v3637, %v274
        %v3639 = vmul.f32 %v3637, %v275
        %v3640 = vmul.f32 %v3637, %v276
        %v3644 = vrot.slane %v3638, 2
        %v3645 = vrot.slane %v3639, 2
        %v3646 = vsel %vm1033, %v3644, %v3645
        %v3647 = vrot.slane %v3640, 2
        %v3648 = vsel %vm1033, %v3645, %v3647
        %3649 = vrot.lane.b32.xlu0 %v3646, 127
        %v3650 = vpop.permute.xlu0 %3649
        %3651 = vrot.lane.b32.xlu0 %v3648, 127
        %v3652 = vpop.permute.xlu0 %3651
        %v3655 = vadd.f32 %v3507, %v3650
        %v3656 = vadd.f32 %v3508, %v3652
        %s3657 = sld [smem:[#allocation3 + $0x85]]
        %v3658 = vstv %s3657
        %v3659 = vmul.f32 %v3658, %v274
        %v3660 = vmul.f32 %v3658, %v275
        %v3661 = vmul.f32 %v3658, %v276
        %v3665 = vrot.slane %v3659, 2
        %v3666 = vrot.slane %v3660, 2
        %v3667 = vsel %vm1033, %v3665, %v3666
        %v3668 = vrot.slane %v3661, 2
        %v3669 = vsel %vm1033, %v3666, %v3668
        %3670 = vrot.lane.b32.xlu0 %v3667, 127
        %v3671 = vpop.permute.xlu0 %3670
        %3672 = vrot.lane.b32.xlu0 %v3669, 127
        %v3673 = vpop.permute.xlu0 %3672
        %v3676 = vadd.f32 %v3524, %v3671
        %v3677 = vadd.f32 %v3525, %v3673
        %s3678 = sld [smem:[#allocation3 + $0xa9]]
        %v3679 = vstv %s3678
        %v3680 = vmul.f32 %v3679, %v274
        %v3681 = vmul.f32 %v3679, %v275
        %v3682 = vmul.f32 %v3679, %v276
        %v3686 = vrot.slane %v3680, 2
        %v3687 = vrot.slane %v3681, 2
        %v3688 = vsel %vm1033, %v3686, %v3687
        %v3689 = vrot.slane %v3682, 2
        %v3690 = vsel %vm1033, %v3687, %v3689
        %3691 = vrot.lane.b32.xlu0 %v3688, 127
        %v3692 = vpop.permute.xlu0 %3691
        %3693 = vrot.lane.b32.xlu0 %v3690, 127
        %v3694 = vpop.permute.xlu0 %3693
        %v3697 = vadd.f32 %v3541, %v3692
        %v3698 = vadd.f32 %v3542, %v3694
        %s3699 = sld [smem:[#allocation3 + $0xcd]]
        %v3700 = vstv %s3699
        %v3701 = vmul.f32 %v3700, %v274
        %v3702 = vmul.f32 %v3700, %v275
        %v3703 = vmul.f32 %v3700, %v276
        %v3707 = vrot.slane %v3701, 2
        %v3708 = vrot.slane %v3702, 2
        %v3709 = vsel %vm1033, %v3707, %v3708
        %v3710 = vrot.slane %v3703, 2
        %v3711 = vsel %vm1033, %v3708, %v3710
        %3712 = vrot.lane.b32.xlu0 %v3709, 127
        %v3713 = vpop.permute.xlu0 %3712
        %3714 = vrot.lane.b32.xlu0 %v3711, 127
        %v3715 = vpop.permute.xlu0 %3714
        %v3718 = vadd.f32 %v3558, %v3713
        %v3719 = vadd.f32 %v3559, %v3715
        %s3720 = sld [smem:[#allocation3 + $0xf1]]
        %v3721 = vstv %s3720
        %v3722 = vmul.f32 %v3721, %v274
        %v3723 = vmul.f32 %v3721, %v275
        %v3724 = vmul.f32 %v3721, %v276
        %v3728 = vrot.slane %v3722, 2
        %v3729 = vrot.slane %v3723, 2
        %v3730 = vsel %vm1033, %v3728, %v3729
        %v3731 = vrot.slane %v3724, 2
        %v3732 = vsel %vm1033, %v3729, %v3731
        %3733 = vrot.lane.b32.xlu0 %v3730, 127
        %v3734 = vpop.permute.xlu0 %3733
        %3735 = vrot.lane.b32.xlu0 %v3732, 127
        %v3736 = vpop.permute.xlu0 %3735
        %v3739 = vadd.f32 %v3575, %v3734
        %v3740 = vadd.f32 %v3576, %v3736
        %s3741 = sld [smem:[#allocation3 + $0x115]]
        %v3742 = vstv %s3741
        %v3743 = vmul.f32 %v3742, %v274
        %v3744 = vmul.f32 %v3742, %v275
        %v3745 = vmul.f32 %v3742, %v276
        %v3749 = vrot.slane %v3743, 2
        %v3750 = vrot.slane %v3744, 2
        %v3751 = vsel %vm1033, %v3749, %v3750
        %v3752 = vrot.slane %v3745, 2
        %v3753 = vsel %vm1033, %v3750, %v3752
        %3754 = vrot.lane.b32.xlu0 %v3751, 127
        %v3755 = vpop.permute.xlu0 %3754
        %3756 = vrot.lane.b32.xlu0 %v3753, 127
        %v3757 = vpop.permute.xlu0 %3756
        %v3760 = vadd.f32 %v3592, %v3755
        %v3761 = vadd.f32 %v3593, %v3757
        %s3762 = sld [smem:[#allocation3 + $0x1a]]
        %v3763 = vstv %s3762
        %v3764 = vmul.f32 %v3763, %v274
        %v3765 = vmul.f32 %v3763, %v275
        %v3766 = vmul.f32 %v3763, %v276
        %v3770 = vrot.slane %v3764, 2
        %v3771 = vrot.slane %v3765, 2
        %v3772 = vsel %vm1033, %v3770, %v3771
        %v3773 = vrot.slane %v3766, 2
        %v3774 = vsel %vm1033, %v3771, %v3773
        %3775 = vrot.lane.b32.xlu0 %v3772, 126
        %v3776 = vpop.permute.xlu0 %3775
        %3777 = vrot.lane.b32.xlu0 %v3774, 126
        %v3778 = vpop.permute.xlu0 %3777
        %v3781 = vadd.f32 %v3613, %v3776
        %v3782 = vadd.f32 %v3614, %v3778
        %s3783 = sld [smem:[#allocation3 + $0x3e]]
        %v3784 = vstv %s3783
        %v3785 = vmul.f32 %v3784, %v274
        %v3786 = vmul.f32 %v3784, %v275
        %v3787 = vmul.f32 %v3784, %v276
        %v3791 = vrot.slane %v3785, 2
        %v3792 = vrot.slane %v3786, 2
        %v3793 = vsel %vm1033, %v3791, %v3792
        %v3794 = vrot.slane %v3787, 2
        %v3795 = vsel %vm1033, %v3792, %v3794
        %3796 = vrot.lane.b32.xlu0 %v3793, 126
        %v3797 = vpop.permute.xlu0 %3796
        %3798 = vrot.lane.b32.xlu0 %v3795, 126
        %v3799 = vpop.permute.xlu0 %3798
        %v3802 = vadd.f32 %v3634, %v3797
        %v3803 = vadd.f32 %v3635, %v3799
        %s3804 = sld [smem:[#allocation3 + $0x62]]
        %v3805 = vstv %s3804
        %v3806 = vmul.f32 %v3805, %v274
        %v3807 = vmul.f32 %v3805, %v275
        %v3808 = vmul.f32 %v3805, %v276
        %v3812 = vrot.slane %v3806, 2
        %v3813 = vrot.slane %v3807, 2
        %v3814 = vsel %vm1033, %v3812, %v3813
        %v3815 = vrot.slane %v3808, 2
        %v3816 = vsel %vm1033, %v3813, %v3815
        %3817 = vrot.lane.b32.xlu0 %v3814, 126
        %v3818 = vpop.permute.xlu0 %3817
        %3819 = vrot.lane.b32.xlu0 %v3816, 126
        %v3820 = vpop.permute.xlu0 %3819
        %v3823 = vadd.f32 %v3655, %v3818
        %v3824 = vadd.f32 %v3656, %v3820
        %s3825 = sld [smem:[#allocation3 + $0x86]]
        %v3826 = vstv %s3825
        %v3827 = vmul.f32 %v3826, %v274
        %v3828 = vmul.f32 %v3826, %v275
        %v3829 = vmul.f32 %v3826, %v276
        %v3833 = vrot.slane %v3827, 2
        %v3834 = vrot.slane %v3828, 2
        %v3835 = vsel %vm1033, %v3833, %v3834
        %v3836 = vrot.slane %v3829, 2
        %v3837 = vsel %vm1033, %v3834, %v3836
        %3838 = vrot.lane.b32.xlu0 %v3835, 126
        %v3839 = vpop.permute.xlu0 %3838
        %3840 = vrot.lane.b32.xlu0 %v3837, 126
        %v3841 = vpop.permute.xlu0 %3840
        %v3844 = vadd.f32 %v3676, %v3839
        %v3845 = vadd.f32 %v3677, %v3841
        %s3846 = sld [smem:[#allocation3 + $0xaa]]
        %v3847 = vstv %s3846
        %v3848 = vmul.f32 %v3847, %v274
        %v3849 = vmul.f32 %v3847, %v275
        %v3850 = vmul.f32 %v3847, %v276
        %v3854 = vrot.slane %v3848, 2
        %v3855 = vrot.slane %v3849, 2
        %v3856 = vsel %vm1033, %v3854, %v3855
        %v3857 = vrot.slane %v3850, 2
        %v3858 = vsel %vm1033, %v3855, %v3857
        %3859 = vrot.lane.b32.xlu0 %v3856, 126
        %v3860 = vpop.permute.xlu0 %3859
        %3861 = vrot.lane.b32.xlu0 %v3858, 126
        %v3862 = vpop.permute.xlu0 %3861
        %v3865 = vadd.f32 %v3697, %v3860
        %v3866 = vadd.f32 %v3698, %v3862
        %s3867 = sld [smem:[#allocation3 + $0xce]]
        %v3868 = vstv %s3867
        %v3869 = vmul.f32 %v3868, %v274
        %v3870 = vmul.f32 %v3868, %v275
        %v3871 = vmul.f32 %v3868, %v276
        %v3875 = vrot.slane %v3869, 2
        %v3876 = vrot.slane %v3870, 2
        %v3877 = vsel %vm1033, %v3875, %v3876
        %v3878 = vrot.slane %v3871, 2
        %v3879 = vsel %vm1033, %v3876, %v3878
        %3880 = vrot.lane.b32.xlu0 %v3877, 126
        %v3881 = vpop.permute.xlu0 %3880
        %3882 = vrot.lane.b32.xlu0 %v3879, 126
        %v3883 = vpop.permute.xlu0 %3882
        %v3886 = vadd.f32 %v3718, %v3881
        %v3887 = vadd.f32 %v3719, %v3883
        %s3888 = sld [smem:[#allocation3 + $0xf2]]
        %v3889 = vstv %s3888
        %v3890 = vmul.f32 %v3889, %v274
        %v3891 = vmul.f32 %v3889, %v275
        %v3892 = vmul.f32 %v3889, %v276
        %v3896 = vrot.slane %v3890, 2
        %v3897 = vrot.slane %v3891, 2
        %v3898 = vsel %vm1033, %v3896, %v3897
        %v3899 = vrot.slane %v3892, 2
        %v3900 = vsel %vm1033, %v3897, %v3899
        %3901 = vrot.lane.b32.xlu0 %v3898, 126
        %v3902 = vpop.permute.xlu0 %3901
        %3903 = vrot.lane.b32.xlu0 %v3900, 126
        %v3904 = vpop.permute.xlu0 %3903
        %v3907 = vadd.f32 %v3739, %v3902
        %v3908 = vadd.f32 %v3740, %v3904
        %s3909 = sld [smem:[#allocation3 + $0x116]]
        %v3910 = vstv %s3909
        %v3911 = vmul.f32 %v3910, %v274
        %v3912 = vmul.f32 %v3910, %v275
        %v3913 = vmul.f32 %v3910, %v276
        %v3917 = vrot.slane %v3911, 2
        %v3918 = vrot.slane %v3912, 2
        %v3919 = vsel %vm1033, %v3917, %v3918
        %v3920 = vrot.slane %v3913, 2
        %v3921 = vsel %vm1033, %v3918, %v3920
        %3922 = vrot.lane.b32.xlu0 %v3919, 126
        %v3923 = vpop.permute.xlu0 %3922
        %3924 = vrot.lane.b32.xlu0 %v3921, 126
        %v3925 = vpop.permute.xlu0 %3924
        %v3928 = vadd.f32 %v3760, %v3923
        %v3929 = vadd.f32 %v3761, %v3925
        %s3930 = sld [smem:[#allocation3 + $0x1b]]
        %v3931 = vstv %s3930
        %v3932 = vmul.f32 %v3931, %v277
        %v3933 = vmul.f32 %v3931, %v278
        %v3934 = vadd.f32 %v3781, %v3932
        %v3935 = vadd.f32 %v3782, %v3933
        %s3936 = sld [smem:[#allocation3 + $0x3f]]
        %v3937 = vstv %s3936
        %v3938 = vmul.f32 %v3937, %v277
        %v3939 = vmul.f32 %v3937, %v278
        %v3940 = vadd.f32 %v3802, %v3938
        %v3941 = vadd.f32 %v3803, %v3939
        %s3942 = sld [smem:[#allocation3 + $0x63]]
        %v3943 = vstv %s3942
        %v3944 = vmul.f32 %v3943, %v277
        %v3945 = vmul.f32 %v3943, %v278
        %v3946 = vadd.f32 %v3823, %v3944
        %v3947 = vadd.f32 %v3824, %v3945
        %s3948 = sld [smem:[#allocation3 + $0x87]]
        %v3949 = vstv %s3948
        %v3950 = vmul.f32 %v3949, %v277
        %v3951 = vmul.f32 %v3949, %v278
        %v3952 = vadd.f32 %v3844, %v3950
        %v3953 = vadd.f32 %v3845, %v3951
        %s3954 = sld [smem:[#allocation3 + $0xab]]
        %v3955 = vstv %s3954
        %v3956 = vmul.f32 %v3955, %v277
        %v3957 = vmul.f32 %v3955, %v278
        %v3958 = vadd.f32 %v3865, %v3956
        %v3959 = vadd.f32 %v3866, %v3957
        %s3960 = sld [smem:[#allocation3 + $0xcf]]
        %v3961 = vstv %s3960
        %v3962 = vmul.f32 %v3961, %v277
        %v3963 = vmul.f32 %v3961, %v278
        %v3964 = vadd.f32 %v3886, %v3962
        %v3965 = vadd.f32 %v3887, %v3963
        %s3966 = sld [smem:[#allocation3 + $0xf3]]
        %v3967 = vstv %s3966
        %v3968 = vmul.f32 %v3967, %v277
        %v3969 = vmul.f32 %v3967, %v278
        %v3970 = vadd.f32 %v3907, %v3968
        %v3971 = vadd.f32 %v3908, %v3969
        %s3972 = sld [smem:[#allocation3 + $0x117]]
        %v3973 = vstv %s3972
        %v3974 = vmul.f32 %v3973, %v277
        %v3975 = vmul.f32 %v3973, %v278
        %v3976 = vadd.f32 %v3928, %v3974
        %v3977 = vadd.f32 %v3929, %v3975
        %s3978 = sld [smem:[#allocation3 + $0x1c]]
        %v3979 = vstv %s3978
        %v3980 = vmul.f32 %v3979, %v277
        %v3981 = vmul.f32 %v3979, %v278
        %3984 = vrot.lane.b32.xlu0 %v3980, 127
        %v3985 = vpop.permute.xlu0 %3984
        %3986 = vrot.lane.b32.xlu0 %v3981, 127
        %v3987 = vpop.permute.xlu0 %3986
        %v3990 = vadd.f32 %v3934, %v3985
        %v3991 = vadd.f32 %v3935, %v3987
        %s3992 = sld [smem:[#allocation3 + $0x40]]
        %v3993 = vstv %s3992
        %v3994 = vmul.f32 %v3993, %v277
        %v3995 = vmul.f32 %v3993, %v278
        %3998 = vrot.lane.b32.xlu0 %v3994, 127
        %v3999 = vpop.permute.xlu0 %3998
        %4000 = vrot.lane.b32.xlu0 %v3995, 127
        %v4001 = vpop.permute.xlu0 %4000
        %v4004 = vadd.f32 %v3940, %v3999
        %v4005 = vadd.f32 %v3941, %v4001
        %s4006 = sld [smem:[#allocation3 + $0x64]]
        %v4007 = vstv %s4006
        %v4008 = vmul.f32 %v4007, %v277
        %v4009 = vmul.f32 %v4007, %v278
        %4012 = vrot.lane.b32.xlu0 %v4008, 127
        %v4013 = vpop.permute.xlu0 %4012
        %4014 = vrot.lane.b32.xlu0 %v4009, 127
        %v4015 = vpop.permute.xlu0 %4014
        %v4018 = vadd.f32 %v3946, %v4013
        %v4019 = vadd.f32 %v3947, %v4015
        %s4020 = sld [smem:[#allocation3 + $0x88]]
        %v4021 = vstv %s4020
        %v4022 = vmul.f32 %v4021, %v277
        %v4023 = vmul.f32 %v4021, %v278
        %4026 = vrot.lane.b32.xlu0 %v4022, 127
        %v4027 = vpop.permute.xlu0 %4026
        %4028 = vrot.lane.b32.xlu0 %v4023, 127
        %v4029 = vpop.permute.xlu0 %4028
        %v4032 = vadd.f32 %v3952, %v4027
        %v4033 = vadd.f32 %v3953, %v4029
        %s4034 = sld [smem:[#allocation3 + $0xac]]
        %v4035 = vstv %s4034
        %v4036 = vmul.f32 %v4035, %v277
        %v4037 = vmul.f32 %v4035, %v278
        %4040 = vrot.lane.b32.xlu0 %v4036, 127
        %v4041 = vpop.permute.xlu0 %4040
        %4042 = vrot.lane.b32.xlu0 %v4037, 127
        %v4043 = vpop.permute.xlu0 %4042
        %v4046 = vadd.f32 %v3958, %v4041
        %v4047 = vadd.f32 %v3959, %v4043
        %s4048 = sld [smem:[#allocation3 + $0xd0]]
        %v4049 = vstv %s4048
        %v4050 = vmul.f32 %v4049, %v277
        %v4051 = vmul.f32 %v4049, %v278
        %4054 = vrot.lane.b32.xlu0 %v4050, 127
        %v4055 = vpop.permute.xlu0 %4054
        %4056 = vrot.lane.b32.xlu0 %v4051, 127
        %v4057 = vpop.permute.xlu0 %4056
        %v4060 = vadd.f32 %v3964, %v4055
        %v4061 = vadd.f32 %v3965, %v4057
        %s4062 = sld [smem:[#allocation3 + $0xf4]]
        %v4063 = vstv %s4062
        %v4064 = vmul.f32 %v4063, %v277
        %v4065 = vmul.f32 %v4063, %v278
        %4068 = vrot.lane.b32.xlu0 %v4064, 127
        %v4069 = vpop.permute.xlu0 %4068
        %4070 = vrot.lane.b32.xlu0 %v4065, 127
        %v4071 = vpop.permute.xlu0 %4070
        %v4074 = vadd.f32 %v3970, %v4069
        %v4075 = vadd.f32 %v3971, %v4071
        %s4076 = sld [smem:[#allocation3 + $0x118]]
        %v4077 = vstv %s4076
        %v4078 = vmul.f32 %v4077, %v277
        %v4079 = vmul.f32 %v4077, %v278
        %4082 = vrot.lane.b32.xlu0 %v4078, 127
        %v4083 = vpop.permute.xlu0 %4082
        %4084 = vrot.lane.b32.xlu0 %v4079, 127
        %v4085 = vpop.permute.xlu0 %4084
        %v4088 = vadd.f32 %v3976, %v4083
        %v4089 = vadd.f32 %v3977, %v4085
        %s4090 = sld [smem:[#allocation3 + $0x1d]]
        %v4091 = vstv %s4090
        %v4092 = vmul.f32 %v4091, %v277
        %v4093 = vmul.f32 %v4091, %v278
        %4096 = vrot.lane.b32.xlu0 %v4092, 126
        %v4097 = vpop.permute.xlu0 %4096
        %4098 = vrot.lane.b32.xlu0 %v4093, 126
        %v4099 = vpop.permute.xlu0 %4098
        %v4102 = vadd.f32 %v3990, %v4097
        %v4103 = vadd.f32 %v3991, %v4099
        %s4104 = sld [smem:[#allocation3 + $0x41]]
        %v4105 = vstv %s4104
        %v4106 = vmul.f32 %v4105, %v277
        %v4107 = vmul.f32 %v4105, %v278
        %4110 = vrot.lane.b32.xlu0 %v4106, 126
        %v4111 = vpop.permute.xlu0 %4110
        %4112 = vrot.lane.b32.xlu0 %v4107, 126
        %v4113 = vpop.permute.xlu0 %4112
        %v4116 = vadd.f32 %v4004, %v4111
        %v4117 = vadd.f32 %v4005, %v4113
        %s4118 = sld [smem:[#allocation3 + $0x65]]
        %v4119 = vstv %s4118
        %v4120 = vmul.f32 %v4119, %v277
        %v4121 = vmul.f32 %v4119, %v278
        %4124 = vrot.lane.b32.xlu0 %v4120, 126
        %v4125 = vpop.permute.xlu0 %4124
        %4126 = vrot.lane.b32.xlu0 %v4121, 126
        %v4127 = vpop.permute.xlu0 %4126
        %v4130 = vadd.f32 %v4018, %v4125
        %v4131 = vadd.f32 %v4019, %v4127
        %s4132 = sld [smem:[#allocation3 + $0x89]]
        %v4133 = vstv %s4132
        %v4134 = vmul.f32 %v4133, %v277
        %v4135 = vmul.f32 %v4133, %v278
        %4138 = vrot.lane.b32.xlu0 %v4134, 126
        %v4139 = vpop.permute.xlu0 %4138
        %4140 = vrot.lane.b32.xlu0 %v4135, 126
        %v4141 = vpop.permute.xlu0 %4140
        %v4144 = vadd.f32 %v4032, %v4139
        %v4145 = vadd.f32 %v4033, %v4141
        %s4146 = sld [smem:[#allocation3 + $0xad]]
        %v4147 = vstv %s4146
        %v4148 = vmul.f32 %v4147, %v277
        %v4149 = vmul.f32 %v4147, %v278
        %4152 = vrot.lane.b32.xlu0 %v4148, 126
        %v4153 = vpop.permute.xlu0 %4152
        %4154 = vrot.lane.b32.xlu0 %v4149, 126
        %v4155 = vpop.permute.xlu0 %4154
        %v4158 = vadd.f32 %v4046, %v4153
        %v4159 = vadd.f32 %v4047, %v4155
        %s4160 = sld [smem:[#allocation3 + $0xd1]]
        %v4161 = vstv %s4160
        %v4162 = vmul.f32 %v4161, %v277
        %v4163 = vmul.f32 %v4161, %v278
        %4166 = vrot.lane.b32.xlu0 %v4162, 126
        %v4167 = vpop.permute.xlu0 %4166
        %4168 = vrot.lane.b32.xlu0 %v4163, 126
        %v4169 = vpop.permute.xlu0 %4168
        %v4172 = vadd.f32 %v4060, %v4167
        %v4173 = vadd.f32 %v4061, %v4169
        %s4174 = sld [smem:[#allocation3 + $0xf5]]
        %v4175 = vstv %s4174
        %v4176 = vmul.f32 %v4175, %v277
        %v4177 = vmul.f32 %v4175, %v278
        %4180 = vrot.lane.b32.xlu0 %v4176, 126
        %v4181 = vpop.permute.xlu0 %4180
        %4182 = vrot.lane.b32.xlu0 %v4177, 126
        %v4183 = vpop.permute.xlu0 %4182
        %v4186 = vadd.f32 %v4074, %v4181
        %v4187 = vadd.f32 %v4075, %v4183
        %s4188 = sld [smem:[#allocation3 + $0x119]]
        %v4189 = vstv %s4188
        %v4190 = vmul.f32 %v4189, %v277
        %v4191 = vmul.f32 %v4189, %v278
        %4194 = vrot.lane.b32.xlu0 %v4190, 126
        %v4195 = vpop.permute.xlu0 %4194
        %4196 = vrot.lane.b32.xlu0 %v4191, 126
        %v4197 = vpop.permute.xlu0 %4196
        %v4200 = vadd.f32 %v4088, %v4195
        %v4201 = vadd.f32 %v4089, %v4197
        %s4202 = sld [smem:[#allocation3 + $0x1e]]
        %v4203 = vstv %s4202
        %v4204 = vmul.f32 %v4203, %v277
        %v4205 = vmul.f32 %v4203, %v278
        %v4206 = vmul.f32 %v4203, %v279
        %v4210 = vrot.slane %v4204, 1
        %v4211 = vrot.slane %v4205, 1
        %v4212 = vsel %vm560, %v4210, %v4211
        %v4213 = vrot.slane %v4206, 1
        %v4214 = vsel %vm560, %v4211, %v4213
        %v4217 = vadd.f32 %v4102, %v4212
        %v4218 = vadd.f32 %v4103, %v4214
        %s4219 = sld [smem:[#allocation3 + $0x42]]
        %v4220 = vstv %s4219
        %v4221 = vmul.f32 %v4220, %v277
        %v4222 = vmul.f32 %v4220, %v278
        %v4223 = vmul.f32 %v4220, %v279
        %v4227 = vrot.slane %v4221, 1
        %v4228 = vrot.slane %v4222, 1
        %v4229 = vsel %vm560, %v4227, %v4228
        %v4230 = vrot.slane %v4223, 1
        %v4231 = vsel %vm560, %v4228, %v4230
        %v4234 = vadd.f32 %v4116, %v4229
        %v4235 = vadd.f32 %v4117, %v4231
        %s4236 = sld [smem:[#allocation3 + $0x66]]
        %v4237 = vstv %s4236
        %v4238 = vmul.f32 %v4237, %v277
        %v4239 = vmul.f32 %v4237, %v278
        %v4240 = vmul.f32 %v4237, %v279
        %v4244 = vrot.slane %v4238, 1
        %v4245 = vrot.slane %v4239, 1
        %v4246 = vsel %vm560, %v4244, %v4245
        %v4247 = vrot.slane %v4240, 1
        %v4248 = vsel %vm560, %v4245, %v4247
        %v4251 = vadd.f32 %v4130, %v4246
        %v4252 = vadd.f32 %v4131, %v4248
        %s4253 = sld [smem:[#allocation3 + $0x8a]]
        %v4254 = vstv %s4253
        %v4255 = vmul.f32 %v4254, %v277
        %v4256 = vmul.f32 %v4254, %v278
        %v4257 = vmul.f32 %v4254, %v279
        %v4261 = vrot.slane %v4255, 1
        %v4262 = vrot.slane %v4256, 1
        %v4263 = vsel %vm560, %v4261, %v4262
        %v4264 = vrot.slane %v4257, 1
        %v4265 = vsel %vm560, %v4262, %v4264
        %v4268 = vadd.f32 %v4144, %v4263
        %v4269 = vadd.f32 %v4145, %v4265
        %s4270 = sld [smem:[#allocation3 + $0xae]]
        %v4271 = vstv %s4270
        %v4272 = vmul.f32 %v4271, %v277
        %v4273 = vmul.f32 %v4271, %v278
        %v4274 = vmul.f32 %v4271, %v279
        %v4278 = vrot.slane %v4272, 1
        %v4279 = vrot.slane %v4273, 1
        %v4280 = vsel %vm560, %v4278, %v4279
        %v4281 = vrot.slane %v4274, 1
        %v4282 = vsel %vm560, %v4279, %v4281
        %v4285 = vadd.f32 %v4158, %v4280
        %v4286 = vadd.f32 %v4159, %v4282
        %s4287 = sld [smem:[#allocation3 + $0xd2]]
        %v4288 = vstv %s4287
        %v4289 = vmul.f32 %v4288, %v277
        %v4290 = vmul.f32 %v4288, %v278
        %v4291 = vmul.f32 %v4288, %v279
        %v4295 = vrot.slane %v4289, 1
        %v4296 = vrot.slane %v4290, 1
        %v4297 = vsel %vm560, %v4295, %v4296
        %v4298 = vrot.slane %v4291, 1
        %v4299 = vsel %vm560, %v4296, %v4298
        %v4302 = vadd.f32 %v4172, %v4297
        %v4303 = vadd.f32 %v4173, %v4299
        %s4304 = sld [smem:[#allocation3 + $0xf6]]
        %v4305 = vstv %s4304
        %v4306 = vmul.f32 %v4305, %v277
        %v4307 = vmul.f32 %v4305, %v278
        %v4308 = vmul.f32 %v4305, %v279
        %v4312 = vrot.slane %v4306, 1
        %v4313 = vrot.slane %v4307, 1
        %v4314 = vsel %vm560, %v4312, %v4313
        %v4315 = vrot.slane %v4308, 1
        %v4316 = vsel %vm560, %v4313, %v4315
        %v4319 = vadd.f32 %v4186, %v4314
        %v4320 = vadd.f32 %v4187, %v4316
        %s4321 = sld [smem:[#allocation3 + $0x11a]]
        %v4322 = vstv %s4321
        %v4323 = vmul.f32 %v4322, %v277
        %v4324 = vmul.f32 %v4322, %v278
        %v4325 = vmul.f32 %v4322, %v279
        %v4329 = vrot.slane %v4323, 1
        %v4330 = vrot.slane %v4324, 1
        %v4331 = vsel %vm560, %v4329, %v4330
        %v4332 = vrot.slane %v4325, 1
        %v4333 = vsel %vm560, %v4330, %v4332
        %v4336 = vadd.f32 %v4200, %v4331
        %v4337 = vadd.f32 %v4201, %v4333
        %s4338 = sld [smem:[#allocation3 + $0x1f]]
        %v4339 = vstv %s4338
        %v4340 = vmul.f32 %v4339, %v277
        %v4341 = vmul.f32 %v4339, %v278
        %v4342 = vmul.f32 %v4339, %v279
        %v4346 = vrot.slane %v4340, 1
        %v4347 = vrot.slane %v4341, 1
        %v4348 = vsel %vm560, %v4346, %v4347
        %v4349 = vrot.slane %v4342, 1
        %v4350 = vsel %vm560, %v4347, %v4349
        %4351 = vrot.lane.b32.xlu0 %v4348, 127
        %v4352 = vpop.permute.xlu0 %4351
        %4353 = vrot.lane.b32.xlu0 %v4350, 127
        %v4354 = vpop.permute.xlu0 %4353
        %v4357 = vadd.f32 %v4217, %v4352
        %v4358 = vadd.f32 %v4218, %v4354
        %s4359 = sld [smem:[#allocation3 + $0x43]]
        %v4360 = vstv %s4359
        %v4361 = vmul.f32 %v4360, %v277
        %v4362 = vmul.f32 %v4360, %v278
        %v4363 = vmul.f32 %v4360, %v279
        %v4367 = vrot.slane %v4361, 1
        %v4368 = vrot.slane %v4362, 1
        %v4369 = vsel %vm560, %v4367, %v4368
        %v4370 = vrot.slane %v4363, 1
        %v4371 = vsel %vm560, %v4368, %v4370
        %4372 = vrot.lane.b32.xlu0 %v4369, 127
        %v4373 = vpop.permute.xlu0 %4372
        %4374 = vrot.lane.b32.xlu0 %v4371, 127
        %v4375 = vpop.permute.xlu0 %4374
        %v4378 = vadd.f32 %v4234, %v4373
        %v4379 = vadd.f32 %v4235, %v4375
        %s4380 = sld [smem:[#allocation3 + $0x67]]
        %v4381 = vstv %s4380
        %v4382 = vmul.f32 %v4381, %v277
        %v4383 = vmul.f32 %v4381, %v278
        %v4384 = vmul.f32 %v4381, %v279
        %v4388 = vrot.slane %v4382, 1
        %v4389 = vrot.slane %v4383, 1
        %v4390 = vsel %vm560, %v4388, %v4389
        %v4391 = vrot.slane %v4384, 1
        %v4392 = vsel %vm560, %v4389, %v4391
        %4393 = vrot.lane.b32.xlu0 %v4390, 127
        %v4394 = vpop.permute.xlu0 %4393
        %4395 = vrot.lane.b32.xlu0 %v4392, 127
        %v4396 = vpop.permute.xlu0 %4395
        %v4399 = vadd.f32 %v4251, %v4394
        %v4400 = vadd.f32 %v4252, %v4396
        %s4401 = sld [smem:[#allocation3 + $0x8b]]
        %v4402 = vstv %s4401
        %v4403 = vmul.f32 %v4402, %v277
        %v4404 = vmul.f32 %v4402, %v278
        %v4405 = vmul.f32 %v4402, %v279
        %v4409 = vrot.slane %v4403, 1
        %v4410 = vrot.slane %v4404, 1
        %v4411 = vsel %vm560, %v4409, %v4410
        %v4412 = vrot.slane %v4405, 1
        %v4413 = vsel %vm560, %v4410, %v4412
        %4414 = vrot.lane.b32.xlu0 %v4411, 127
        %v4415 = vpop.permute.xlu0 %4414
        %4416 = vrot.lane.b32.xlu0 %v4413, 127
        %v4417 = vpop.permute.xlu0 %4416
        %v4420 = vadd.f32 %v4268, %v4415
        %v4421 = vadd.f32 %v4269, %v4417
        %s4422 = sld [smem:[#allocation3 + $0xaf]]
        %v4423 = vstv %s4422
        %v4424 = vmul.f32 %v4423, %v277
        %v4425 = vmul.f32 %v4423, %v278
        %v4426 = vmul.f32 %v4423, %v279
        %v4430 = vrot.slane %v4424, 1
        %v4431 = vrot.slane %v4425, 1
        %v4432 = vsel %vm560, %v4430, %v4431
        %v4433 = vrot.slane %v4426, 1
        %v4434 = vsel %vm560, %v4431, %v4433
        %4435 = vrot.lane.b32.xlu0 %v4432, 127
        %v4436 = vpop.permute.xlu0 %4435
        %4437 = vrot.lane.b32.xlu0 %v4434, 127
        %v4438 = vpop.permute.xlu0 %4437
        %v4441 = vadd.f32 %v4285, %v4436
        %v4442 = vadd.f32 %v4286, %v4438
        %s4443 = sld [smem:[#allocation3 + $0xd3]]
        %v4444 = vstv %s4443
        %v4445 = vmul.f32 %v4444, %v277
        %v4446 = vmul.f32 %v4444, %v278
        %v4447 = vmul.f32 %v4444, %v279
        %v4451 = vrot.slane %v4445, 1
        %v4452 = vrot.slane %v4446, 1
        %v4453 = vsel %vm560, %v4451, %v4452
        %v4454 = vrot.slane %v4447, 1
        %v4455 = vsel %vm560, %v4452, %v4454
        %4456 = vrot.lane.b32.xlu0 %v4453, 127
        %v4457 = vpop.permute.xlu0 %4456
        %4458 = vrot.lane.b32.xlu0 %v4455, 127
        %v4459 = vpop.permute.xlu0 %4458
        %v4462 = vadd.f32 %v4302, %v4457
        %v4463 = vadd.f32 %v4303, %v4459
        %s4464 = sld [smem:[#allocation3 + $0xf7]]
        %v4465 = vstv %s4464
        %v4466 = vmul.f32 %v4465, %v277
        %v4467 = vmul.f32 %v4465, %v278
        %v4468 = vmul.f32 %v4465, %v279
        %v4472 = vrot.slane %v4466, 1
        %v4473 = vrot.slane %v4467, 1
        %v4474 = vsel %vm560, %v4472, %v4473
        %v4475 = vrot.slane %v4468, 1
        %v4476 = vsel %vm560, %v4473, %v4475
        %4477 = vrot.lane.b32.xlu0 %v4474, 127
        %v4478 = vpop.permute.xlu0 %4477
        %4479 = vrot.lane.b32.xlu0 %v4476, 127
        %v4480 = vpop.permute.xlu0 %4479
        %v4483 = vadd.f32 %v4319, %v4478
        %v4484 = vadd.f32 %v4320, %v4480
        %s4485 = sld [smem:[#allocation3 + $0x11b]]
        %v4486 = vstv %s4485
        %v4487 = vmul.f32 %v4486, %v277
        %v4488 = vmul.f32 %v4486, %v278
        %v4489 = vmul.f32 %v4486, %v279
        %v4493 = vrot.slane %v4487, 1
        %v4494 = vrot.slane %v4488, 1
        %v4495 = vsel %vm560, %v4493, %v4494
        %v4496 = vrot.slane %v4489, 1
        %v4497 = vsel %vm560, %v4494, %v4496
        %4498 = vrot.lane.b32.xlu0 %v4495, 127
        %v4499 = vpop.permute.xlu0 %4498
        %4500 = vrot.lane.b32.xlu0 %v4497, 127
        %v4501 = vpop.permute.xlu0 %4500
        %v4504 = vadd.f32 %v4336, %v4499
        %v4505 = vadd.f32 %v4337, %v4501
        %s4506 = sld [smem:[#allocation3 + $0x20]]
        %v4507 = vstv %s4506
        %v4508 = vmul.f32 %v4507, %v277
        %v4509 = vmul.f32 %v4507, %v278
        %v4510 = vmul.f32 %v4507, %v279
        %v4514 = vrot.slane %v4508, 1
        %v4515 = vrot.slane %v4509, 1
        %v4516 = vsel %vm560, %v4514, %v4515
        %v4517 = vrot.slane %v4510, 1
        %v4518 = vsel %vm560, %v4515, %v4517
        %4519 = vrot.lane.b32.xlu0 %v4516, 126
        %v4520 = vpop.permute.xlu0 %4519
        %4521 = vrot.lane.b32.xlu0 %v4518, 126
        %v4522 = vpop.permute.xlu0 %4521
        %v4525 = vadd.f32 %v4357, %v4520
        %v4526 = vadd.f32 %v4358, %v4522
        %s4527 = sld [smem:[#allocation3 + $0x44]]
        %v4528 = vstv %s4527
        %v4529 = vmul.f32 %v4528, %v277
        %v4530 = vmul.f32 %v4528, %v278
        %v4531 = vmul.f32 %v4528, %v279
        %v4535 = vrot.slane %v4529, 1
        %v4536 = vrot.slane %v4530, 1
        %v4537 = vsel %vm560, %v4535, %v4536
        %v4538 = vrot.slane %v4531, 1
        %v4539 = vsel %vm560, %v4536, %v4538
        %4540 = vrot.lane.b32.xlu0 %v4537, 126
        %v4541 = vpop.permute.xlu0 %4540
        %4542 = vrot.lane.b32.xlu0 %v4539, 126
        %v4543 = vpop.permute.xlu0 %4542
        %v4546 = vadd.f32 %v4378, %v4541
        %v4547 = vadd.f32 %v4379, %v4543
        %s4548 = sld [smem:[#allocation3 + $0x68]]
        %v4549 = vstv %s4548
        %v4550 = vmul.f32 %v4549, %v277
        %v4551 = vmul.f32 %v4549, %v278
        %v4552 = vmul.f32 %v4549, %v279
        %v4556 = vrot.slane %v4550, 1
        %v4557 = vrot.slane %v4551, 1
        %v4558 = vsel %vm560, %v4556, %v4557
        %v4559 = vrot.slane %v4552, 1
        %v4560 = vsel %vm560, %v4557, %v4559
        %4561 = vrot.lane.b32.xlu0 %v4558, 126
        %v4562 = vpop.permute.xlu0 %4561
        %4563 = vrot.lane.b32.xlu0 %v4560, 126
        %v4564 = vpop.permute.xlu0 %4563
        %v4567 = vadd.f32 %v4399, %v4562
        %v4568 = vadd.f32 %v4400, %v4564
        %s4569 = sld [smem:[#allocation3 + $0x8c]]
        %v4570 = vstv %s4569
        %v4571 = vmul.f32 %v4570, %v277
        %v4572 = vmul.f32 %v4570, %v278
        %v4573 = vmul.f32 %v4570, %v279
        %v4577 = vrot.slane %v4571, 1
        %v4578 = vrot.slane %v4572, 1
        %v4579 = vsel %vm560, %v4577, %v4578
        %v4580 = vrot.slane %v4573, 1
        %v4581 = vsel %vm560, %v4578, %v4580
        %4582 = vrot.lane.b32.xlu0 %v4579, 126
        %v4583 = vpop.permute.xlu0 %4582
        %4584 = vrot.lane.b32.xlu0 %v4581, 126
        %v4585 = vpop.permute.xlu0 %4584
        %v4588 = vadd.f32 %v4420, %v4583
        %v4589 = vadd.f32 %v4421, %v4585
        %s4590 = sld [smem:[#allocation3 + $0xb0]]
        %v4591 = vstv %s4590
        %v4592 = vmul.f32 %v4591, %v277
        %v4593 = vmul.f32 %v4591, %v278
        %v4594 = vmul.f32 %v4591, %v279
        %v4598 = vrot.slane %v4592, 1
        %v4599 = vrot.slane %v4593, 1
        %v4600 = vsel %vm560, %v4598, %v4599
        %v4601 = vrot.slane %v4594, 1
        %v4602 = vsel %vm560, %v4599, %v4601
        %4603 = vrot.lane.b32.xlu0 %v4600, 126
        %v4604 = vpop.permute.xlu0 %4603
        %4605 = vrot.lane.b32.xlu0 %v4602, 126
        %v4606 = vpop.permute.xlu0 %4605
        %v4609 = vadd.f32 %v4441, %v4604
        %v4610 = vadd.f32 %v4442, %v4606
        %s4611 = sld [smem:[#allocation3 + $0xd4]]
        %v4612 = vstv %s4611
        %v4613 = vmul.f32 %v4612, %v277
        %v4614 = vmul.f32 %v4612, %v278
        %v4615 = vmul.f32 %v4612, %v279
        %v4619 = vrot.slane %v4613, 1
        %v4620 = vrot.slane %v4614, 1
        %v4621 = vsel %vm560, %v4619, %v4620
        %v4622 = vrot.slane %v4615, 1
        %v4623 = vsel %vm560, %v4620, %v4622
        %4624 = vrot.lane.b32.xlu0 %v4621, 126
        %v4625 = vpop.permute.xlu0 %4624
        %4626 = vrot.lane.b32.xlu0 %v4623, 126
        %v4627 = vpop.permute.xlu0 %4626
        %v4630 = vadd.f32 %v4462, %v4625
        %v4631 = vadd.f32 %v4463, %v4627
        %s4632 = sld [smem:[#allocation3 + $0xf8]]
        %v4633 = vstv %s4632
        %v4634 = vmul.f32 %v4633, %v277
        %v4635 = vmul.f32 %v4633, %v278
        %v4636 = vmul.f32 %v4633, %v279
        %v4640 = vrot.slane %v4634, 1
        %v4641 = vrot.slane %v4635, 1
        %v4642 = vsel %vm560, %v4640, %v4641
        %v4643 = vrot.slane %v4636, 1
        %v4644 = vsel %vm560, %v4641, %v4643
        %4645 = vrot.lane.b32.xlu0 %v4642, 126
        %v4646 = vpop.permute.xlu0 %4645
        %4647 = vrot.lane.b32.xlu0 %v4644, 126
        %v4648 = vpop.permute.xlu0 %4647
        %v4651 = vadd.f32 %v4483, %v4646
        %v4652 = vadd.f32 %v4484, %v4648
        %s4653 = sld [smem:[#allocation3 + $0x11c]]
        %v4654 = vstv %s4653
        %v4655 = vmul.f32 %v4654, %v277
        %v4656 = vmul.f32 %v4654, %v278
        %v4657 = vmul.f32 %v4654, %v279
        %v4661 = vrot.slane %v4655, 1
        %v4662 = vrot.slane %v4656, 1
        %v4663 = vsel %vm560, %v4661, %v4662
        %v4664 = vrot.slane %v4657, 1
        %v4665 = vsel %vm560, %v4662, %v4664
        %4666 = vrot.lane.b32.xlu0 %v4663, 126
        %v4667 = vpop.permute.xlu0 %4666
        %4668 = vrot.lane.b32.xlu0 %v4665, 126
        %v4669 = vpop.permute.xlu0 %4668
        %v4672 = vadd.f32 %v4504, %v4667
        %v4673 = vadd.f32 %v4505, %v4669
        %s4674 = sld [smem:[#allocation3 + $0x21]]
        %v4675 = vstv %s4674
        %v4676 = vmul.f32 %v4675, %v277
        %v4677 = vmul.f32 %v4675, %v278
        %v4678 = vmul.f32 %v4675, %v279
        %v4682 = vrot.slane %v4676, 2
        %v4683 = vrot.slane %v4677, 2
        %v4684 = vsel %vm1033, %v4682, %v4683
        %v4685 = vrot.slane %v4678, 2
        %v4686 = vsel %vm1033, %v4683, %v4685
        %v4689 = vadd.f32 %v4525, %v4684
        %v4690 = vadd.f32 %v4526, %v4686
        %s4691 = sld [smem:[#allocation3 + $0x45]]
        %v4692 = vstv %s4691
        %v4693 = vmul.f32 %v4692, %v277
        %v4694 = vmul.f32 %v4692, %v278
        %v4695 = vmul.f32 %v4692, %v279
        %v4699 = vrot.slane %v4693, 2
        %v4700 = vrot.slane %v4694, 2
        %v4701 = vsel %vm1033, %v4699, %v4700
        %v4702 = vrot.slane %v4695, 2
        %v4703 = vsel %vm1033, %v4700, %v4702
        %v4706 = vadd.f32 %v4546, %v4701
        %v4707 = vadd.f32 %v4547, %v4703
        %s4708 = sld [smem:[#allocation3 + $0x69]]
        %v4709 = vstv %s4708
        %v4710 = vmul.f32 %v4709, %v277
        %v4711 = vmul.f32 %v4709, %v278
        %v4712 = vmul.f32 %v4709, %v279
        %v4716 = vrot.slane %v4710, 2
        %v4717 = vrot.slane %v4711, 2
        %v4718 = vsel %vm1033, %v4716, %v4717
        %v4719 = vrot.slane %v4712, 2
        %v4720 = vsel %vm1033, %v4717, %v4719
        %v4723 = vadd.f32 %v4567, %v4718
        %v4724 = vadd.f32 %v4568, %v4720
        %s4725 = sld [smem:[#allocation3 + $0x8d]]
        %v4726 = vstv %s4725
        %v4727 = vmul.f32 %v4726, %v277
        %v4728 = vmul.f32 %v4726, %v278
        %v4729 = vmul.f32 %v4726, %v279
        %v4733 = vrot.slane %v4727, 2
        %v4734 = vrot.slane %v4728, 2
        %v4735 = vsel %vm1033, %v4733, %v4734
        %v4736 = vrot.slane %v4729, 2
        %v4737 = vsel %vm1033, %v4734, %v4736
        %v4740 = vadd.f32 %v4588, %v4735
        %v4741 = vadd.f32 %v4589, %v4737
        %s4742 = sld [smem:[#allocation3 + $0xb1]]
        %v4743 = vstv %s4742
        %v4744 = vmul.f32 %v4743, %v277
        %v4745 = vmul.f32 %v4743, %v278
        %v4746 = vmul.f32 %v4743, %v279
        %v4750 = vrot.slane %v4744, 2
        %v4751 = vrot.slane %v4745, 2
        %v4752 = vsel %vm1033, %v4750, %v4751
        %v4753 = vrot.slane %v4746, 2
        %v4754 = vsel %vm1033, %v4751, %v4753
        %v4757 = vadd.f32 %v4609, %v4752
        %v4758 = vadd.f32 %v4610, %v4754
        %s4759 = sld [smem:[#allocation3 + $0xd5]]
        %v4760 = vstv %s4759
        %v4761 = vmul.f32 %v4760, %v277
        %v4762 = vmul.f32 %v4760, %v278
        %v4763 = vmul.f32 %v4760, %v279
        %v4767 = vrot.slane %v4761, 2
        %v4768 = vrot.slane %v4762, 2
        %v4769 = vsel %vm1033, %v4767, %v4768
        %v4770 = vrot.slane %v4763, 2
        %v4771 = vsel %vm1033, %v4768, %v4770
        %v4774 = vadd.f32 %v4630, %v4769
        %v4775 = vadd.f32 %v4631, %v4771
        %s4776 = sld [smem:[#allocation3 + $0xf9]]
        %v4777 = vstv %s4776
        %v4778 = vmul.f32 %v4777, %v277
        %v4779 = vmul.f32 %v4777, %v278
        %v4780 = vmul.f32 %v4777, %v279
        %v4784 = vrot.slane %v4778, 2
        %v4785 = vrot.slane %v4779, 2
        %v4786 = vsel %vm1033, %v4784, %v4785
        %v4787 = vrot.slane %v4780, 2
        %v4788 = vsel %vm1033, %v4785, %v4787
        %v4791 = vadd.f32 %v4651, %v4786
        %v4792 = vadd.f32 %v4652, %v4788
        %s4793 = sld [smem:[#allocation3 + $0x11d]]
        %v4794 = vstv %s4793
        %v4795 = vmul.f32 %v4794, %v277
        %v4796 = vmul.f32 %v4794, %v278
        %v4797 = vmul.f32 %v4794, %v279
        %v4801 = vrot.slane %v4795, 2
        %v4802 = vrot.slane %v4796, 2
        %v4803 = vsel %vm1033, %v4801, %v4802
        %v4804 = vrot.slane %v4797, 2
        %v4805 = vsel %vm1033, %v4802, %v4804
        %v4808 = vadd.f32 %v4672, %v4803
        %v4809 = vadd.f32 %v4673, %v4805
        %s4810 = sld [smem:[#allocation3 + $0x22]]
        %v4811 = vstv %s4810
        %v4812 = vmul.f32 %v4811, %v277
        %v4813 = vmul.f32 %v4811, %v278
        %v4814 = vmul.f32 %v4811, %v279
        %v4818 = vrot.slane %v4812, 2
        %v4819 = vrot.slane %v4813, 2
        %v4820 = vsel %vm1033, %v4818, %v4819
        %v4821 = vrot.slane %v4814, 2
        %v4822 = vsel %vm1033, %v4819, %v4821
        %4823 = vrot.lane.b32.xlu0 %v4820, 127
        %v4824 = vpop.permute.xlu0 %4823
        %4825 = vrot.lane.b32.xlu0 %v4822, 127
        %v4826 = vpop.permute.xlu0 %4825
        %v4829 = vadd.f32 %v4689, %v4824
        %v4830 = vadd.f32 %v4690, %v4826
        %s4831 = sld [smem:[#allocation3 + $0x46]]
        %v4832 = vstv %s4831
        %v4833 = vmul.f32 %v4832, %v277
        %v4834 = vmul.f32 %v4832, %v278
        %v4835 = vmul.f32 %v4832, %v279
        %v4839 = vrot.slane %v4833, 2
        %v4840 = vrot.slane %v4834, 2
        %v4841 = vsel %vm1033, %v4839, %v4840
        %v4842 = vrot.slane %v4835, 2
        %v4843 = vsel %vm1033, %v4840, %v4842
        %4844 = vrot.lane.b32.xlu0 %v4841, 127
        %v4845 = vpop.permute.xlu0 %4844
        %4846 = vrot.lane.b32.xlu0 %v4843, 127
        %v4847 = vpop.permute.xlu0 %4846
        %v4850 = vadd.f32 %v4706, %v4845
        %v4851 = vadd.f32 %v4707, %v4847
        %s4852 = sld [smem:[#allocation3 + $0x6a]]
        %v4853 = vstv %s4852
        %v4854 = vmul.f32 %v4853, %v277
        %v4855 = vmul.f32 %v4853, %v278
        %v4856 = vmul.f32 %v4853, %v279
        %v4860 = vrot.slane %v4854, 2
        %v4861 = vrot.slane %v4855, 2
        %v4862 = vsel %vm1033, %v4860, %v4861
        %v4863 = vrot.slane %v4856, 2
        %v4864 = vsel %vm1033, %v4861, %v4863
        %4865 = vrot.lane.b32.xlu0 %v4862, 127
        %v4866 = vpop.permute.xlu0 %4865
        %4867 = vrot.lane.b32.xlu0 %v4864, 127
        %v4868 = vpop.permute.xlu0 %4867
        %v4871 = vadd.f32 %v4723, %v4866
        %v4872 = vadd.f32 %v4724, %v4868
        %s4873 = sld [smem:[#allocation3 + $0x8e]]
        %v4874 = vstv %s4873
        %v4875 = vmul.f32 %v4874, %v277
        %v4876 = vmul.f32 %v4874, %v278
        %v4877 = vmul.f32 %v4874, %v279
        %v4881 = vrot.slane %v4875, 2
        %v4882 = vrot.slane %v4876, 2
        %v4883 = vsel %vm1033, %v4881, %v4882
        %v4884 = vrot.slane %v4877, 2
        %v4885 = vsel %vm1033, %v4882, %v4884
        %4886 = vrot.lane.b32.xlu0 %v4883, 127
        %v4887 = vpop.permute.xlu0 %4886
        %4888 = vrot.lane.b32.xlu0 %v4885, 127
        %v4889 = vpop.permute.xlu0 %4888
        %v4892 = vadd.f32 %v4740, %v4887
        %v4893 = vadd.f32 %v4741, %v4889
        %s4894 = sld [smem:[#allocation3 + $0xb2]]
        %v4895 = vstv %s4894
        %v4896 = vmul.f32 %v4895, %v277
        %v4897 = vmul.f32 %v4895, %v278
        %v4898 = vmul.f32 %v4895, %v279
        %v4902 = vrot.slane %v4896, 2
        %v4903 = vrot.slane %v4897, 2
        %v4904 = vsel %vm1033, %v4902, %v4903
        %v4905 = vrot.slane %v4898, 2
        %v4906 = vsel %vm1033, %v4903, %v4905
        %4907 = vrot.lane.b32.xlu0 %v4904, 127
        %v4908 = vpop.permute.xlu0 %4907
        %4909 = vrot.lane.b32.xlu0 %v4906, 127
        %v4910 = vpop.permute.xlu0 %4909
        %v4913 = vadd.f32 %v4757, %v4908
        %v4914 = vadd.f32 %v4758, %v4910
        %s4915 = sld [smem:[#allocation3 + $0xd6]]
        %v4916 = vstv %s4915
        %v4917 = vmul.f32 %v4916, %v277
        %v4918 = vmul.f32 %v4916, %v278
        %v4919 = vmul.f32 %v4916, %v279
        %v4923 = vrot.slane %v4917, 2
        %v4924 = vrot.slane %v4918, 2
        %v4925 = vsel %vm1033, %v4923, %v4924
        %v4926 = vrot.slane %v4919, 2
        %v4927 = vsel %vm1033, %v4924, %v4926
        %4928 = vrot.lane.b32.xlu0 %v4925, 127
        %v4929 = vpop.permute.xlu0 %4928
        %4930 = vrot.lane.b32.xlu0 %v4927, 127
        %v4931 = vpop.permute.xlu0 %4930
        %v4934 = vadd.f32 %v4774, %v4929
        %v4935 = vadd.f32 %v4775, %v4931
        %s4936 = sld [smem:[#allocation3 + $0xfa]]
        %v4937 = vstv %s4936
        %v4938 = vmul.f32 %v4937, %v277
        %v4939 = vmul.f32 %v4937, %v278
        %v4940 = vmul.f32 %v4937, %v279
        %v4944 = vrot.slane %v4938, 2
        %v4945 = vrot.slane %v4939, 2
        %v4946 = vsel %vm1033, %v4944, %v4945
        %v4947 = vrot.slane %v4940, 2
        %v4948 = vsel %vm1033, %v4945, %v4947
        %4949 = vrot.lane.b32.xlu0 %v4946, 127
        %v4950 = vpop.permute.xlu0 %4949
        %4951 = vrot.lane.b32.xlu0 %v4948, 127
        %v4952 = vpop.permute.xlu0 %4951
        %v4955 = vadd.f32 %v4791, %v4950
        %v4956 = vadd.f32 %v4792, %v4952
        %s4957 = sld [smem:[#allocation3 + $0x11e]]
        %v4958 = vstv %s4957
        %v4959 = vmul.f32 %v4958, %v277
        %v4960 = vmul.f32 %v4958, %v278
        %v4961 = vmul.f32 %v4958, %v279
        %v4965 = vrot.slane %v4959, 2
        %v4966 = vrot.slane %v4960, 2
        %v4967 = vsel %vm1033, %v4965, %v4966
        %v4968 = vrot.slane %v4961, 2
        %v4969 = vsel %vm1033, %v4966, %v4968
        %4970 = vrot.lane.b32.xlu0 %v4967, 127
        %v4971 = vpop.permute.xlu0 %4970
        %4972 = vrot.lane.b32.xlu0 %v4969, 127
        %v4973 = vpop.permute.xlu0 %4972
        %v4976 = vadd.f32 %v4808, %v4971
        %v4977 = vadd.f32 %v4809, %v4973
        %s4978 = sld [smem:[#allocation3 + $0x23]]
        %v4979 = vstv %s4978
        %v4980 = vmul.f32 %v4979, %v277
        %v4981 = vmul.f32 %v4979, %v278
        %v4982 = vmul.f32 %v4979, %v279
        %v4986 = vrot.slane %v4980, 2
        %v4987 = vrot.slane %v4981, 2
        %v4988 = vsel %vm1033, %v4986, %v4987
        %v4989 = vrot.slane %v4982, 2
        %v4990 = vsel %vm1033, %v4987, %v4989
        %4991 = vrot.lane.b32.xlu0 %v4988, 126
        %v4992 = vpop.permute.xlu0 %4991
        %4993 = vrot.lane.b32.xlu0 %v4990, 126
        %v4994 = vpop.permute.xlu0 %4993
        %v4997 = vadd.f32 %v4829, %v4992
        %v4998 = vadd.f32 %v4830, %v4994
        %s4999 = sld [smem:[#allocation3 + $0x47]]
        %v5000 = vstv %s4999
        %v5001 = vmul.f32 %v5000, %v277
        %v5002 = vmul.f32 %v5000, %v278
        %v5003 = vmul.f32 %v5000, %v279
        %v5007 = vrot.slane %v5001, 2
        %v5008 = vrot.slane %v5002, 2
        %v5009 = vsel %vm1033, %v5007, %v5008
        %v5010 = vrot.slane %v5003, 2
        %v5011 = vsel %vm1033, %v5008, %v5010
        %5012 = vrot.lane.b32.xlu0 %v5009, 126
        %v5013 = vpop.permute.xlu0 %5012
        %5014 = vrot.lane.b32.xlu0 %v5011, 126
        %v5015 = vpop.permute.xlu0 %5014
        %v5018 = vadd.f32 %v4850, %v5013
        %v5019 = vadd.f32 %v4851, %v5015
        %s5020 = sld [smem:[#allocation3 + $0x6b]]
        %v5021 = vstv %s5020
        %v5022 = vmul.f32 %v5021, %v277
        %v5023 = vmul.f32 %v5021, %v278
        %v5024 = vmul.f32 %v5021, %v279
        %v5028 = vrot.slane %v5022, 2
        %v5029 = vrot.slane %v5023, 2
        %v5030 = vsel %vm1033, %v5028, %v5029
        %v5031 = vrot.slane %v5024, 2
        %v5032 = vsel %vm1033, %v5029, %v5031
        %5033 = vrot.lane.b32.xlu0 %v5030, 126
        %v5034 = vpop.permute.xlu0 %5033
        %5035 = vrot.lane.b32.xlu0 %v5032, 126
        %v5036 = vpop.permute.xlu0 %5035
        %v5039 = vadd.f32 %v4871, %v5034
        %v5040 = vadd.f32 %v4872, %v5036
        %s5041 = sld [smem:[#allocation3 + $0x8f]]
        %v5042 = vstv %s5041
        %v5043 = vmul.f32 %v5042, %v277
        %v5044 = vmul.f32 %v5042, %v278
        %v5045 = vmul.f32 %v5042, %v279
        %v5049 = vrot.slane %v5043, 2
        %v5050 = vrot.slane %v5044, 2
        %v5051 = vsel %vm1033, %v5049, %v5050
        %v5052 = vrot.slane %v5045, 2
        %v5053 = vsel %vm1033, %v5050, %v5052
        %5054 = vrot.lane.b32.xlu0 %v5051, 126
        %v5055 = vpop.permute.xlu0 %5054
        %5056 = vrot.lane.b32.xlu0 %v5053, 126
        %v5057 = vpop.permute.xlu0 %5056
        %v5060 = vadd.f32 %v4892, %v5055
        %v5061 = vadd.f32 %v4893, %v5057
        %s5062 = sld [smem:[#allocation3 + $0xb3]]
        %v5063 = vstv %s5062
        %v5064 = vmul.f32 %v5063, %v277
        %v5065 = vmul.f32 %v5063, %v278
        %v5066 = vmul.f32 %v5063, %v279
        %v5070 = vrot.slane %v5064, 2
        %v5071 = vrot.slane %v5065, 2
        %v5072 = vsel %vm1033, %v5070, %v5071
        %v5073 = vrot.slane %v5066, 2
        %v5074 = vsel %vm1033, %v5071, %v5073
        %5075 = vrot.lane.b32.xlu0 %v5072, 126
        %v5076 = vpop.permute.xlu0 %5075
        %5077 = vrot.lane.b32.xlu0 %v5074, 126
        %v5078 = vpop.permute.xlu0 %5077
        %v5081 = vadd.f32 %v4913, %v5076
        %v5082 = vadd.f32 %v4914, %v5078
        %s5083 = sld [smem:[#allocation3 + $0xd7]]
        %v5084 = vstv %s5083
        %v5085 = vmul.f32 %v5084, %v277
        %v5086 = vmul.f32 %v5084, %v278
        %v5087 = vmul.f32 %v5084, %v279
        %v5091 = vrot.slane %v5085, 2
        %v5092 = vrot.slane %v5086, 2
        %v5093 = vsel %vm1033, %v5091, %v5092
        %v5094 = vrot.slane %v5087, 2
        %v5095 = vsel %vm1033, %v5092, %v5094
        %5096 = vrot.lane.b32.xlu0 %v5093, 126
        %v5097 = vpop.permute.xlu0 %5096
        %5098 = vrot.lane.b32.xlu0 %v5095, 126
        %v5099 = vpop.permute.xlu0 %5098
        %v5102 = vadd.f32 %v4934, %v5097
        %v5103 = vadd.f32 %v4935, %v5099
        %s5104 = sld [smem:[#allocation3 + $0xfb]]
        %v5105 = vstv %s5104
        %v5106 = vmul.f32 %v5105, %v277
        %v5107 = vmul.f32 %v5105, %v278
        %v5108 = vmul.f32 %v5105, %v279
        %v5112 = vrot.slane %v5106, 2
        %v5113 = vrot.slane %v5107, 2
        %v5114 = vsel %vm1033, %v5112, %v5113
        %v5115 = vrot.slane %v5108, 2
        %v5116 = vsel %vm1033, %v5113, %v5115
        %5117 = vrot.lane.b32.xlu0 %v5114, 126
        %v5118 = vpop.permute.xlu0 %5117
        %5119 = vrot.lane.b32.xlu0 %v5116, 126
        %v5120 = vpop.permute.xlu0 %5119
        %v5123 = vadd.f32 %v4955, %v5118
        %v5124 = vadd.f32 %v4956, %v5120
        %s5125 = sld [smem:[#allocation3 + $0x11f]]
        %v5126 = vstv %s5125
        %v5127 = vmul.f32 %v5126, %v277
        %v5128 = vmul.f32 %v5126, %v278
        %v5129 = vmul.f32 %v5126, %v279
        %v5133 = vrot.slane %v5127, 2
        %v5134 = vrot.slane %v5128, 2
        %v5135 = vsel %vm1033, %v5133, %v5134
        %v5136 = vrot.slane %v5129, 2
        %v5137 = vsel %vm1033, %v5134, %v5136
        %5138 = vrot.lane.b32.xlu0 %v5135, 126
        %v5139 = vpop.permute.xlu0 %5138
        %5140 = vrot.lane.b32.xlu0 %v5137, 126
        %v5141 = vpop.permute.xlu0 %5140
        %v5144 = vadd.f32 %v4976, %v5139
        %v5145 = vadd.f32 %v4977, %v5141
        %s5146 = sld [smem:[#allocation6]]
        %v5147 = vstv %s5146
        %v5148 = vadd.f32 %v4997, %v5147
        %v5149 = vadd.f32 %v4998, %v5147
        %v5150 = vmax.f32 %v5148, 0.0
        %v5151 = vmax.f32 %v5149, 0.0
        %s5152 = scalar_lea.vmem %s190, 64 [#allocation8]
        %5153 = vst.msk [vmem:[%s5152] sm:$0xff] %vm204, %v5150
        %5154 = vst.msk [vmem:[%s5152 + $0x8] sm:$0xff] %vm204, %v5151
        %s5155 = sld [smem:[#allocation6 + $0x1]]
        %v5156 = vstv %s5155
        %v5157 = vadd.f32 %v5018, %v5156
        %v5158 = vadd.f32 %v5019, %v5156
        %v5159 = vmax.f32 %v5157, 0.0
        %v5160 = vmax.f32 %v5158, 0.0
        %s5161 = scalar_lea.vmem %s190, 80 [#allocation8]
        %5162 = vst.msk [vmem:[%s5161] sm:$0xff] %vm204, %v5159
        %5163 = vst.msk [vmem:[%s5161 + $0x8] sm:$0xff] %vm204, %v5160
        %s5164 = sld [smem:[#allocation6 + $0x2]]
        %v5165 = vstv %s5164
        %v5166 = vadd.f32 %v5039, %v5165
        %v5167 = vadd.f32 %v5040, %v5165
        %v5168 = vmax.f32 %v5166, 0.0
        %v5169 = vmax.f32 %v5167, 0.0
        %s5170 = scalar_lea.vmem %s190, 96 [#allocation8]
        %5171 = vst.msk [vmem:[%s5170] sm:$0xff] %vm204, %v5168
        %5172 = vst.msk [vmem:[%s5170 + $0x8] sm:$0xff] %vm204, %v5169
        %s5173 = sld [smem:[#allocation6 + $0x3]]
        %v5174 = vstv %s5173
        %v5175 = vadd.f32 %v5060, %v5174
        %v5176 = vadd.f32 %v5061, %v5174
        %v5177 = vmax.f32 %v5175, 0.0
        %v5178 = vmax.f32 %v5176, 0.0
        %s5179 = scalar_lea.vmem %s190, 112 [#allocation8]
        %5180 = vst.msk [vmem:[%s5179] sm:$0xff] %vm204, %v5177
        %5181 = vst.msk [vmem:[%s5179 + $0x8] sm:$0xff] %vm204, %v5178
        %s5182 = sld [smem:[#allocation6 + $0x4]]
        %v5183 = vstv %s5182
        %v5184 = vadd.f32 %v5081, %v5183
        %v5185 = vadd.f32 %v5082, %v5183
        %v5186 = vmax.f32 %v5184, 0.0
        %v5187 = vmax.f32 %v5185, 0.0
        %s5188 = scalar_lea.vmem %s190, 128 [#allocation8]
        %5189 = vst.msk [vmem:[%s5188] sm:$0xff] %vm204, %v5186
        %5190 = vst.msk [vmem:[%s5188 + $0x8] sm:$0xff] %vm204, %v5187
        %s5191 = sld [smem:[#allocation6 + $0x5]]
        %v5192 = vstv %s5191
        %v5193 = vadd.f32 %v5102, %v5192
        %v5194 = vadd.f32 %v5103, %v5192
        %v5195 = vmax.f32 %v5193, 0.0
        %v5196 = vmax.f32 %v5194, 0.0
        %s5197 = scalar_lea.vmem %s190, 144 [#allocation8]
        %5198 = vst.msk [vmem:[%s5197] sm:$0xff] %vm204, %v5195
        %5199 = vst.msk [vmem:[%s5197 + $0x8] sm:$0xff] %vm204, %v5196
        %s5200 = sld [smem:[#allocation6 + $0x6]]
        %v5201 = vstv %s5200
        %v5202 = vadd.f32 %v5123, %v5201
        %v5203 = vadd.f32 %v5124, %v5201
        %v5204 = vmax.f32 %v5202, 0.0
        %v5205 = vmax.f32 %v5203, 0.0
        %s5206 = scalar_lea.vmem %s190, 160 [#allocation8]
        %5207 = vst.msk [vmem:[%s5206] sm:$0xff] %vm204, %v5204
        %5208 = vst.msk [vmem:[%s5206 + $0x8] sm:$0xff] %vm204, %v5205
        %s5209 = sld [smem:[#allocation6 + $0x7]]
        %v5210 = vstv %s5209
        %v5211 = vadd.f32 %v5144, %v5210
        %v5212 = vadd.f32 %v5145, %v5210
        %v5213 = vmax.f32 %v5211, 0.0
        %v5214 = vmax.f32 %v5212, 0.0
        %s5215 = scalar_lea.vmem %s190, 176 [#allocation8]
        %5216 = vst.msk [vmem:[%s5215] sm:$0xff] %vm204, %v5213
        %5217 = vst.msk [vmem:[%s5215 + $0x8] sm:$0xff] %vm204, %v5214
        %s5218 = sand.u32 %s95, 1
        %s5219 = scalar_lea.sflag [#allocation4], %s5218
        %s5220 = sand.u32 %s95, 1
        %s5221 = smul.addr %s5220, 192
        %s5222 = scalar_lea.vmem [#allocation8], %s5221
        // Predicated region
        $region41: #{rdb_g_forward.1} parent=31 // pred_check
          %p5223 = pneg %p105
        $region42: #{rdb_g_forward.1} parent=31 // pred_check_branch
          %5225 = sbr.rel (%p5223) target = $region44
        $region43: #{rdb_g_forward.1} parent=31 // pred_region
          %s5227 = ssub.s32 3072, 3072
          %5228 = vsyncadd %s5219, %s5227
          %s5229 = smul.addr %s19, 24
          %s5230 = smul.addr %s5229, 128
          %s5231 = scalar_lea.hbm %s3, %s5230
          %s5232 = sshll.u32 %s5222, 4
          %s5233 = int_to_ptr.vmem [resolvable:$true] %s5232
          %5238 = dma.vmem_to_hbm [thread:$0]  %s5233, 3072, %s5231, %s5219, 128, 128, 8
        $region44: #{rdb_g_forward.1} parent=31 // pred_fallthru
          _
      $region32: #{rdb_g_forward.1} parent=5 // pred_fallthru
        _
      %p5239 = scmp.le.s32.totalorder 2, %s14
      // Predicated region
      $region45: #{rdb_g_forward.1} parent=5 // pred_check
        %p5240 = pneg %p5239
      $region46: #{rdb_g_forward.1} parent=5 // pred_check_branch
        %5242 = sbr.rel (%p5240) target = $region48
      $region47: #{rdb_g_forward.1} parent=5 // pred_region
        %s5243 = ssub.s32 %s14, 2
        // Predicated region
        $region49: #{rdb_g_forward.1} parent=47 // pred_check
          %p5244 = pneg %p111
        $region50: #{rdb_g_forward.1} parent=47 // pred_check_branch
          %5246 = sbr.rel (%p5244) target = $region52
        $region51: #{rdb_g_forward.1} parent=47 // pred_region
          %s5247 = sand.u32 %s96, 1
          %s5248 = scalar_lea.sflag [#allocation4], %s5247
          %s5249 = sand.u32 %s96, 1
          %s5250 = smul.addr %s5249, 192
          %s5251 = scalar_lea.vmem [#allocation8], %s5250
          %5252 = dma.done %s5248, 3072
        $region52: #{rdb_g_forward.1} parent=47 // pred_fallthru
          _
      $region48: #{rdb_g_forward.1} parent=5 // pred_fallthru
        _
    $region6: #{rdb_g_forward.1} parent=1 // loop_footer
      %s18 = sadd.s32 1, %s14
    $region7: #{rdb_g_forward.1} parent=1 // loop_footer_branch
      %13 = sbr.rel target = $region3
    $region8: #{rdb_g_forward.1} parent=1 // loop_exit
      _
    %5253 = vsyncpa [#allocation4], 1
    %s5254 = scalar_lea.sflag [#allocation4], 1
    %5255 = vsyncpa %s5254, 1
    %5256 = vsyncpa [#allocation5], 1
    %s5257 = scalar_lea.sflag [#allocation5], 1
    %5258 = vsyncpa %s5257, 1
    %5259 = vsyncpa [#allocation7], 1

</llo_original>
